<compile_context>
chip_gen: v7x
topology: tpu7x:2x2x1
jax: 0.10.0
libtpu: 0.0.40
codegen_flags: <defaults>
</compile_context>

<pallas_src>
import functools

import jax
import jax.numpy as jnp
import numpy as np
from jax.experimental import pallas as pl
from jax.experimental.pallas import tpu as pltpu


def _pick_tile(n1, max_tile):
    """Largest query tile that is either all of N1 or a multiple of 128."""
    if n1 <= max_tile:
        return n1
    for t in (512, 384, 256, 128):
        if t <= max_tile and n1 % t == 0:
            return t
    return n1  # fall back to a single tile (always layout-legal)


def _vmem_limit_bytes(tile, n2, d1, c1, mlp_channels, k):
    f32 = 4
    plane = tile * n2 * f32                           # one (tile, N2) f32 plane
    est = 6 * plane                                   # d2 / iota / dist_work / mask / temps
    est += 2 * tile * (3 + d1) * f32                  # double-buffered query tiles
    est += 2 * n2 * (6 + c1) * f32                    # resident database inputs
    est += 3 * k * tile * max(mlp_channels) * f32     # stacked MLP activations
    est += 2 * mlp_channels[-1] * tile * f32          # output tile
    est = est * 3 // 2                                # headroom
    return int(max(32 * 1024 * 1024, min(est, 96 * 1024 * 1024)))


def _make_cost_volume_kernel(tile, n2, c1, k_neighbors, mlp_channels, mlp_dtype):
    """Kernel body for fixed static shapes.

    Per grid step (b, t):
      xyz1   (1, tile, 3)    query points, channel-last
      xyz2_t (1, 3, N2)      database points, channel-first (VPU distances)
      p1     (1, tile, D1)   query features
      gdb    (1, N2, C1+3)   gather database  [p2 @ W0_p2 | xyz2]
      W0_p1  (D1, C1), W0_x (3, C1), b0 (1, C1), then (W_i, b_i) tail layers
    Output:
      out    (1, C_out, tile)   lane-dense (points on lanes)
    """
    c_out = mlp_channels[-1]
    n_tail = len(mlp_channels) - 1
    exact = jax.lax.Precision.HIGHEST

    if mlp_dtype == jnp.float32:
        def _mm(x, w):        # accuracy / reference-check path
            return jnp.dot(x, w, preferred_element_type=jnp.float32,
                           precision=exact)
    else:
        def _mm(x, w):        # fast path: bf16 operands, f32 accumulation
            return jnp.dot(x.astype(mlp_dtype), w.astype(mlp_dtype),
                           preferred_element_type=jnp.float32)

    def kernel(xyz1_ref, xyz2t_ref, p1_ref, gdb_ref,
               w0p1_ref, w0x_ref, b0_ref, *rest):
        tail_refs = rest[:-1]            # (W1, b1, W2, b2, ...)
        out_ref = rest[-1]

        q = xyz1_ref[0]                  # (tile, 3)
        db_t = xyz2t_ref[0]              # (3, N2)
        p1 = p1_ref[0]                   # (tile, D1)
        gdb = gdb_ref[0]                 # (N2, C1 + 3)

        # ---- pairwise squared distances: exact f32, entirely on the VPU ----
        d2 = jnp.zeros((tile, n2), jnp.float32)
        for c in range(3):
            diff = q[:, c:c + 1] - db_t[c:c + 1, :]
            d2 = d2 + diff * diff

        iota = jax.lax.broadcasted_iota(jnp.int32, (tile, n2), 1)

        # ---- k-invariant part of MLP layer 0 (hoisted out of the K loop) ----
        a1 = _mm(p1, w0p1_ref[...]) + b0_ref[...]              # (tile, C1) f32
        w0x = w0x_ref[...]                                     # (3, C1)    f32

        # ---- K nearest neighbours: argmin -> one-hot -> fused matmul gather -
        dist_work = d2
        xs, invs = [], []
        for _ in range(k_neighbors):
            mv = jnp.min(dist_work, axis=-1, keepdims=True)
            amin = jnp.min(jnp.where(dist_work == mv, iota, n2),
                           axis=-1, keepdims=True)
            sel = iota == amin                                 # reused twice
            onehot = sel.astype(jnp.float32)

            # single one-hot gather of [p2 @ W0_p2 | xyz2]; exact selection.
            g = jnp.dot(onehot, gdb, preferred_element_type=jnp.float32,
                        precision=exact)                       # (tile, C1 + 3)
            g_a2 = g[:, :c1]
            nb_xyz = g[:, c1:]

            dxyz = nb_xyz - q                                  # direction_xyz

            # layer-0 contribution of dxyz: contraction dim 3 stays on the VPU
            x0 = a1 + g_a2
            for c in range(3):
                x0 = x0 + dxyz[:, c:c + 1] * w0x[c:c + 1, :]
            xs.append(x0)

            # 1 / clamp(dist, 1e-10)  ==  rsqrt(clamp(dist^2, 1e-20))   (EUP)
            sumsq = jnp.sum(dxyz * dxyz, axis=-1, keepdims=True)
            invs.append(jax.lax.rsqrt(jnp.maximum(sumsq, 1e-20)))

            dist_work = jnp.where(sel, jnp.inf, dist_work)

        # ---- remaining MLP layers, batched over all K neighbours ------------
        x = jnp.concatenate(xs, axis=0)                        # (K*tile, C1)
        x = jnp.maximum(x, 0.1 * x)                            # LeakyReLU(0.1)
        for li in range(n_tail):
            w = tail_refs[2 * li][...]
            b = tail_refs[2 * li + 1][...]
            x = _mm(x, w) + b                                  # f32 accumulate
            x = jnp.maximum(x, 0.1 * x)

        # ---- inverse-distance weighted sum over K (f32, VPU) ----------------
        norm = invs[0]
        for kk in range(1, k_neighbors):
            norm = norm + invs[kk]
        inv_norm = 1.0 / norm
        cost = jnp.zeros((tile, c_out), jnp.float32)
        for kk in range(k_neighbors):
            cost = cost + (invs[kk] * inv_norm) * x[kk * tile:(kk + 1) * tile, :]

        # lane-dense store: channels on sublanes, points (multiple of 128 when
        # tiled) on lanes -> unmasked full-width vst.
        out_ref[0] = jnp.transpose(cost, (1, 0))

    return kernel


def cost_volume_layer(xyz1, xyz2, points1, points2, Ws, bs, nsample,
                      mlp_dtype=jnp.bfloat16, max_tile=512):
    """Pallas implementation of CostVolumeLayer.forward
    (use_bn=False, use_det_feature=False, use_leaky=True).

    xyz1:    (B, 3, N1)    xyz2:    (B, 3, N2)
    points1: (B, D1, N1)   points2: (B, D2, N2)
    Ws[i]:   (C_in_i, C_out_i)   bs[i]: (1, C_out_i)
    returns: (B, C_out, N1)   (same layout as the PyTorch module)

    Note: on v7x (64 MiB VMEM / TC) keep max_tile <= 512 for N2 ~ 2048.
    """
    B, _, N1 = xyz1.shape
    _, _, N2 = xyz2.shape
    D1 = points1.shape[1]
    D2 = points2.shape[1]
    mlp_channels = [int(w.shape[1]) for w in Ws]
    C1 = mlp_channels[0]
    C_out = mlp_channels[-1]
    assert nsample <= N2, "nsample must not exceed the number of database points"
    assert Ws[0].shape[0] == D1 + D2 + 3

    tile = _pick_tile(N1, max_tile)
    n_tiles = N1 // tile

    # channel-last query side; database xyz kept channel-first for VPU distances
    x1 = jnp.transpose(xyz1, (0, 2, 1)).astype(jnp.float32)      # (B, N1, 3)
    x2_cf = xyz2.astype(jnp.float32)                             # (B, 3, N2)
    x2_cl = jnp.transpose(xyz2, (0, 2, 1)).astype(jnp.float32)   # (B, N2, 3)
    p1 = jnp.transpose(points1, (0, 2, 1)).astype(jnp.float32)   # (B, N1, D1)
    p2 = jnp.transpose(points2, (0, 2, 1)).astype(jnp.float32)   # (B, N2, D2)

    # Split W0 by input rows [p1 | p2 | xyz] and fold the per-batch,
    # k-invariant p2 @ W0_p2 term into the gather database.
    W0 = Ws[0].astype(jnp.float32)
    W0_p1 = W0[:D1].astype(mlp_dtype)
    W0_p2 = W0[D1:D1 + D2]
    W0_x = W0[D1 + D2:]
    b0 = bs[0].astype(jnp.float32)
    a2 = jnp.einsum('bnd,dc->bnc', p2, W0_p2,
                    precision=jax.lax.Precision.HIGHEST)          # (B, N2, C1)
    gdb = jnp.concatenate([a2, x2_cl], axis=-1)                   # (B, N2, C1+3)

    kernel = _make_cost_volume_kernel(tile, N2, C1, nsample,
                                      mlp_channels, mlp_dtype)

    in_specs = [
        pl.BlockSpec((1, tile, 3), lambda b, t: (b, t, 0)),       # xyz1 tile
        pl.BlockSpec((1, 3, N2), lambda b, t: (b, 0, 0)),         # xyz2 (resident)
        pl.BlockSpec((1, tile, D1), lambda b, t: (b, t, 0)),      # p1 tile
        pl.BlockSpec((1, N2, C1 + 3), lambda b, t: (b, 0, 0)),    # gather db (resident)
        pl.BlockSpec((D1, C1), lambda b, t: (0, 0)),              # W0_p1
        pl.BlockSpec((3, C1), lambda b, t: (0, 0)),               # W0_xyz
        pl.BlockSpec((1, C1), lambda b, t: (0, 0)),               # b0
    ]
    args = [x1, x2_cf, p1, gdb, W0_p1, W0_x, b0]
    for W, bias in zip(Ws[1:], bs[1:]):
        in_specs.append(pl.BlockSpec(tuple(W.shape), lambda b, t: (0, 0)))
        in_specs.append(pl.BlockSpec(tuple(bias.shape), lambda b, t: (0, 0)))
        args += [W.astype(mlp_dtype), bias.astype(jnp.float32)]

    out = pl.pallas_call(
        kernel,
        out_shape=jax.ShapeDtypeStruct((B, C_out, N1), jnp.float32),
        grid_spec=pltpu.PrefetchScalarGridSpec(
            num_scalar_prefetch=0,
            grid=(B, n_tiles),
            in_specs=in_specs,
            out_specs=pl.BlockSpec((1, C_out, tile), lambda b, t: (b, 0, t)),
        ),
        compiler_params=pltpu.CompilerParams(
            dimension_semantics=("parallel", "parallel"),
            vmem_limit_bytes=_vmem_limit_bytes(tile, N2, D1, C1,
                                               mlp_channels, nsample)),
    )(*args)
    return out


def cost_volume_reference(xyz1, xyz2, points1, points2, Ws, bs, nsample):
    """Pure-JAX f32 reference mirroring the PyTorch forward semantics."""
    HI = jax.lax.Precision.HIGHEST
    x1 = jnp.transpose(xyz1, (0, 2, 1)).astype(jnp.float32)   # (B, N1, 3)
    x2 = jnp.transpose(xyz2, (0, 2, 1)).astype(jnp.float32)   # (B, N2, 3)
    q1 = jnp.transpose(points1, (0, 2, 1)).astype(jnp.float32)
    q2 = jnp.transpose(points2, (0, 2, 1)).astype(jnp.float32)
    B, N1, _ = x1.shape
    N2 = x2.shape[1]

    # squared distances, accumulated per coordinate (same order as the kernel
    # so the KNN selection matches even for near-ties)
    sqr = jnp.zeros((B, N1, N2), jnp.float32)
    for c in range(3):
        diff = x1[:, :, None, c] - x2[:, None, :, c]
        sqr = sqr + diff * diff
    _, idx = jax.lax.top_k(-sqr, nsample)                     # (B, N1, K)

    gather = jax.vmap(lambda a, i: a[i])
    nb_xyz = gather(x2, idx)                                  # (B, N1, K, 3)
    nb_p2 = gather(q2, idx)                                   # (B, N1, K, D2)
    dxyz = nb_xyz - x1[:, :, None, :]
    g_p1 = jnp.broadcast_to(q1[:, :, None, :],
                            (B, N1, nsample, q1.shape[-1]))
    feat = jnp.concatenate([g_p1, nb_p2, dxyz], axis=-1)      # (B, N1, K, C_in)

    x = feat
    for W, b in zip(Ws, bs):
        x = jnp.einsum('bnkc,co->bnko', x, W, precision=HI) + b
        x = jnp.maximum(x, 0.1 * x)                           # LeakyReLU(0.1)

    dist = jnp.maximum(jnp.linalg.norm(dxyz, axis=-1), 1e-10)
    norm = jnp.sum(1.0 / dist, axis=-1, keepdims=True)
    weights = (1.0 / dist) / norm
    cost = jnp.sum(weights[..., None] * x, axis=2)            # (B, N1, C_out)
    return jnp.transpose(cost, (0, 2, 1))                     # (B, C_out, N1)


def _run_case(key, B, N1, N2, D1, D2, nsample, mlp, max_tile):
    k1, k2, k3, k4, key = jax.random.split(key, 5)
    xyz1 = jax.random.normal(k1, (B, 3, N1), jnp.float32)
    xyz2 = jax.random.normal(k2, (B, 3, N2), jnp.float32)
    points1 = jax.random.normal(k3, (B, D1, N1), jnp.float32)
    points2 = jax.random.normal(k4, (B, D2, N2), jnp.float32)

    in_channel = D1 + D2 + 3
    Ws, bs = [], []
    last = in_channel
    for out_c in mlp:
        kw, kb, key = jax.random.split(key, 3)
        bound = 1.0 / np.sqrt(last)
        Ws.append(jax.random.uniform(kw, (last, out_c), jnp.float32, -bound, bound))
        bs.append(jax.random.uniform(kb, (1, out_c), jnp.float32, -bound, bound))
        last = out_c

    ref = np.asarray(cost_volume_reference(xyz1, xyz2, points1, points2,
                                           Ws, bs, nsample))

    # strict numerics check: f32 matmul path
    run_f32 = jax.jit(functools.partial(cost_volume_layer, nsample=nsample,
                                        mlp_dtype=jnp.float32,
                                        max_tile=max_tile))
    out_f32 = jax.block_until_ready(run_f32(xyz1, xyz2, points1, points2, Ws, bs))
    np.testing.assert_allclose(np.asarray(out_f32), ref, rtol=2e-3, atol=2e-3)

    # performance path: bf16 MLP matmuls (KNN / gather / weighting stay f32)
    run_bf16 = jax.jit(functools.partial(cost_volume_layer, nsample=nsample,
                                         mlp_dtype=jnp.bfloat16,
                                         max_tile=max_tile))
    out_bf16 = jax.block_until_ready(run_bf16(xyz1, xyz2, points1, points2, Ws, bs))
    assert out_bf16.shape == (B, mlp[-1], N1)
    np.testing.assert_allclose(np.asarray(out_bf16), ref, rtol=1e-1, atol=1e-1)
    return key


if __name__ == "__main__":
    key = jax.random.PRNGKey(0)
    # single-tile case (whole point cloud in one block)
    key = _run_case(key, B=2, N1=16, N2=16, D1=4, D2=4,
                    nsample=4, mlp=[16, 16], max_tile=512)
    # tiled case: N1 split into 128-point query tiles -> grid (B, N1 // 128)
    _run_case(key, B=1, N1=256, N2=64, D1=8, D2=8,
              nsample=8, mlp=[32, 32], max_tile=128)
    print("KERNEL_OK")
</pallas_src>

<mosaic_0001>
module attributes {stable_mosaic.version = 11 : i64} {
  func.func @kernel(%arg0: i32, %arg1: i32, %arg2: memref<1x16x3xf32, #tpu.memory_space<vmem>>, %arg3: memref<1x3x16xf32, #tpu.memory_space<vmem>>, %arg4: memref<1x16x4xf32, #tpu.memory_space<vmem>>, %arg5: memref<1x16x19xf32, #tpu.memory_space<vmem>>, %arg6: memref<4x16xf32, #tpu.memory_space<vmem>>, %arg7: memref<3x16xf32, #tpu.memory_space<vmem>>, %arg8: memref<1x16xf32, #tpu.memory_space<vmem>>, %arg9: memref<16x16xf32, #tpu.memory_space<vmem>>, %arg10: memref<1x16xf32, #tpu.memory_space<vmem>>, %arg11: memref<1x16x16xf32, #tpu.memory_space<vmem>>) attributes {dimension_semantics = [#tpu.dimension_semantics<parallel>, #tpu.dimension_semantics<parallel>], iteration_bounds = array<i64: 2, 1>, scalar_prefetch = 0 : i64, scratch_operands = 0 : i64, tpu.core_type = #tpu.core_type<tc>, window_params = [{transform_indices = @transform_0, window_bounds = array<i64: 1, 16, 3>}, {transform_indices = @transform_1, window_bounds = array<i64: 1, 3, 16>}, {transform_indices = @transform_2, window_bounds = array<i64: 1, 16, 4>}, {transform_indices = @transform_3, window_bounds = array<i64: 1, 16, 19>}, {pipeline_mode = #tpu.pipeline_mode<synchronous>, transform_indices = @transform_4, window_bounds = array<i64: 4, 16>}, {pipeline_mode = #tpu.pipeline_mode<synchronous>, transform_indices = @transform_5, window_bounds = array<i64: 3, 16>}, {pipeline_mode = #tpu.pipeline_mode<synchronous>, transform_indices = @transform_6, window_bounds = array<i64: 1, 16>}, {pipeline_mode = #tpu.pipeline_mode<synchronous>, transform_indices = @transform_7, window_bounds = array<i64: 16, 16>}, {pipeline_mode = #tpu.pipeline_mode<synchronous>, transform_indices = @transform_8, window_bounds = array<i64: 1, 16>}, {transform_indices = @transform_9, window_bounds = array<i64: 1, 16, 16>}]} {
    %c0 = arith.constant 0 : index
    %c0_0 = arith.constant 0 : index
    %c0_1 = arith.constant 0 : index
    %0 = vector.load %arg2[%c0, %c0_0, %c0_1] : memref<1x16x3xf32, #tpu.memory_space<vmem>>, vector<1x16x3xf32>
    %1 = vector.shape_cast %0 : vector<1x16x3xf32> to vector<16x3xf32>
    %c0_2 = arith.constant 0 : index
    %c0_3 = arith.constant 0 : index
    %c0_4 = arith.constant 0 : index
    %2 = vector.load %arg3[%c0_2, %c0_3, %c0_4] : memref<1x3x16xf32, #tpu.memory_space<vmem>>, vector<1x3x16xf32>
    %3 = vector.shape_cast %2 : vector<1x3x16xf32> to vector<3x16xf32>
    %c0_5 = arith.constant 0 : index
    %c0_6 = arith.constant 0 : index
    %c0_7 = arith.constant 0 : index
    %4 = vector.load %arg4[%c0_5, %c0_6, %c0_7] : memref<1x16x4xf32, #tpu.memory_space<vmem>>, vector<1x16x4xf32>
    %5 = vector.shape_cast %4 : vector<1x16x4xf32> to vector<16x4xf32>
    %c0_8 = arith.constant 0 : index
    %c0_9 = arith.constant 0 : index
    %c0_10 = arith.constant 0 : index
    %6 = vector.load %arg5[%c0_8, %c0_9, %c0_10] : memref<1x16x19xf32, #tpu.memory_space<vmem>>, vector<1x16x19xf32>
    %7 = vector.shape_cast %6 : vector<1x16x19xf32> to vector<16x19xf32>
    %cst = arith.constant 0.000000e+00 : f32
    %8 = vector.broadcast %cst : f32 to vector<16x16xf32>
    %9 = vector.extract_strided_slice %1 {offsets = [0, 0], sizes = [16, 1], strides = [1, 1]} : vector<16x3xf32> to vector<16x1xf32>
    %10 = vector.extract_strided_slice %3 {offsets = [0, 0], sizes = [1, 16], strides = [1, 1]} : vector<3x16xf32> to vector<1x16xf32>
    %11 = vector.broadcast %9 : vector<16x1xf32> to vector<16x16xf32>
    %12 = vector.broadcast %10 : vector<1x16xf32> to vector<16x16xf32>
    %13 = arith.subf %11, %12 : vector<16x16xf32>
    %14 = arith.mulf %13, %13 : vector<16x16xf32>
    %15 = arith.addf %8, %14 : vector<16x16xf32>
    %16 = vector.extract_strided_slice %1 {offsets = [0, 1], sizes = [16, 1], strides = [1, 1]} : vector<16x3xf32> to vector<16x1xf32>
    %17 = vector.extract_strided_slice %3 {offsets = [1, 0], sizes = [1, 16], strides = [1, 1]} : vector<3x16xf32> to vector<1x16xf32>
    %18 = vector.broadcast %16 : vector<16x1xf32> to vector<16x16xf32>
    %19 = vector.broadcast %17 : vector<1x16xf32> to vector<16x16xf32>
    %20 = arith.subf %18, %19 : vector<16x16xf32>
    %21 = arith.mulf %20, %20 : vector<16x16xf32>
    %22 = arith.addf %15, %21 : vector<16x16xf32>
    %23 = vector.extract_strided_slice %1 {offsets = [0, 2], sizes = [16, 1], strides = [1, 1]} : vector<16x3xf32> to vector<16x1xf32>
    %24 = vector.extract_strided_slice %3 {offsets = [2, 0], sizes = [1, 16], strides = [1, 1]} : vector<3x16xf32> to vector<1x16xf32>
    %25 = vector.broadcast %23 : vector<16x1xf32> to vector<16x16xf32>
    %26 = vector.broadcast %24 : vector<1x16xf32> to vector<16x16xf32>
    %27 = arith.subf %25, %26 : vector<16x16xf32>
    %28 = arith.mulf %27, %27 : vector<16x16xf32>
    %29 = arith.addf %22, %28 : vector<16x16xf32>
    %30 = tpu.iota {dimensions = array<i32: 1>} : vector<16x16xi32>
    %c0_11 = arith.constant 0 : index
    %c0_12 = arith.constant 0 : index
    %31 = vector.load %arg6[%c0_11, %c0_12] : memref<4x16xf32, #tpu.memory_space<vmem>>, vector<4x16xf32>
    %cst_13 = arith.constant dense<0.000000e+00> : vector<16x16xf32>
    %32 = tpu.matmul %5, %31, %cst_13 {dimension_numbers = #tpu.dot_dimension_numbers<[1], [0], [0], [1], [0, 0, 1, 1], [], []>, precision = #tpu.contract_precision<fp32>} : vector<16x4xf32>, vector<4x16xf32>, vector<16x16xf32> -> vector<16x16xf32>
    %c0_14 = arith.constant 0 : index
    %c0_15 = arith.constant 0 : index
    %33 = vector.load %arg8[%c0_14, %c0_15] : memref<1x16xf32, #tpu.memory_space<vmem>>, vector<1x16xf32>
    %34 = vector.broadcast %33 : vector<1x16xf32> to vector<16x16xf32>
    %35 = arith.addf %32, %34 : vector<16x16xf32>
    %c0_16 = arith.constant 0 : index
    %c0_17 = arith.constant 0 : index
    %36 = vector.load %arg7[%c0_16, %c0_17] : memref<3x16xf32, #tpu.memory_space<vmem>>, vector<3x16xf32>
    %cst_18 = arith.constant dense<0x7F800000> : vector<16xf32>
    %37 = vector.multi_reduction <minimumf>, %29, %cst_18 [1] : vector<16x16xf32> to vector<16xf32>
    %38 = vector.shape_cast %37 : vector<16xf32> to vector<16x1xf32>
    %39 = vector.broadcast %38 : vector<16x1xf32> to vector<16x16xf32>
    %40 = arith.cmpf oeq, %29, %39 : vector<16x16xf32>
    %c16_i32 = arith.constant 16 : i32
    %41 = vector.broadcast %c16_i32 : i32 to vector<16x16xi32>
    %42 = arith.select %40, %30, %41 : vector<16x16xi1>, vector<16x16xi32>
    %cst_19 = arith.constant dense<2147483647> : vector<16xi32>
    %43 = vector.multi_reduction <minsi>, %42, %cst_19 [1] : vector<16x16xi32> to vector<16xi32>
    %44 = vector.shape_cast %43 : vector<16xi32> to vector<16x1xi32>
    %45 = vector.broadcast %44 : vector<16x1xi32> to vector<16x16xi32>
    %46 = arith.cmpi eq, %30, %45 : vector<16x16xi32>
    %47 = arith.extui %46 : vector<16x16xi1> to vector<16x16xi32>
    %48 = arith.sitofp %47 : vector<16x16xi32> to vector<16x16xf32>
    %cst_20 = arith.constant dense<0.000000e+00> : vector<16x19xf32>
    %49 = tpu.matmul %48, %7, %cst_20 {dimension_numbers = #tpu.dot_dimension_numbers<[1], [0], [0], [1], [0, 0, 1, 1], [], []>, precision = #tpu.contract_precision<fp32>} : vector<16x16xf32>, vector<16x19xf32>, vector<16x19xf32> -> vector<16x19xf32>
    %50 = vector.extract_strided_slice %49 {offsets = [0, 0], sizes = [16, 16], strides = [1, 1]} : vector<16x19xf32> to vector<16x16xf32>
    %51 = vector.extract_strided_slice %49 {offsets = [0, 16], sizes = [16, 3], strides = [1, 1]} : vector<16x19xf32> to vector<16x3xf32>
    %52 = arith.subf %51, %1 : vector<16x3xf32>
    %53 = arith.addf %35, %50 : vector<16x16xf32>
    %54 = vector.extract_strided_slice %52 {offsets = [0, 0], sizes = [16, 1], strides = [1, 1]} : vector<16x3xf32> to vector<16x1xf32>
    %55 = vector.extract_strided_slice %36 {offsets = [0, 0], sizes = [1, 16], strides = [1, 1]} : vector<3x16xf32> to vector<1x16xf32>
    %56 = vector.broadcast %54 : vector<16x1xf32> to vector<16x16xf32>
    %57 = vector.broadcast %55 : vector<1x16xf32> to vector<16x16xf32>
    %58 = arith.mulf %56, %57 : vector<16x16xf32>
    %59 = arith.addf %53, %58 : vector<16x16xf32>
    %60 = vector.extract_strided_slice %52 {offsets = [0, 1], sizes = [16, 1], strides = [1, 1]} : vector<16x3xf32> to vector<16x1xf32>
    %61 = vector.extract_strided_slice %36 {offsets = [1, 0], sizes = [1, 16], strides = [1, 1]} : vector<3x16xf32> to vector<1x16xf32>
    %62 = vector.broadcast %60 : vector<16x1xf32> to vector<16x16xf32>
    %63 = vector.broadcast %61 : vector<1x16xf32> to vector<16x16xf32>
    %64 = arith.mulf %62, %63 : vector<16x16xf32>
    %65 = arith.addf %59, %64 : vector<16x16xf32>
    %66 = vector.extract_strided_slice %52 {offsets = [0, 2], sizes = [16, 1], strides = [1, 1]} : vector<16x3xf32> to vector<16x1xf32>
    %67 = vector.extract_strided_slice %36 {offsets = [2, 0], sizes = [1, 16], strides = [1, 1]} : vector<3x16xf32> to vector<1x16xf32>
    %68 = vector.broadcast %66 : vector<16x1xf32> to vector<16x16xf32>
    %69 = vector.broadcast %67 : vector<1x16xf32> to vector<16x16xf32>
    %70 = arith.mulf %68, %69 : vector<16x16xf32>
    %71 = arith.addf %65, %70 : vector<16x16xf32>
    %72 = arith.mulf %52, %52 : vector<16x3xf32>
    %cst_21 = arith.constant dense<0.000000e+00> : vector<16xf32>
    %73 = vector.multi_reduction <add>, %72, %cst_21 [1] : vector<16x3xf32> to vector<16xf32>
    %74 = vector.shape_cast %73 : vector<16xf32> to vector<16x1xf32>
    %cst_22 = arith.constant 9.99999968E-21 : f32
    %75 = vector.broadcast %cst_22 : f32 to vector<16x1xf32>
    %76 = arith.maximumf %74, %75 : vector<16x1xf32>
    %77 = math.rsqrt %76 : vector<16x1xf32>
    %cst_23 = arith.constant 0x7F800000 : f32
    %78 = vector.broadcast %cst_23 : f32 to vector<16x16xf32>
    %79 = arith.select %46, %78, %29 : vector<16x16xi1>, vector<16x16xf32>
    %cst_24 = arith.constant dense<0x7F800000> : vector<16xf32>
    %80 = vector.multi_reduction <minimumf>, %79, %cst_24 [1] : vector<16x16xf32> to vector<16xf32>
    %81 = vector.shape_cast %80 : vector<16xf32> to vector<16x1xf32>
    %82 = vector.broadcast %81 : vector<16x1xf32> to vector<16x16xf32>
    %83 = arith.cmpf oeq, %79, %82 : vector<16x16xf32>
    %c16_i32_25 = arith.constant 16 : i32
    %84 = vector.broadcast %c16_i32_25 : i32 to vector<16x16xi32>
    %85 = arith.select %83, %30, %84 : vector<16x16xi1>, vector<16x16xi32>
    %cst_26 = arith.constant dense<2147483647> : vector<16xi32>
    %86 = vector.multi_reduction <minsi>, %85, %cst_26 [1] : vector<16x16xi32> to vector<16xi32>
    %87 = vector.shape_cast %86 : vector<16xi32> to vector<16x1xi32>
    %88 = vector.broadcast %87 : vector<16x1xi32> to vector<16x16xi32>
    %89 = arith.cmpi eq, %30, %88 : vector<16x16xi32>
    %90 = arith.extui %89 : vector<16x16xi1> to vector<16x16xi32>
    %91 = arith.sitofp %90 : vector<16x16xi32> to vector<16x16xf32>
    %cst_27 = arith.constant dense<0.000000e+00> : vector<16x19xf32>
    %92 = tpu.matmul %91, %7, %cst_27 {dimension_numbers = #tpu.dot_dimension_numbers<[1], [0], [0], [1], [0, 0, 1, 1], [], []>, precision = #tpu.contract_precision<fp32>} : vector<16x16xf32>, vector<16x19xf32>, vector<16x19xf32> -> vector<16x19xf32>
    %93 = vector.extract_strided_slice %92 {offsets = [0, 0], sizes = [16, 16], strides = [1, 1]} : vector<16x19xf32> to vector<16x16xf32>
    %94 = vector.extract_strided_slice %92 {offsets = [0, 16], sizes = [16, 3], strides = [1, 1]} : vector<16x19xf32> to vector<16x3xf32>
    %95 = arith.subf %94, %1 : vector<16x3xf32>
    %96 = arith.addf %35, %93 : vector<16x16xf32>
    %97 = vector.extract_strided_slice %95 {offsets = [0, 0], sizes = [16, 1], strides = [1, 1]} : vector<16x3xf32> to vector<16x1xf32>
    %98 = vector.extract_strided_slice %36 {offsets = [0, 0], sizes = [1, 16], strides = [1, 1]} : vector<3x16xf32> to vector<1x16xf32>
    %99 = vector.broadcast %97 : vector<16x1xf32> to vector<16x16xf32>
    %100 = vector.broadcast %98 : vector<1x16xf32> to vector<16x16xf32>
    %101 = arith.mulf %99, %100 : vector<16x16xf32>
    %102 = arith.addf %96, %101 : vector<16x16xf32>
    %103 = vector.extract_strided_slice %95 {offsets = [0, 1], sizes = [16, 1], strides = [1, 1]} : vector<16x3xf32> to vector<16x1xf32>
    %104 = vector.extract_strided_slice %36 {offsets = [1, 0], sizes = [1, 16], strides = [1, 1]} : vector<3x16xf32> to vector<1x16xf32>
    %105 = vector.broadcast %103 : vector<16x1xf32> to vector<16x16xf32>
    %106 = vector.broadcast %104 : vector<1x16xf32> to vector<16x16xf32>
    %107 = arith.mulf %105, %106 : vector<16x16xf32>
    %108 = arith.addf %102, %107 : vector<16x16xf32>
    %109 = vector.extract_strided_slice %95 {offsets = [0, 2], sizes = [16, 1], strides = [1, 1]} : vector<16x3xf32> to vector<16x1xf32>
    %110 = vector.extract_strided_slice %36 {offsets = [2, 0], sizes = [1, 16], strides = [1, 1]} : vector<3x16xf32> to vector<1x16xf32>
    %111 = vector.broadcast %109 : vector<16x1xf32> to vector<16x16xf32>
    %112 = vector.broadcast %110 : vector<1x16xf32> to vector<16x16xf32>
    %113 = arith.mulf %111, %112 : vector<16x16xf32>
    %114 = arith.addf %108, %113 : vector<16x16xf32>
    %115 = arith.mulf %95, %95 : vector<16x3xf32>
    %cst_28 = arith.constant dense<0.000000e+00> : vector<16xf32>
    %116 = vector.multi_reduction <add>, %115, %cst_28 [1] : vector<16x3xf32> to vector<16xf32>
    %117 = vector.shape_cast %116 : vector<16xf32> to vector<16x1xf32>
    %cst_29 = arith.constant 9.99999968E-21 : f32
    %118 = vector.broadcast %cst_29 : f32 to vector<16x1xf32>
    %119 = arith.maximumf %117, %118 : vector<16x1xf32>
    %120 = math.rsqrt %119 : vector<16x1xf32>
    %cst_30 = arith.constant 0x7F800000 : f32
    %121 = vector.broadcast %cst_30 : f32 to vector<16x16xf32>
    %122 = arith.select %89, %121, %79 : vector<16x16xi1>, vector<16x16xf32>
    %cst_31 = arith.constant dense<0x7F800000> : vector<16xf32>
    %123 = vector.multi_reduction <minimumf>, %122, %cst_31 [1] : vector<16x16xf32> to vector<16xf32>
    %124 = vector.shape_cast %123 : vector<16xf32> to vector<16x1xf32>
    %125 = vector.broadcast %124 : vector<16x1xf32> to vector<16x16xf32>
    %126 = arith.cmpf oeq, %122, %125 : vector<16x16xf32>
    %c16_i32_32 = arith.constant 16 : i32
    %127 = vector.broadcast %c16_i32_32 : i32 to vector<16x16xi32>
    %128 = arith.select %126, %30, %127 : vector<16x16xi1>, vector<16x16xi32>
    %cst_33 = arith.constant dense<2147483647> : vector<16xi32>
    %129 = vector.multi_reduction <minsi>, %128, %cst_33 [1] : vector<16x16xi32> to vector<16xi32>
    %130 = vector.shape_cast %129 : vector<16xi32> to vector<16x1xi32>
    %131 = vector.broadcast %130 : vector<16x1xi32> to vector<16x16xi32>
    %132 = arith.cmpi eq, %30, %131 : vector<16x16xi32>
    %133 = arith.extui %132 : vector<16x16xi1> to vector<16x16xi32>
    %134 = arith.sitofp %133 : vector<16x16xi32> to vector<16x16xf32>
    %cst_34 = arith.constant dense<0.000000e+00> : vector<16x19xf32>
    %135 = tpu.matmul %134, %7, %cst_34 {dimension_numbers = #tpu.dot_dimension_numbers<[1], [0], [0], [1], [0, 0, 1, 1], [], []>, precision = #tpu.contract_precision<fp32>} : vector<16x16xf32>, vector<16x19xf32>, vector<16x19xf32> -> vector<16x19xf32>
    %136 = vector.extract_strided_slice %135 {offsets = [0, 0], sizes = [16, 16], strides = [1, 1]} : vector<16x19xf32> to vector<16x16xf32>
    %137 = vector.extract_strided_slice %135 {offsets = [0, 16], sizes = [16, 3], strides = [1, 1]} : vector<16x19xf32> to vector<16x3xf32>
    %138 = arith.subf %137, %1 : vector<16x3xf32>
    %139 = arith.addf %35, %136 : vector<16x16xf32>
    %140 = vector.extract_strided_slice %138 {offsets = [0, 0], sizes = [16, 1], strides = [1, 1]} : vector<16x3xf32> to vector<16x1xf32>
    %141 = vector.extract_strided_slice %36 {offsets = [0, 0], sizes = [1, 16], strides = [1, 1]} : vector<3x16xf32> to vector<1x16xf32>
    %142 = vector.broadcast %140 : vector<16x1xf32> to vector<16x16xf32>
    %143 = vector.broadcast %141 : vector<1x16xf32> to vector<16x16xf32>
    %144 = arith.mulf %142, %143 : vector<16x16xf32>
    %145 = arith.addf %139, %144 : vector<16x16xf32>
    %146 = vector.extract_strided_slice %138 {offsets = [0, 1], sizes = [16, 1], strides = [1, 1]} : vector<16x3xf32> to vector<16x1xf32>
    %147 = vector.extract_strided_slice %36 {offsets = [1, 0], sizes = [1, 16], strides = [1, 1]} : vector<3x16xf32> to vector<1x16xf32>
    %148 = vector.broadcast %146 : vector<16x1xf32> to vector<16x16xf32>
    %149 = vector.broadcast %147 : vector<1x16xf32> to vector<16x16xf32>
    %150 = arith.mulf %148, %149 : vector<16x16xf32>
    %151 = arith.addf %145, %150 : vector<16x16xf32>
    %152 = vector.extract_strided_slice %138 {offsets = [0, 2], sizes = [16, 1], strides = [1, 1]} : vector<16x3xf32> to vector<16x1xf32>
    %153 = vector.extract_strided_slice %36 {offsets = [2, 0], sizes = [1, 16], strides = [1, 1]} : vector<3x16xf32> to vector<1x16xf32>
    %154 = vector.broadcast %152 : vector<16x1xf32> to vector<16x16xf32>
    %155 = vector.broadcast %153 : vector<1x16xf32> to vector<16x16xf32>
    %156 = arith.mulf %154, %155 : vector<16x16xf32>
    %157 = arith.addf %151, %156 : vector<16x16xf32>
    %158 = arith.mulf %138, %138 : vector<16x3xf32>
    %cst_35 = arith.constant dense<0.000000e+00> : vector<16xf32>
    %159 = vector.multi_reduction <add>, %158, %cst_35 [1] : vector<16x3xf32> to vector<16xf32>
    %160 = vector.shape_cast %159 : vector<16xf32> to vector<16x1xf32>
    %cst_36 = arith.constant 9.99999968E-21 : f32
    %161 = vector.broadcast %cst_36 : f32 to vector<16x1xf32>
    %162 = arith.maximumf %160, %161 : vector<16x1xf32>
    %163 = math.rsqrt %162 : vector<16x1xf32>
    %cst_37 = arith.constant 0x7F800000 : f32
    %164 = vector.broadcast %cst_37 : f32 to vector<16x16xf32>
    %165 = arith.select %132, %164, %122 : vector<16x16xi1>, vector<16x16xf32>
    %cst_38 = arith.constant dense<0x7F800000> : vector<16xf32>
    %166 = vector.multi_reduction <minimumf>, %165, %cst_38 [1] : vector<16x16xf32> to vector<16xf32>
    %167 = vector.shape_cast %166 : vector<16xf32> to vector<16x1xf32>
    %168 = vector.broadcast %167 : vector<16x1xf32> to vector<16x16xf32>
    %169 = arith.cmpf oeq, %165, %168 : vector<16x16xf32>
    %c16_i32_39 = arith.constant 16 : i32
    %170 = vector.broadcast %c16_i32_39 : i32 to vector<16x16xi32>
    %171 = arith.select %169, %30, %170 : vector<16x16xi1>, vector<16x16xi32>
    %cst_40 = arith.constant dense<2147483647> : vector<16xi32>
    %172 = vector.multi_reduction <minsi>, %171, %cst_40 [1] : vector<16x16xi32> to vector<16xi32>
    %173 = vector.shape_cast %172 : vector<16xi32> to vector<16x1xi32>
    %174 = vector.broadcast %173 : vector<16x1xi32> to vector<16x16xi32>
    %175 = arith.cmpi eq, %30, %174 : vector<16x16xi32>
    %176 = arith.extui %175 : vector<16x16xi1> to vector<16x16xi32>
    %177 = arith.sitofp %176 : vector<16x16xi32> to vector<16x16xf32>
    %cst_41 = arith.constant dense<0.000000e+00> : vector<16x19xf32>
    %178 = tpu.matmul %177, %7, %cst_41 {dimension_numbers = #tpu.dot_dimension_numbers<[1], [0], [0], [1], [0, 0, 1, 1], [], []>, precision = #tpu.contract_precision<fp32>} : vector<16x16xf32>, vector<16x19xf32>, vector<16x19xf32> -> vector<16x19xf32>
    %179 = vector.extract_strided_slice %178 {offsets = [0, 0], sizes = [16, 16], strides = [1, 1]} : vector<16x19xf32> to vector<16x16xf32>
    %180 = vector.extract_strided_slice %178 {offsets = [0, 16], sizes = [16, 3], strides = [1, 1]} : vector<16x19xf32> to vector<16x3xf32>
    %181 = arith.subf %180, %1 : vector<16x3xf32>
    %182 = arith.addf %35, %179 : vector<16x16xf32>
    %183 = vector.extract_strided_slice %181 {offsets = [0, 0], sizes = [16, 1], strides = [1, 1]} : vector<16x3xf32> to vector<16x1xf32>
    %184 = vector.extract_strided_slice %36 {offsets = [0, 0], sizes = [1, 16], strides = [1, 1]} : vector<3x16xf32> to vector<1x16xf32>
    %185 = vector.broadcast %183 : vector<16x1xf32> to vector<16x16xf32>
    %186 = vector.broadcast %184 : vector<1x16xf32> to vector<16x16xf32>
    %187 = arith.mulf %185, %186 : vector<16x16xf32>
    %188 = arith.addf %182, %187 : vector<16x16xf32>
    %189 = vector.extract_strided_slice %181 {offsets = [0, 1], sizes = [16, 1], strides = [1, 1]} : vector<16x3xf32> to vector<16x1xf32>
    %190 = vector.extract_strided_slice %36 {offsets = [1, 0], sizes = [1, 16], strides = [1, 1]} : vector<3x16xf32> to vector<1x16xf32>
    %191 = vector.broadcast %189 : vector<16x1xf32> to vector<16x16xf32>
    %192 = vector.broadcast %190 : vector<1x16xf32> to vector<16x16xf32>
    %193 = arith.mulf %191, %192 : vector<16x16xf32>
    %194 = arith.addf %188, %193 : vector<16x16xf32>
    %195 = vector.extract_strided_slice %181 {offsets = [0, 2], sizes = [16, 1], strides = [1, 1]} : vector<16x3xf32> to vector<16x1xf32>
    %196 = vector.extract_strided_slice %36 {offsets = [2, 0], sizes = [1, 16], strides = [1, 1]} : vector<3x16xf32> to vector<1x16xf32>
    %197 = vector.broadcast %195 : vector<16x1xf32> to vector<16x16xf32>
    %198 = vector.broadcast %196 : vector<1x16xf32> to vector<16x16xf32>
    %199 = arith.mulf %197, %198 : vector<16x16xf32>
    %200 = arith.addf %194, %199 : vector<16x16xf32>
    %201 = arith.mulf %181, %181 : vector<16x3xf32>
    %cst_42 = arith.constant dense<0.000000e+00> : vector<16xf32>
    %202 = vector.multi_reduction <add>, %201, %cst_42 [1] : vector<16x3xf32> to vector<16xf32>
    %203 = vector.shape_cast %202 : vector<16xf32> to vector<16x1xf32>
    %cst_43 = arith.constant 9.99999968E-21 : f32
    %204 = vector.broadcast %cst_43 : f32 to vector<16x1xf32>
    %205 = arith.maximumf %203, %204 : vector<16x1xf32>
    %206 = math.rsqrt %205 : vector<16x1xf32>
    %207 = tpu.concatenate %71, %114, %157, %200 in 0 : vector<16x16xf32>, vector<16x16xf32>, vector<16x16xf32>, vector<16x16xf32> -> vector<64x16xf32>
    %cst_44 = arith.constant 1.000000e-01 : f32
    %208 = vector.broadcast %cst_44 : f32 to vector<64x16xf32>
    %209 = arith.mulf %208, %207 : vector<64x16xf32>
    %210 = arith.maximumf %207, %209 : vector<64x16xf32>
    %c0_45 = arith.constant 0 : index
    %c0_46 = arith.constant 0 : index
    %211 = vector.load %arg9[%c0_45, %c0_46] : memref<16x16xf32, #tpu.memory_space<vmem>>, vector<16x16xf32>
    %c0_47 = arith.constant 0 : index
    %c0_48 = arith.constant 0 : index
    %212 = vector.load %arg10[%c0_47, %c0_48] : memref<1x16xf32, #tpu.memory_space<vmem>>, vector<1x16xf32>
    %cst_49 = arith.constant dense<0.000000e+00> : vector<64x16xf32>
    %213 = tpu.matmul %210, %211, %cst_49 {dimension_numbers = #tpu.dot_dimension_numbers<[1], [0], [0], [1], [0, 0, 1, 1], [], []>, precision = #tpu.contract_precision<fp32>} : vector<64x16xf32>, vector<16x16xf32>, vector<64x16xf32> -> vector<64x16xf32>
    %214 = vector.broadcast %212 : vector<1x16xf32> to vector<64x16xf32>
    %215 = arith.addf %213, %214 : vector<64x16xf32>
    %cst_50 = arith.constant 1.000000e-01 : f32
    %216 = vector.broadcast %cst_50 : f32 to vector<64x16xf32>
    %217 = arith.mulf %216, %215 : vector<64x16xf32>
    %218 = arith.maximumf %215, %217 : vector<64x16xf32>
    %219 = arith.addf %77, %120 : vector<16x1xf32>
    %220 = arith.addf %219, %163 : vector<16x1xf32>
    %221 = arith.addf %220, %206 : vector<16x1xf32>
    %cst_51 = arith.constant 1.000000e+00 : f32
    %222 = vector.broadcast %cst_51 : f32 to vector<16x1xf32>
    %223 = arith.divf %222, %221 : vector<16x1xf32>
    %cst_52 = arith.constant 0.000000e+00 : f32
    %224 = vector.broadcast %cst_52 : f32 to vector<16x16xf32>
    %225 = arith.mulf %77, %223 : vector<16x1xf32>
    %226 = vector.extract_strided_slice %218 {offsets = [0, 0], sizes = [16, 16], strides = [1, 1]} : vector<64x16xf32> to vector<16x16xf32>
    %227 = vector.broadcast %225 : vector<16x1xf32> to vector<16x16xf32>
    %228 = arith.mulf %227, %226 : vector<16x16xf32>
    %229 = arith.addf %224, %228 : vector<16x16xf32>
    %230 = arith.mulf %120, %223 : vector<16x1xf32>
    %231 = vector.extract_strided_slice %218 {offsets = [16, 0], sizes = [16, 16], strides = [1, 1]} : vector<64x16xf32> to vector<16x16xf32>
    %232 = vector.broadcast %230 : vector<16x1xf32> to vector<16x16xf32>
    %233 = arith.mulf %232, %231 : vector<16x16xf32>
    %234 = arith.addf %229, %233 : vector<16x16xf32>
    %235 = arith.mulf %163, %223 : vector<16x1xf32>
    %236 = vector.extract_strided_slice %218 {offsets = [32, 0], sizes = [16, 16], strides = [1, 1]} : vector<64x16xf32> to vector<16x16xf32>
    %237 = vector.broadcast %235 : vector<16x1xf32> to vector<16x16xf32>
    %238 = arith.mulf %237, %236 : vector<16x16xf32>
    %239 = arith.addf %234, %238 : vector<16x16xf32>
    %240 = arith.mulf %206, %223 : vector<16x1xf32>
    %241 = vector.extract_strided_slice %218 {offsets = [48, 0], sizes = [16, 16], strides = [1, 1]} : vector<64x16xf32> to vector<16x16xf32>
    %242 = vector.broadcast %240 : vector<16x1xf32> to vector<16x16xf32>
    %243 = arith.mulf %242, %241 : vector<16x16xf32>
    %244 = arith.addf %239, %243 : vector<16x16xf32>
    %245 = tpu.transpose %244, [1, 0] : vector<16x16xf32> -> vector<16x16xf32>
    %c0_53 = arith.constant 0 : index
    %c0_54 = arith.constant 0 : index
    %c0_55 = arith.constant 0 : index
    %246 = vector.load %arg11[%c0_53, %c0_54, %c0_55] : memref<1x16x16xf32, #tpu.memory_space<vmem>>, vector<1x16x16xf32>
    %247 = vector.shape_cast %246 : vector<1x16x16xf32> to vector<16x16xf32>
    %248 = vector.shape_cast %245 : vector<16x16xf32> to vector<1x16x16xf32>
    tpu.vector_store %arg11[%c0_53, %c0_54, %c0_55], %248 {strides = array<i32>} : memref<1x16x16xf32, #tpu.memory_space<vmem>>, vector<1x16x16xf32>,
    return
  }
  func.func @transform_0(%arg0: i32, %arg1: i32) -> (i32, i32, i32) {
    %c0_i32 = arith.constant 0 : i32
    %c0_i32_0 = arith.constant 0 : i32
    return %arg0, %arg1, %c0_i32 : i32, i32, i32
  }
  func.func @transform_1(%arg0: i32, %arg1: i32) -> (i32, i32, i32) {
    %c0_i32 = arith.constant 0 : i32
    %c0_i32_0 = arith.constant 0 : i32
    %c0_i32_1 = arith.constant 0 : i32
    return %arg0, %c0_i32, %c0_i32_0 : i32, i32, i32
  }
  func.func @transform_2(%arg0: i32, %arg1: i32) -> (i32, i32, i32) {
    %c0_i32 = arith.constant 0 : i32
    %c0_i32_0 = arith.constant 0 : i32
    return %arg0, %arg1, %c0_i32 : i32, i32, i32
  }
  func.func @transform_3(%arg0: i32, %arg1: i32) -> (i32, i32, i32) {
    %c0_i32 = arith.constant 0 : i32
    %c0_i32_0 = arith.constant 0 : i32
    %c0_i32_1 = arith.constant 0 : i32
    return %arg0, %c0_i32, %c0_i32_0 : i32, i32, i32
  }
  func.func @transform_4(%arg0: i32, %arg1: i32) -> (i32, i32) {
    %c0_i32 = arith.constant 0 : i32
    %c0_i32_0 = arith.constant 0 : i32
    %c0_i32_1 = arith.constant 0 : i32
    return %c0_i32, %c0_i32_0 : i32, i32
  }
  func.func @transform_5(%arg0: i32, %arg1: i32) -> (i32, i32) {
    %c0_i32 = arith.constant 0 : i32
    %c0_i32_0 = arith.constant 0 : i32
    %c0_i32_1 = arith.constant 0 : i32
    return %c0_i32, %c0_i32_0 : i32, i32
  }
  func.func @transform_6(%arg0: i32, %arg1: i32) -> (i32, i32) {
    %c0_i32 = arith.constant 0 : i32
    %c0_i32_0 = arith.constant 0 : i32
    %c0_i32_1 = arith.constant 0 : i32
    return %c0_i32, %c0_i32_0 : i32, i32
  }
  func.func @transform_7(%arg0: i32, %arg1: i32) -> (i32, i32) {
    %c0_i32 = arith.constant 0 : i32
    %c0_i32_0 = arith.constant 0 : i32
    %c0_i32_1 = arith.constant 0 : i32
    return %c0_i32, %c0_i32_0 : i32, i32
  }
  func.func @transform_8(%arg0: i32, %arg1: i32) -> (i32, i32) {
    %c0_i32 = arith.constant 0 : i32
    %c0_i32_0 = arith.constant 0 : i32
    %c0_i32_1 = arith.constant 0 : i32
    return %c0_i32, %c0_i32_0 : i32, i32
  }
  func.func @transform_9(%arg0: i32, %arg1: i32) -> (i32, i32, i32) {
    %c0_i32 = arith.constant 0 : i32
    %c0_i32_0 = arith.constant 0 : i32
    return %arg0, %c0_i32, %arg1 : i32, i32, i32
  }
}

</mosaic_0001>

<llo_original>
// kernel: cost_volume_layer.1
$region0: #{cost_volume_layer.1}
  #allocation0 [shape = 'u32[]', space=smem, size = 0x4, offset = 0x4, fixed_abs, tag = 'smem constant byte address 0x4 - core index']
  #allocation1 [shape = 'u32[144,128]{1,0:T(1,128)}', space=vmem, size = 0x12000, scoped, tag = 'internal scratch']
  %s0 = inlined_call_operand.vmem [shape: f32[2,16,3], index: 0, kind: input, shape index: {}]
  %s1 = inlined_call_operand.vmem [shape: f32[2,3,16], index: 1, kind: input, shape index: {}]
  %s2 = inlined_call_operand.vmem [shape: f32[2,16,4], index: 2, kind: input, shape index: {}]
  %s3 = inlined_call_operand.vmem [shape: f32[2,16,19], index: 3, kind: input, shape index: {}]
  %s4 = inlined_call_operand.vmem [shape: f32[4,16], index: 4, kind: input, shape index: {}]
  %s5 = inlined_call_operand.vmem [shape: f32[3,16], index: 5, kind: input, shape index: {}]
  %s6 = inlined_call_operand.vmem [shape: f32[1,16], index: 6, kind: input, shape index: {}]
  %s7 = inlined_call_operand.vmem [shape: f32[16,16], index: 7, kind: input, shape index: {}]
  %s8 = inlined_call_operand.vmem [shape: f32[1,16], index: 8, kind: input, shape index: {}]
  %s9 = inlined_call_operand.hbm [shape: f32[2,16,16], index: 9, kind: output, shape index: {}]
  %s10 = sld [smem:[#allocation0]]
  $region69: #{cost_volume_layer.1} parent=0
    _
  %s12 = ssub.s32 1, %s10
  %s13 = scalar_select 0, %s12, %s10
  $region1: #{cost_volume_layer.1} parent=0
    #allocation2 [shape = 'u8[16384]{0}', space=vmem, size = 0x4000, scoped, tag = 'output window, operand 0']
    #allocation3 [shape = 's32[2]{0}', space=sflag, size = 0x8, scoped, tag = 'scoped memory for cost_volume_layer.1']
    %14 = vsyncpa [#allocation3], 0
    %s15 = scalar_lea.sflag [#allocation3], 1
    %16 = vsyncpa %s15, 0
    loop: start=0, step=1, limit=4
    $region2: #{cost_volume_layer.1} parent=1 // loop_pre_header
      _
    $region3: #{cost_volume_layer.1} parent=1 // loop_header
      %s18 = sphi 0, %s22
      %p19 = scmp.ge.s32.totalorder %s18, 4
      %s25 = sphi 0, %s37
      %s26 = sphi 0, %s33
      %s27 = sphi 0, %s25
      %s28 = sphi 0, %s26
      %s29 = sphi 0, %s27
      %s30 = sphi 0, %s28
      %s42 = sphi 0, %s44
      %s45 = sphi 0, %s42
      %s46 = sphi 0, %s45
      %s62 = sphi 0, %s46
      %s68 = sphi 0, %s70
      %s71 = sphi 0, %s68
      %s72 = sphi 0, %s71
      %s88 = sphi 0, %s72
      %s96 = sphi 0, %s98
      %s99 = sphi 0, %s96
      %s100 = sphi 0, %s99
      %s116 = sphi 0, %s100
      %s122 = sphi 0, %s124
      %s125 = sphi 0, %s122
      %s126 = sphi 0, %s125
      %s142 = sphi 0, %s126
      %s146 = sphi 0, %s146
      %s148 = sphi 0, %s146
      %s149 = sphi 0, %s148
      %s163 = sphi 0, %s149
      %s167 = sphi 0, %s167
      %s169 = sphi 0, %s167
      %s170 = sphi 0, %s169
      %s184 = sphi 0, %s170
      %s188 = sphi 0, %s188
      %s190 = sphi 0, %s188
      %s191 = sphi 0, %s190
      %s205 = sphi 0, %s191
      %s209 = sphi 0, %s209
      %s211 = sphi 0, %s209
      %s212 = sphi 0, %s211
      %s226 = sphi 0, %s212
      %s230 = sphi 0, %s230
      %s232 = sphi 0, %s230
      %s233 = sphi 0, %s232
      %s247 = sphi 0, %s233
      %s255 = sphi 0, %s257
      %s258 = sphi 0, %s255
      %s259 = sphi 0, %s258
      %s275 = sphi 0, %s259
    $region4: #{cost_volume_layer.1} parent=1 // loop_header_branch
      %21 = sbr.rel (%p19) target = $region8
    $region5: #{cost_volume_layer.1} parent=1 // loop_body
      %s23 = ssub.s32 %s18, 1
      %s24 = ssub.s32 %s18, 2
      %s31 = sadd.s32 1, %s26
      %p32 = scmp.ge.s32.totalorder %s31, 1
      %s33 = scalar_select %p32, 0, %s31
      %s34 = sadd.s32 1, %s25
      %s35 = scalar_select %p32, %s34, %s25
      %p36 = scmp.ge.s32.totalorder %s35, 2
      %s37 = scalar_select %p36, 0, %s35
      %s38 = ssub.s32 %s25, %s37
      %s39 = ssub.s32 %s26, %s33
      %s40 = sor.u32 %s38, %s39
      %p41 = scmp.eq.s32.totalorder %s40, 0
      %s43 = sadd.s32 %s42, 1
      %s44 = scalar_select %p41, %s42, %s43
      %p47 = pneg %p41
      %p48 = scmp.eq.s32.totalorder %s18, 1
      %p49 = por %p47, %p48
      %p50 = scmp.ne.s32.totalorder %s42, %s45
      %p51 = scmp.eq.s32.totalorder %s18, 0
      %p52 = por %p50, %p51
      %p53 = scmp.ne.s32.totalorder %s42, %s45
      %p54 = scmp.eq.s32.totalorder %s23, 1
      %p55 = por %p53, %p54
      %p56 = scmp.ne.s32.totalorder %s45, %s46
      %p57 = scmp.eq.s32.totalorder %s23, 0
      %p58 = por %p56, %p57
      %p59 = scmp.ne.s32.totalorder %s45, %s46
      %p60 = scmp.eq.s32.totalorder %s24, 1
      %p61 = por %p59, %p60
      %p63 = scmp.ne.s32.totalorder %s46, %s62
      %p64 = scmp.eq.s32.totalorder %s24, 0
      %p65 = por %p63, %p64
      %s66 = ssub.s32 %s25, %s37
      %p67 = scmp.eq.s32.totalorder %s66, 0
      %s69 = sadd.s32 %s68, 1
      %s70 = scalar_select %p67, %s68, %s69
      %p73 = pneg %p67
      %p74 = scmp.eq.s32.totalorder %s18, 1
      %p75 = por %p73, %p74
      %p76 = scmp.ne.s32.totalorder %s68, %s71
      %p77 = scmp.eq.s32.totalorder %s18, 0
      %p78 = por %p76, %p77
      %p79 = scmp.ne.s32.totalorder %s68, %s71
      %p80 = scmp.eq.s32.totalorder %s23, 1
      %p81 = por %p79, %p80
      %p82 = scmp.ne.s32.totalorder %s71, %s72
      %p83 = scmp.eq.s32.totalorder %s23, 0
      %p84 = por %p82, %p83
      %p85 = scmp.ne.s32.totalorder %s71, %s72
      %p86 = scmp.eq.s32.totalorder %s24, 1
      %p87 = por %p85, %p86
      %p89 = scmp.ne.s32.totalorder %s72, %s88
      %p90 = scmp.eq.s32.totalorder %s24, 0
      %p91 = por %p89, %p90
      %s92 = ssub.s32 %s25, %s37
      %s93 = ssub.s32 %s26, %s33
      %s94 = sor.u32 %s92, %s93
      %p95 = scmp.eq.s32.totalorder %s94, 0
      %s97 = sadd.s32 %s96, 1
      %s98 = scalar_select %p95, %s96, %s97
      %p101 = pneg %p95
      %p102 = scmp.eq.s32.totalorder %s18, 1
      %p103 = por %p101, %p102
      %p104 = scmp.ne.s32.totalorder %s96, %s99
      %p105 = scmp.eq.s32.totalorder %s18, 0
      %p106 = por %p104, %p105
      %p107 = scmp.ne.s32.totalorder %s96, %s99
      %p108 = scmp.eq.s32.totalorder %s23, 1
      %p109 = por %p107, %p108
      %p110 = scmp.ne.s32.totalorder %s99, %s100
      %p111 = scmp.eq.s32.totalorder %s23, 0
      %p112 = por %p110, %p111
      %p113 = scmp.ne.s32.totalorder %s99, %s100
      %p114 = scmp.eq.s32.totalorder %s24, 1
      %p115 = por %p113, %p114
      %p117 = scmp.ne.s32.totalorder %s100, %s116
      %p118 = scmp.eq.s32.totalorder %s24, 0
      %p119 = por %p117, %p118
      %s120 = ssub.s32 %s25, %s37
      %p121 = scmp.eq.s32.totalorder %s120, 0
      %s123 = sadd.s32 %s122, 1
      %s124 = scalar_select %p121, %s122, %s123
      %p127 = pneg %p121
      %p128 = scmp.eq.s32.totalorder %s18, 1
      %p129 = por %p127, %p128
      %p130 = scmp.ne.s32.totalorder %s122, %s125
      %p131 = scmp.eq.s32.totalorder %s18, 0
      %p132 = por %p130, %p131
      %p133 = scmp.ne.s32.totalorder %s122, %s125
      %p134 = scmp.eq.s32.totalorder %s23, 1
      %p135 = por %p133, %p134
      %p136 = scmp.ne.s32.totalorder %s125, %s126
      %p137 = scmp.eq.s32.totalorder %s23, 0
      %p138 = por %p136, %p137
      %p139 = scmp.ne.s32.totalorder %s125, %s126
      %p140 = scmp.eq.s32.totalorder %s24, 1
      %p141 = por %p139, %p140
      %p143 = scmp.ne.s32.totalorder %s126, %s142
      %p144 = scmp.eq.s32.totalorder %s24, 0
      %p145 = por %p143, %p144
      %s147 = sadd.s32 %s146, 1
      %p150 = scmp.eq.s32.totalorder %s18, 1
      %p151 = scmp.ne.s32.totalorder %s146, %s148
      %p152 = scmp.eq.s32.totalorder %s18, 0
      %p153 = por %p151, %p152
      %p154 = scmp.ne.s32.totalorder %s146, %s148
      %p155 = scmp.eq.s32.totalorder %s23, 1
      %p156 = por %p154, %p155
      %p157 = scmp.ne.s32.totalorder %s148, %s149
      %p158 = scmp.eq.s32.totalorder %s23, 0
      %p159 = por %p157, %p158
      %p160 = scmp.ne.s32.totalorder %s148, %s149
      %p161 = scmp.eq.s32.totalorder %s24, 1
      %p162 = por %p160, %p161
      %p164 = scmp.ne.s32.totalorder %s149, %s163
      %p165 = scmp.eq.s32.totalorder %s24, 0
      %p166 = por %p164, %p165
      %s168 = sadd.s32 %s167, 1
      %p171 = scmp.eq.s32.totalorder %s18, 1
      %p172 = scmp.ne.s32.totalorder %s167, %s169
      %p173 = scmp.eq.s32.totalorder %s18, 0
      %p174 = por %p172, %p173
      %p175 = scmp.ne.s32.totalorder %s167, %s169
      %p176 = scmp.eq.s32.totalorder %s23, 1
      %p177 = por %p175, %p176
      %p178 = scmp.ne.s32.totalorder %s169, %s170
      %p179 = scmp.eq.s32.totalorder %s23, 0
      %p180 = por %p178, %p179
      %p181 = scmp.ne.s32.totalorder %s169, %s170
      %p182 = scmp.eq.s32.totalorder %s24, 1
      %p183 = por %p181, %p182
      %p185 = scmp.ne.s32.totalorder %s170, %s184
      %p186 = scmp.eq.s32.totalorder %s24, 0
      %p187 = por %p185, %p186
      %s189 = sadd.s32 %s188, 1
      %p192 = scmp.eq.s32.totalorder %s18, 1
      %p193 = scmp.ne.s32.totalorder %s188, %s190
      %p194 = scmp.eq.s32.totalorder %s18, 0
      %p195 = por %p193, %p194
      %p196 = scmp.ne.s32.totalorder %s188, %s190
      %p197 = scmp.eq.s32.totalorder %s23, 1
      %p198 = por %p196, %p197
      %p199 = scmp.ne.s32.totalorder %s190, %s191
      %p200 = scmp.eq.s32.totalorder %s23, 0
      %p201 = por %p199, %p200
      %p202 = scmp.ne.s32.totalorder %s190, %s191
      %p203 = scmp.eq.s32.totalorder %s24, 1
      %p204 = por %p202, %p203
      %p206 = scmp.ne.s32.totalorder %s191, %s205
      %p207 = scmp.eq.s32.totalorder %s24, 0
      %p208 = por %p206, %p207
      %s210 = sadd.s32 %s209, 1
      %p213 = scmp.eq.s32.totalorder %s18, 1
      %p214 = scmp.ne.s32.totalorder %s209, %s211
      %p215 = scmp.eq.s32.totalorder %s18, 0
      %p216 = por %p214, %p215
      %p217 = scmp.ne.s32.totalorder %s209, %s211
      %p218 = scmp.eq.s32.totalorder %s23, 1
      %p219 = por %p217, %p218
      %p220 = scmp.ne.s32.totalorder %s211, %s212
      %p221 = scmp.eq.s32.totalorder %s23, 0
      %p222 = por %p220, %p221
      %p223 = scmp.ne.s32.totalorder %s211, %s212
      %p224 = scmp.eq.s32.totalorder %s24, 1
      %p225 = por %p223, %p224
      %p227 = scmp.ne.s32.totalorder %s212, %s226
      %p228 = scmp.eq.s32.totalorder %s24, 0
      %p229 = por %p227, %p228
      %s231 = sadd.s32 %s230, 1
      %p234 = scmp.eq.s32.totalorder %s18, 1
      %p235 = scmp.ne.s32.totalorder %s230, %s232
      %p236 = scmp.eq.s32.totalorder %s18, 0
      %p237 = por %p235, %p236
      %p238 = scmp.ne.s32.totalorder %s230, %s232
      %p239 = scmp.eq.s32.totalorder %s23, 1
      %p240 = por %p238, %p239
      %p241 = scmp.ne.s32.totalorder %s232, %s233
      %p242 = scmp.eq.s32.totalorder %s23, 0
      %p243 = por %p241, %p242
      %p244 = scmp.ne.s32.totalorder %s232, %s233
      %p245 = scmp.eq.s32.totalorder %s24, 1
      %p246 = por %p244, %p245
      %p248 = scmp.ne.s32.totalorder %s233, %s247
      %p249 = scmp.eq.s32.totalorder %s24, 0
      %p250 = por %p248, %p249
      %s251 = ssub.s32 %s25, %s37
      %s252 = ssub.s32 %s26, %s33
      %s253 = sor.u32 %s251, %s252
      %p254 = scmp.eq.s32.totalorder %s253, 0
      %s256 = sadd.s32 %s255, 1
      %s257 = scalar_select %p254, %s255, %s256
      %p260 = pneg %p254
      %p261 = scmp.eq.s32.totalorder %s18, 1
      %p262 = por %p260, %p261
      %p263 = scmp.ne.s32.totalorder %s255, %s258
      %p264 = scmp.eq.s32.totalorder %s18, 0
      %p265 = por %p263, %p264
      %p266 = scmp.ne.s32.totalorder %s255, %s258
      %p267 = scmp.eq.s32.totalorder %s23, 1
      %p268 = por %p266, %p267
      %p269 = scmp.ne.s32.totalorder %s258, %s259
      %p270 = scmp.eq.s32.totalorder %s23, 0
      %p271 = por %p269, %p270
      %p272 = scmp.ne.s32.totalorder %s258, %s259
      %p273 = scmp.eq.s32.totalorder %s24, 1
      %p274 = por %p272, %p273
      %p276 = scmp.ne.s32.totalorder %s259, %s275
      %p277 = scmp.eq.s32.totalorder %s24, 0
      %p278 = por %p276, %p277
      %p279 = scmp.le.s32.totalorder 1, %s18
      %p280 = scmp.lt.s32.totalorder %s18, 3
      %p281 = pnand %p279, %p280
      %p282 = pneg %p281
      // Predicated region
      $region9: #{cost_volume_layer.1} parent=5 // pred_check
        _
      $region10: #{cost_volume_layer.1} parent=5 // pred_check_branch
        %284 = sbr.rel (%p281) target = $region12
      $region11: #{cost_volume_layer.1} parent=5 // pred_region
        %s285 = ssub.s32 %s18, 1
        // Predicated region
        $region13: #{cost_volume_layer.1} parent=11 // pred_check
          %p286 = pneg %p159
        $region14: #{cost_volume_layer.1} parent=11 // pred_check_branch
          %288 = sbr.rel (%p286) target = $region16
        $region15: #{cost_volume_layer.1} parent=11 // pred_region
          _
        $region16: #{cost_volume_layer.1} parent=11 // pred_fallthru
          _
        // Predicated region
        $region17: #{cost_volume_layer.1} parent=11 // pred_check
          %p289 = pneg %p180
        $region18: #{cost_volume_layer.1} parent=11 // pred_check_branch
          %291 = sbr.rel (%p289) target = $region20
        $region19: #{cost_volume_layer.1} parent=11 // pred_region
          _
        $region20: #{cost_volume_layer.1} parent=11 // pred_fallthru
          _
        // Predicated region
        $region21: #{cost_volume_layer.1} parent=11 // pred_check
          %p292 = pneg %p201
        $region22: #{cost_volume_layer.1} parent=11 // pred_check_branch
          %294 = sbr.rel (%p292) target = $region24
        $region23: #{cost_volume_layer.1} parent=11 // pred_region
          _
        $region24: #{cost_volume_layer.1} parent=11 // pred_fallthru
          _
        // Predicated region
        $region25: #{cost_volume_layer.1} parent=11 // pred_check
          %p295 = pneg %p222
        $region26: #{cost_volume_layer.1} parent=11 // pred_check_branch
          %297 = sbr.rel (%p295) target = $region28
        $region27: #{cost_volume_layer.1} parent=11 // pred_region
          _
        $region28: #{cost_volume_layer.1} parent=11 // pred_fallthru
          _
        // Predicated region
        $region29: #{cost_volume_layer.1} parent=11 // pred_check
          %p298 = pneg %p243
        $region30: #{cost_volume_layer.1} parent=11 // pred_check_branch
          %300 = sbr.rel (%p298) target = $region32
        $region31: #{cost_volume_layer.1} parent=11 // pred_region
          _
        $region32: #{cost_volume_layer.1} parent=11 // pred_fallthru
          _
      $region12: #{cost_volume_layer.1} parent=5 // pred_fallthru
        _
      %p301 = scmp.lt.s32.totalorder %s18, 2
      // Predicated region
      $region33: #{cost_volume_layer.1} parent=5 // pred_check
        %p302 = pneg %p301
      $region34: #{cost_volume_layer.1} parent=5 // pred_check_branch
        %304 = sbr.rel (%p302) target = $region36
      $region35: #{cost_volume_layer.1} parent=5 // pred_region
        // Predicated region
        $region37: #{cost_volume_layer.1} parent=35 // pred_check
          %p305 = pneg %p52
        $region38: #{cost_volume_layer.1} parent=35 // pred_check_branch
          %307 = sbr.rel (%p305) target = $region40
        $region39: #{cost_volume_layer.1} parent=35 // pred_region
          %s308 = smul.u32 2, %s26
          %p309 = scmp.lt.s32.totalorder %s25, 1
          %s310 = scalar_select %p309, %s25, 1
          %p311 = scmp.lt.s32.totalorder %s308, 1
          %s312 = scalar_select %p311, %s308, 1
          %s313 = smul.addr %s310, 2
          %s314 = sadd.s32 %s312, %s313
          %s315 = smul.addr %s314, 8
          %s316 = scalar_lea.vmem %s0, %s315
          %s317 = smul.u32 2, %s26
        $region40: #{cost_volume_layer.1} parent=35 // pred_fallthru
          _
        // Predicated region
        $region41: #{cost_volume_layer.1} parent=35 // pred_check
          %p318 = pneg %p78
        $region42: #{cost_volume_layer.1} parent=35 // pred_check_branch
          %320 = sbr.rel (%p318) target = $region44
        $region43: #{cost_volume_layer.1} parent=35 // pred_region
          %p321 = scmp.lt.s32.totalorder %s25, 1
          %s322 = scalar_select %p321, %s25, 1
          %s323 = smul.addr %s322, 4
          %s324 = scalar_lea.vmem %s1, %s323
        $region44: #{cost_volume_layer.1} parent=35 // pred_fallthru
          _
        // Predicated region
        $region45: #{cost_volume_layer.1} parent=35 // pred_check
          %p325 = pneg %p106
        $region46: #{cost_volume_layer.1} parent=35 // pred_check_branch
          %327 = sbr.rel (%p325) target = $region48
        $region47: #{cost_volume_layer.1} parent=35 // pred_region
          %s328 = smul.u32 2, %s26
          %p329 = scmp.lt.s32.totalorder %s25, 1
          %s330 = scalar_select %p329, %s25, 1
          %p331 = scmp.lt.s32.totalorder %s328, 1
          %s332 = scalar_select %p331, %s328, 1
          %s333 = smul.addr %s330, 2
          %s334 = sadd.s32 %s332, %s333
          %s335 = smul.addr %s334, 8
          %s336 = scalar_lea.vmem %s2, %s335
          %s337 = smul.u32 2, %s26
        $region48: #{cost_volume_layer.1} parent=35 // pred_fallthru
          _
        // Predicated region
        $region49: #{cost_volume_layer.1} parent=35 // pred_check
          %p338 = pneg %p132
        $region50: #{cost_volume_layer.1} parent=35 // pred_check_branch
          %340 = sbr.rel (%p338) target = $region52
        $region51: #{cost_volume_layer.1} parent=35 // pred_region
          %p341 = scmp.lt.s32.totalorder %s25, 1
          %s342 = scalar_select %p341, %s25, 1
          %s343 = smul.addr %s342, 2
          %s344 = smul.addr %s343, 8
          %s345 = scalar_lea.vmem %s3, %s344
        $region52: #{cost_volume_layer.1} parent=35 // pred_fallthru
          _
      $region36: #{cost_volume_layer.1} parent=5 // pred_fallthru
        _
      %p346 = scmp.le.s32.totalorder 1, %s18
      %p347 = scmp.lt.s32.totalorder %s18, 3
      %p348 = pnand %p346, %p347
      %p349 = pneg %p348
      // Predicated region
      $region53: #{cost_volume_layer.1} parent=5 // pred_check
        _
      $region54: #{cost_volume_layer.1} parent=5 // pred_check_branch
        %351 = sbr.rel (%p348) target = $region56
      $region55: #{cost_volume_layer.1} parent=5 // pred_region
        %s352 = ssub.s32 %s18, 1
        %s353 = smul.u32 2, %s28
        %p354 = scmp.lt.s32.totalorder %s27, 1
        %s355 = scalar_select %p354, %s27, 1
        %p356 = scmp.lt.s32.totalorder %s353, 1
        %s357 = scalar_select %p356, %s353, 1
        %s358 = smul.addr %s355, 2
        %s359 = sadd.s32 %s357, %s358
        %s360 = smul.addr %s359, 8
        %s361 = scalar_lea.vmem %s0, %s360
        %p362 = pneg %p58
        %p363 = pneg %p55
        %p364 = scmp.lt.s32.totalorder %s27, 1
        %s365 = scalar_select %p364, %s27, 1
        %s366 = smul.addr %s365, 4
        %s367 = scalar_lea.vmem %s1, %s366
        %p368 = pneg %p84
        %p369 = pneg %p81
        %s370 = smul.u32 2, %s28
        %p371 = scmp.lt.s32.totalorder %s27, 1
        %s372 = scalar_select %p371, %s27, 1
        %p373 = scmp.lt.s32.totalorder %s370, 1
        %s374 = scalar_select %p373, %s370, 1
        %s375 = smul.addr %s372, 2
        %s376 = sadd.s32 %s374, %s375
        %s377 = smul.addr %s376, 8
        %s378 = scalar_lea.vmem %s2, %s377
        %p379 = pneg %p112
        %p380 = pneg %p109
        %p381 = scmp.lt.s32.totalorder %s27, 1
        %s382 = scalar_select %p381, %s27, 1
        %s383 = smul.addr %s382, 2
        %s384 = smul.addr %s383, 8
        %s385 = scalar_lea.vmem %s3, %s384
        %p386 = pneg %p138
        %p387 = pneg %p135
        %p388 = pneg %p159
        %p389 = pneg %p156
        %p390 = pneg %p180
        %p391 = pneg %p177
        %p392 = pneg %p201
        %p393 = pneg %p198
        %p394 = pneg %p222
        %p395 = pneg %p219
        %p396 = pneg %p243
        %p397 = pneg %p240
        %p398 = pneg %p271
        %p399 = pneg %p268
        %s400 = sand.u32 %s258, 1
        %s401 = scalar_lea.sflag [#allocation3], %s400
        %s402 = sand.u32 %s258, 1
        %s403 = smul.addr %s402, 16
        %s404 = scalar_lea.vmem [#allocation2], %s403
        %s405 = smul.u32 2, %s28
        %p406 = scmp.lt.s32.totalorder %s27, 1
        %s407 = scalar_select %p406, %s27, 1
        %p408 = scmp.lt.s32.totalorder %s405, 1
        %s409 = scalar_select %p408, %s405, 1
        %s410 = smul.addr %s407, 2
        %s411 = sadd.s32 %s409, %s410
        %s412 = smul.addr %s411, 8
        %s413 = scalar_lea.vmem %s0, %s412
        %s414 = smul.u32 2, %s28
        %p415 = scmp.lt.s32.totalorder %s27, 1
        %s416 = scalar_select %p415, %s27, 1
        %s417 = smul.addr %s416, 4
        %s418 = scalar_lea.vmem %s1, %s417
        %s419 = smul.u32 2, %s28
        %p420 = scmp.lt.s32.totalorder %s27, 1
        %s421 = scalar_select %p420, %s27, 1
        %p422 = scmp.lt.s32.totalorder %s419, 1
        %s423 = scalar_select %p422, %s419, 1
        %s424 = smul.addr %s421, 2
        %s425 = sadd.s32 %s423, %s424
        %s426 = smul.addr %s425, 8
        %s427 = scalar_lea.vmem %s2, %s426
        %s428 = smul.u32 2, %s28
        %p429 = scmp.lt.s32.totalorder %s27, 1
        %s430 = scalar_select %p429, %s27, 1
        %s431 = smul.addr %s430, 2
        %s432 = smul.addr %s431, 8
        %s433 = scalar_lea.vmem %s3, %s432
        %v434 = vld [vmem:[%s413] sm:$0xff]
        %v435 = vld [vmem:[%s413 + $0x8] sm:$0xff]
        %v436 = vld [vmem:[%s418] sm:$0x7]
        %v437 = vld [vmem:[%s427] sm:$0xff]
        %v438 = vld [vmem:[%s427 + $0x8] sm:$0xff]
        %v439 = vld [vmem:[%s433] sm:$0xff]
        %v440 = vld [vmem:[%s433 + $0x8] sm:$0xff]
        %442 = vset.pattern.permute.xlu0 0
        %443 = vperm.xlu0 %442, %v434
        %v444 = vpop.permute.xlu0 %443
        %447 = vset.pattern.permute.xlu0 0
        %448 = vperm.xlu0 %447, %v435
        %v449 = vpop.permute.xlu0 %448
        %v451 = vlaneseq
        %v452 = vshrl.u32 %v451, 7
        %v453 = vsub.s32 0, %v452
        %v454 = vrot.slane %v436, %v453
        %v455 = vsub.f32 %v444, %v454
        %v456 = vsub.f32 %v449, %v454
        %v457 = vmul.f32 %v455, %v455
        %v458 = vmul.f32 %v456, %v456
        %v459 = vadd.f32 %v457, 0.0
        %v460 = vadd.f32 %v458, 0.0
        %461 = vset.pattern.permute.xlu0 1
        %462 = vperm.xlu0 %461, %v434
        %v463 = vpop.permute.xlu0 %462
        %465 = vset.pattern.permute.xlu0 1
        %466 = vperm.xlu0 %465, %v435
        %v467 = vpop.permute.xlu0 %466
        %v469 = vlaneseq
        %v470 = vshrl.u32 %v469, 7
        %v471 = vsub.s32 1, %v470
        %v472 = vrot.slane %v436, %v471
        %v473 = vsub.f32 %v463, %v472
        %v474 = vsub.f32 %v467, %v472
        %v475 = vmul.f32 %v473, %v473
        %v476 = vmul.f32 %v474, %v474
        %v477 = vadd.f32 %v459, %v475
        %v478 = vadd.f32 %v460, %v476
        %479 = vset.pattern.permute.xlu0 2
        %480 = vperm.xlu0 %479, %v434
        %v481 = vpop.permute.xlu0 %480
        %483 = vset.pattern.permute.xlu0 2
        %484 = vperm.xlu0 %483, %v435
        %v485 = vpop.permute.xlu0 %484
        %v487 = vlaneseq
        %v488 = vshrl.u32 %v487, 7
        %v489 = vsub.s32 2, %v488
        %v490 = vrot.slane %v436, %v489
        %v491 = vsub.f32 %v481, %v490
        %v492 = vsub.f32 %v485, %v490
        %v493 = vmul.f32 %v491, %v491
        %v494 = vmul.f32 %v492, %v492
        %v495 = vadd.f32 %v477, %v493
        %v496 = vadd.f32 %v478, %v494
        %v497 = vlaneseq
        %v498 = vand.u32 %v497, 127
        %v499 = vld [vmem:[%s4] sm:$0xf]
        %v500 = vld [vmem:[%s6] sm:$0x1]
        %v502 = vlaneseq
        %v503 = vshrl.u32 %v502, 7
        %v504 = vsub.s32 0, %v503
        %v505 = vrot.slane %v500, %v504
        %vm507 = vcmask 31744
        %v509 = vsel %vm507, %v437, 0
        %v512 = vsel %vm507, %v438, 0
        %vm514 = vcmask 1043456
        %v516 = vsel %vm514, %v499, 0
        %518 = vmatprep.subr.mxu0 0.0
        %v519 = vand.u32 %v516, 4294901760
        %520 = vmatpush1.msra.mxu0 %v519
        %521 = vmatprep.subr.mxu0 0.0
        %522 = vmatpush1.msra.mxu0 0.0
        %523 = vmatprep.subr.mxu0 0.0
        %524 = vmatpush1.msra.mxu0 0.0
        %525 = vmatprep.subr.mxu0 0.0
        %526 = vmatpush1.msra.mxu0 0.0
        %527 = vmatprep.subr.mxu0 0.0
        %528 = vmatpush1.msra.mxu0 0.0
        %529 = vmatprep.subr.mxu0 0.0
        %530 = vmatpush1.msra.mxu0 0.0
        %531 = vmatprep.subr.mxu0 0.0
        %532 = vmatpush1.msra.mxu0 0.0
        %533 = vmatprep.subr.mxu0 0.0
        %534 = vmatpush1.msra.mxu0 0.0
        %535 = vmatprep.subr.mxu0 0.0
        %536 = vmatpush1.msra.mxu0 0.0
        %537 = vmatprep.subr.mxu0 0.0
        %538 = vmatpush1.msra.mxu0 0.0
        %539 = vmatprep.subr.mxu0 0.0
        %540 = vmatpush1.msra.mxu0 0.0
        %541 = vmatprep.subr.mxu0 0.0
        %542 = vmatpush1.msra.mxu0 0.0
        %543 = vmatprep.subr.mxu0 0.0
        %544 = vmatpush1.msra.mxu0 0.0
        %545 = vmatprep.subr.mxu0 0.0
        %546 = vmatpush1.msra.mxu0 0.0
        %547 = vmatprep.subr.mxu0 0.0
        %548 = vmatpush1.msra.mxu0 0.0
        %549 = vmatprep.subr.mxu0 0.0
        %550 = vmatpush1.msra.mxu0 0.0
        %551 = vmatprep.subr.mxu0 0.0
        %552 = vmatpush1.msra.mxu0 0.0
        %553 = vmatprep.subr.mxu0 0.0
        %554 = vmatpush1.msra.mxu0 0.0
        %555 = vmatprep.subr.mxu0 0.0
        %556 = vmatpush1.msra.mxu0 0.0
        %557 = vmatprep.subr.mxu0 0.0
        %558 = vmatpush1.msra.mxu0 0.0
        %559 = vmatprep.subr.mxu0 0.0
        %560 = vmatpush1.msra.mxu0 0.0
        %561 = vmatprep.subr.mxu0 0.0
        %562 = vmatpush1.msra.mxu0 0.0
        %563 = vmatprep.subr.mxu0 0.0
        %564 = vmatpush1.msra.mxu0 0.0
        %565 = vmatprep.subr.mxu0 0.0
        %566 = vmatpush1.msra.mxu0 0.0
        %567 = vmatprep.subr.mxu0 0.0
        %568 = vmatpush1.msra.mxu0 0.0
        %569 = vmatprep.subr.mxu0 0.0
        %570 = vmatpush1.msra.mxu0 0.0
        %571 = vmatprep.subr.mxu0 0.0
        %572 = vmatpush1.msra.mxu0 0.0
        %573 = vmatprep.subr.mxu0 0.0
        %574 = vmatpush1.msra.mxu0 0.0
        %575 = vmatprep.subr.mxu0 0.0
        %576 = vmatpush1.msra.mxu0 0.0
        %577 = vmatprep.subr.mxu0 0.0
        %578 = vmatpush1.msra.mxu0 0.0
        %579 = vmatprep.subr.mxu0 0.0
        %580 = vmatpush1.msra.mxu0 0.0
        %581 = vmatprep.subr.mxu0 0.0
        %582 = vmatpush1.msra.mxu0 0.0
        %583 = vmatprep.mubr.f32.mxu0 0.0
        %v584 = vand.u32 %v509, 4294901760
        %v585 = vsub.f32 %v509, %v584
        %v586 = vand.u32 %v585, 4294901760
        %v587 = vsub.f32 %v585, %v586
        %v588 = vand.u32 %v587, 4294901760
        %589 = vmatmul.mubr.f32.gmra.mrb[0].mxu0 %v588
        %v590 = vpop.f32.mrb[0].mxu0
        %v591 = vadd.f32 %v505, %v590
        %v592 = vpop.f32.mrb[0].mxu0
        %593 = vmatprep.mubr.f32.mxu0 0.0
        %v594 = vand.u32 %v512, 4294901760
        %v595 = vsub.f32 %v512, %v594
        %v596 = vand.u32 %v595, 4294901760
        %v597 = vsub.f32 %v595, %v596
        %v598 = vand.u32 %v597, 4294901760
        %599 = vmatmul.mubr.f32.gmra.mrb[0].mxu0 %v598
        %v600 = vpop.f32.mrb[0].mxu0
        %v601 = vadd.f32 %v505, %v600
        %v602 = vpop.f32.mrb[0].mxu0
        %603 = vdwg.mxu0
        %604 = vmatprep.subr.mxu0 0.0
        %v605 = vand.u32 %v516, 4294901760
        %v606 = vsub.f32 %v516, %v605
        %v607 = vand.u32 %v606, 4294901760
        %v608 = vsub.f32 %v606, %v607
        %v609 = vand.u32 %v608, 4294901760
        %610 = vmatpush1.msra.mxu0 %v609
        %611 = vmatprep.subr.mxu0 0.0
        %612 = vmatpush1.msra.mxu0 0.0
        %613 = vmatprep.subr.mxu0 0.0
        %614 = vmatpush1.msra.mxu0 0.0
        %615 = vmatprep.subr.mxu0 0.0
        %616 = vmatpush1.msra.mxu0 0.0
        %617 = vmatprep.subr.mxu0 0.0
        %618 = vmatpush1.msra.mxu0 0.0
        %619 = vmatprep.subr.mxu0 0.0
        %620 = vmatpush1.msra.mxu0 0.0
        %621 = vmatprep.subr.mxu0 0.0
        %622 = vmatpush1.msra.mxu0 0.0
        %623 = vmatprep.subr.mxu0 0.0
        %624 = vmatpush1.msra.mxu0 0.0
        %625 = vmatprep.subr.mxu0 0.0
        %626 = vmatpush1.msra.mxu0 0.0
        %627 = vmatprep.subr.mxu0 0.0
        %628 = vmatpush1.msra.mxu0 0.0
        %629 = vmatprep.subr.mxu0 0.0
        %630 = vmatpush1.msra.mxu0 0.0
        %631 = vmatprep.subr.mxu0 0.0
        %632 = vmatpush1.msra.mxu0 0.0
        %633 = vmatprep.subr.mxu0 0.0
        %634 = vmatpush1.msra.mxu0 0.0
        %635 = vmatprep.subr.mxu0 0.0
        %636 = vmatpush1.msra.mxu0 0.0
        %637 = vmatprep.subr.mxu0 0.0
        %638 = vmatpush1.msra.mxu0 0.0
        %639 = vmatprep.subr.mxu0 0.0
        %640 = vmatpush1.msra.mxu0 0.0
        %641 = vmatprep.subr.mxu0 0.0
        %642 = vmatpush1.msra.mxu0 0.0
        %643 = vmatprep.subr.mxu0 0.0
        %644 = vmatpush1.msra.mxu0 0.0
        %645 = vmatprep.subr.mxu0 0.0
        %646 = vmatpush1.msra.mxu0 0.0
        %647 = vmatprep.subr.mxu0 0.0
        %648 = vmatpush1.msra.mxu0 0.0
        %649 = vmatprep.subr.mxu0 0.0
        %650 = vmatpush1.msra.mxu0 0.0
        %651 = vmatprep.subr.mxu0 0.0
        %652 = vmatpush1.msra.mxu0 0.0
        %653 = vmatprep.subr.mxu0 0.0
        %654 = vmatpush1.msra.mxu0 0.0
        %655 = vmatprep.subr.mxu0 0.0
        %656 = vmatpush1.msra.mxu0 0.0
        %657 = vmatprep.subr.mxu0 0.0
        %658 = vmatpush1.msra.mxu0 0.0
        %659 = vmatprep.subr.mxu0 0.0
        %660 = vmatpush1.msra.mxu0 0.0
        %661 = vmatprep.subr.mxu0 0.0
        %662 = vmatpush1.msra.mxu0 0.0
        %663 = vmatprep.subr.mxu0 0.0
        %664 = vmatpush1.msra.mxu0 0.0
        %665 = vmatprep.subr.mxu0 0.0
        %666 = vmatpush1.msra.mxu0 0.0
        %667 = vmatprep.subr.mxu0 0.0
        %668 = vmatpush1.msra.mxu0 0.0
        %669 = vmatprep.subr.mxu0 0.0
        %670 = vmatpush1.msra.mxu0 0.0
        %671 = vmatprep.subr.mxu0 0.0
        %672 = vmatpush1.msra.mxu0 0.0
        %673 = vmatprep.mubr.f32.mxu0 0.0
        %v674 = vand.u32 %v509, 4294901760
        %675 = vmatmul.mubr.f32.gmra.mrb[0].mxu0 %v674
        %v676 = vpop.f32.mrb[0].mxu0
        %v677 = vadd.f32 %v591, %v676
        %v678 = vpop.f32.mrb[0].mxu0
        %679 = vmatprep.mubr.f32.mxu0 0.0
        %v680 = vand.u32 %v512, 4294901760
        %681 = vmatmul.mubr.f32.gmra.mrb[0].mxu0 %v680
        %v682 = vpop.f32.mrb[0].mxu0
        %v683 = vadd.f32 %v601, %v682
        %v684 = vpop.f32.mrb[0].mxu0
        %685 = vdwg.mxu0
        %686 = vmatprep.subr.mxu0 0.0
        %v687 = vand.u32 %v516, 4294901760
        %v688 = vsub.f32 %v516, %v687
        %689 = vmatpush1.msra.mxu0 %v688
        %690 = vmatprep.subr.mxu0 0.0
        %691 = vmatpush1.msra.mxu0 0.0
        %692 = vmatprep.subr.mxu0 0.0
        %693 = vmatpush1.msra.mxu0 0.0
        %694 = vmatprep.subr.mxu0 0.0
        %695 = vmatpush1.msra.mxu0 0.0
        %696 = vmatprep.subr.mxu0 0.0
        %697 = vmatpush1.msra.mxu0 0.0
        %698 = vmatprep.subr.mxu0 0.0
        %699 = vmatpush1.msra.mxu0 0.0
        %700 = vmatprep.subr.mxu0 0.0
        %701 = vmatpush1.msra.mxu0 0.0
        %702 = vmatprep.subr.mxu0 0.0
        %703 = vmatpush1.msra.mxu0 0.0
        %704 = vmatprep.subr.mxu0 0.0
        %705 = vmatpush1.msra.mxu0 0.0
        %706 = vmatprep.subr.mxu0 0.0
        %707 = vmatpush1.msra.mxu0 0.0
        %708 = vmatprep.subr.mxu0 0.0
        %709 = vmatpush1.msra.mxu0 0.0
        %710 = vmatprep.subr.mxu0 0.0
        %711 = vmatpush1.msra.mxu0 0.0
        %712 = vmatprep.subr.mxu0 0.0
        %713 = vmatpush1.msra.mxu0 0.0
        %714 = vmatprep.subr.mxu0 0.0
        %715 = vmatpush1.msra.mxu0 0.0
        %716 = vmatprep.subr.mxu0 0.0
        %717 = vmatpush1.msra.mxu0 0.0
        %718 = vmatprep.subr.mxu0 0.0
        %719 = vmatpush1.msra.mxu0 0.0
        %720 = vmatprep.subr.mxu0 0.0
        %721 = vmatpush1.msra.mxu0 0.0
        %722 = vmatprep.subr.mxu0 0.0
        %723 = vmatpush1.msra.mxu0 0.0
        %724 = vmatprep.subr.mxu0 0.0
        %725 = vmatpush1.msra.mxu0 0.0
        %726 = vmatprep.subr.mxu0 0.0
        %727 = vmatpush1.msra.mxu0 0.0
        %728 = vmatprep.subr.mxu0 0.0
        %729 = vmatpush1.msra.mxu0 0.0
        %730 = vmatprep.subr.mxu0 0.0
        %731 = vmatpush1.msra.mxu0 0.0
        %732 = vmatprep.subr.mxu0 0.0
        %733 = vmatpush1.msra.mxu0 0.0
        %734 = vmatprep.subr.mxu0 0.0
        %735 = vmatpush1.msra.mxu0 0.0
        %736 = vmatprep.subr.mxu0 0.0
        %737 = vmatpush1.msra.mxu0 0.0
        %738 = vmatprep.subr.mxu0 0.0
        %739 = vmatpush1.msra.mxu0 0.0
        %740 = vmatprep.subr.mxu0 0.0
        %741 = vmatpush1.msra.mxu0 0.0
        %742 = vmatprep.subr.mxu0 0.0
        %743 = vmatpush1.msra.mxu0 0.0
        %744 = vmatprep.subr.mxu0 0.0
        %745 = vmatpush1.msra.mxu0 0.0
        %746 = vmatprep.subr.mxu0 0.0
        %747 = vmatpush1.msra.mxu0 0.0
        %748 = vmatprep.subr.mxu0 0.0
        %749 = vmatpush1.msra.mxu0 0.0
        %750 = vmatprep.subr.mxu0 0.0
        %751 = vmatpush1.msra.mxu0 0.0
        %752 = vmatprep.mubr.f32.mxu0 0.0
        %v753 = vand.u32 %v509, 4294901760
        %v754 = vsub.f32 %v509, %v753
        %755 = vmatmul.mubr.f32.gmra.mrb[0].mxu0 %v754
        %v756 = vpop.f32.mrb[0].mxu0
        %v757 = vadd.f32 %v677, %v756
        %v758 = vpop.f32.mrb[0].mxu0
        %759 = vmatprep.mubr.f32.mxu0 0.0
        %v760 = vand.u32 %v512, 4294901760
        %v761 = vsub.f32 %v512, %v760
        %762 = vmatmul.mubr.f32.gmra.mrb[0].mxu0 %v761
        %v763 = vpop.f32.mrb[0].mxu0
        %v764 = vadd.f32 %v683, %v763
        %v765 = vpop.f32.mrb[0].mxu0
        %766 = vdwg.mxu0
        %767 = vmatprep.subr.mxu0 0.0
        %v768 = vand.u32 %v516, 4294901760
        %769 = vmatpush1.msra.mxu0 %v768
        %770 = vmatprep.subr.mxu0 0.0
        %771 = vmatpush1.msra.mxu0 0.0
        %772 = vmatprep.subr.mxu0 0.0
        %773 = vmatpush1.msra.mxu0 0.0
        %774 = vmatprep.subr.mxu0 0.0
        %775 = vmatpush1.msra.mxu0 0.0
        %776 = vmatprep.subr.mxu0 0.0
        %777 = vmatpush1.msra.mxu0 0.0
        %778 = vmatprep.subr.mxu0 0.0
        %779 = vmatpush1.msra.mxu0 0.0
        %780 = vmatprep.subr.mxu0 0.0
        %781 = vmatpush1.msra.mxu0 0.0
        %782 = vmatprep.subr.mxu0 0.0
        %783 = vmatpush1.msra.mxu0 0.0
        %784 = vmatprep.subr.mxu0 0.0
        %785 = vmatpush1.msra.mxu0 0.0
        %786 = vmatprep.subr.mxu0 0.0
        %787 = vmatpush1.msra.mxu0 0.0
        %788 = vmatprep.subr.mxu0 0.0
        %789 = vmatpush1.msra.mxu0 0.0
        %790 = vmatprep.subr.mxu0 0.0
        %791 = vmatpush1.msra.mxu0 0.0
        %792 = vmatprep.subr.mxu0 0.0
        %793 = vmatpush1.msra.mxu0 0.0
        %794 = vmatprep.subr.mxu0 0.0
        %795 = vmatpush1.msra.mxu0 0.0
        %796 = vmatprep.subr.mxu0 0.0
        %797 = vmatpush1.msra.mxu0 0.0
        %798 = vmatprep.subr.mxu0 0.0
        %799 = vmatpush1.msra.mxu0 0.0
        %800 = vmatprep.subr.mxu0 0.0
        %801 = vmatpush1.msra.mxu0 0.0
        %802 = vmatprep.subr.mxu0 0.0
        %803 = vmatpush1.msra.mxu0 0.0
        %804 = vmatprep.subr.mxu0 0.0
        %805 = vmatpush1.msra.mxu0 0.0
        %806 = vmatprep.subr.mxu0 0.0
        %807 = vmatpush1.msra.mxu0 0.0
        %808 = vmatprep.subr.mxu0 0.0
        %809 = vmatpush1.msra.mxu0 0.0
        %810 = vmatprep.subr.mxu0 0.0
        %811 = vmatpush1.msra.mxu0 0.0
        %812 = vmatprep.subr.mxu0 0.0
        %813 = vmatpush1.msra.mxu0 0.0
        %814 = vmatprep.subr.mxu0 0.0
        %815 = vmatpush1.msra.mxu0 0.0
        %816 = vmatprep.subr.mxu0 0.0
        %817 = vmatpush1.msra.mxu0 0.0
        %818 = vmatprep.subr.mxu0 0.0
        %819 = vmatpush1.msra.mxu0 0.0
        %820 = vmatprep.subr.mxu0 0.0
        %821 = vmatpush1.msra.mxu0 0.0
        %822 = vmatprep.subr.mxu0 0.0
        %823 = vmatpush1.msra.mxu0 0.0
        %824 = vmatprep.subr.mxu0 0.0
        %825 = vmatpush1.msra.mxu0 0.0
        %826 = vmatprep.subr.mxu0 0.0
        %827 = vmatpush1.msra.mxu0 0.0
        %828 = vmatprep.subr.mxu0 0.0
        %829 = vmatpush1.msra.mxu0 0.0
        %830 = vmatprep.subr.mxu0 0.0
        %831 = vmatpush1.msra.mxu0 0.0
        %832 = vmatprep.mubr.f32.mxu0 0.0
        %v833 = vand.u32 %v509, 4294901760
        %v834 = vsub.f32 %v509, %v833
        %v835 = vand.u32 %v834, 4294901760
        %836 = vmatmul.mubr.f32.gmra.mrb[0].mxu0 %v835
        %v837 = vpop.f32.mrb[0].mxu0
        %v838 = vadd.f32 %v757, %v837
        %v839 = vpop.f32.mrb[0].mxu0
        %840 = vmatprep.mubr.f32.mxu0 0.0
        %v841 = vand.u32 %v512, 4294901760
        %v842 = vsub.f32 %v512, %v841
        %v843 = vand.u32 %v842, 4294901760
        %844 = vmatmul.mubr.f32.gmra.mrb[0].mxu0 %v843
        %v845 = vpop.f32.mrb[0].mxu0
        %v846 = vadd.f32 %v764, %v845
        %v847 = vpop.f32.mrb[0].mxu0
        %848 = vdwg.mxu0
        %849 = vmatprep.subr.mxu0 0.0
        %v850 = vand.u32 %v516, 4294901760
        %v851 = vsub.f32 %v516, %v850
        %v852 = vand.u32 %v851, 4294901760
        %853 = vmatpush1.msra.mxu0 %v852
        %854 = vmatprep.subr.mxu0 0.0
        %855 = vmatpush1.msra.mxu0 0.0
        %856 = vmatprep.subr.mxu0 0.0
        %857 = vmatpush1.msra.mxu0 0.0
        %858 = vmatprep.subr.mxu0 0.0
        %859 = vmatpush1.msra.mxu0 0.0
        %860 = vmatprep.subr.mxu0 0.0
        %861 = vmatpush1.msra.mxu0 0.0
        %862 = vmatprep.subr.mxu0 0.0
        %863 = vmatpush1.msra.mxu0 0.0
        %864 = vmatprep.subr.mxu0 0.0
        %865 = vmatpush1.msra.mxu0 0.0
        %866 = vmatprep.subr.mxu0 0.0
        %867 = vmatpush1.msra.mxu0 0.0
        %868 = vmatprep.subr.mxu0 0.0
        %869 = vmatpush1.msra.mxu0 0.0
        %870 = vmatprep.subr.mxu0 0.0
        %871 = vmatpush1.msra.mxu0 0.0
        %872 = vmatprep.subr.mxu0 0.0
        %873 = vmatpush1.msra.mxu0 0.0
        %874 = vmatprep.subr.mxu0 0.0
        %875 = vmatpush1.msra.mxu0 0.0
        %876 = vmatprep.subr.mxu0 0.0
        %877 = vmatpush1.msra.mxu0 0.0
        %878 = vmatprep.subr.mxu0 0.0
        %879 = vmatpush1.msra.mxu0 0.0
        %880 = vmatprep.subr.mxu0 0.0
        %881 = vmatpush1.msra.mxu0 0.0
        %882 = vmatprep.subr.mxu0 0.0
        %883 = vmatpush1.msra.mxu0 0.0
        %884 = vmatprep.subr.mxu0 0.0
        %885 = vmatpush1.msra.mxu0 0.0
        %886 = vmatprep.subr.mxu0 0.0
        %887 = vmatpush1.msra.mxu0 0.0
        %888 = vmatprep.subr.mxu0 0.0
        %889 = vmatpush1.msra.mxu0 0.0
        %890 = vmatprep.subr.mxu0 0.0
        %891 = vmatpush1.msra.mxu0 0.0
        %892 = vmatprep.subr.mxu0 0.0
        %893 = vmatpush1.msra.mxu0 0.0
        %894 = vmatprep.subr.mxu0 0.0
        %895 = vmatpush1.msra.mxu0 0.0
        %896 = vmatprep.subr.mxu0 0.0
        %897 = vmatpush1.msra.mxu0 0.0
        %898 = vmatprep.subr.mxu0 0.0
        %899 = vmatpush1.msra.mxu0 0.0
        %900 = vmatprep.subr.mxu0 0.0
        %901 = vmatpush1.msra.mxu0 0.0
        %902 = vmatprep.subr.mxu0 0.0
        %903 = vmatpush1.msra.mxu0 0.0
        %904 = vmatprep.subr.mxu0 0.0
        %905 = vmatpush1.msra.mxu0 0.0
        %906 = vmatprep.subr.mxu0 0.0
        %907 = vmatpush1.msra.mxu0 0.0
        %908 = vmatprep.subr.mxu0 0.0
        %909 = vmatpush1.msra.mxu0 0.0
        %910 = vmatprep.subr.mxu0 0.0
        %911 = vmatpush1.msra.mxu0 0.0
        %912 = vmatprep.subr.mxu0 0.0
        %913 = vmatpush1.msra.mxu0 0.0
        %914 = vmatprep.subr.mxu0 0.0
        %915 = vmatpush1.msra.mxu0 0.0
        %916 = vmatprep.mubr.f32.mxu0 0.0
        %v917 = vand.u32 %v509, 4294901760
        %918 = vmatmul.mubr.f32.gmra.mrb[0].mxu0 %v917
        %v919 = vpop.f32.mrb[0].mxu0
        %v920 = vadd.f32 %v838, %v919
        %v921 = vpop.f32.mrb[0].mxu0
        %922 = vmatprep.mubr.f32.mxu0 0.0
        %v923 = vand.u32 %v512, 4294901760
        %924 = vmatmul.mubr.f32.gmra.mrb[0].mxu0 %v923
        %v925 = vpop.f32.mrb[0].mxu0
        %v926 = vadd.f32 %v846, %v925
        %v927 = vpop.f32.mrb[0].mxu0
        %928 = vdwg.mxu0
        %929 = vmatprep.subr.mxu0 0.0
        %v930 = vand.u32 %v516, 4294901760
        %931 = vmatpush1.msra.mxu0 %v930
        %932 = vmatprep.subr.mxu0 0.0
        %933 = vmatpush1.msra.mxu0 0.0
        %934 = vmatprep.subr.mxu0 0.0
        %935 = vmatpush1.msra.mxu0 0.0
        %936 = vmatprep.subr.mxu0 0.0
        %937 = vmatpush1.msra.mxu0 0.0
        %938 = vmatprep.subr.mxu0 0.0
        %939 = vmatpush1.msra.mxu0 0.0
        %940 = vmatprep.subr.mxu0 0.0
        %941 = vmatpush1.msra.mxu0 0.0
        %942 = vmatprep.subr.mxu0 0.0
        %943 = vmatpush1.msra.mxu0 0.0
        %944 = vmatprep.subr.mxu0 0.0
        %945 = vmatpush1.msra.mxu0 0.0
        %946 = vmatprep.subr.mxu0 0.0
        %947 = vmatpush1.msra.mxu0 0.0
        %948 = vmatprep.subr.mxu0 0.0
        %949 = vmatpush1.msra.mxu0 0.0
        %950 = vmatprep.subr.mxu0 0.0
        %951 = vmatpush1.msra.mxu0 0.0
        %952 = vmatprep.subr.mxu0 0.0
        %953 = vmatpush1.msra.mxu0 0.0
        %954 = vmatprep.subr.mxu0 0.0
        %955 = vmatpush1.msra.mxu0 0.0
        %956 = vmatprep.subr.mxu0 0.0
        %957 = vmatpush1.msra.mxu0 0.0
        %958 = vmatprep.subr.mxu0 0.0
        %959 = vmatpush1.msra.mxu0 0.0
        %960 = vmatprep.subr.mxu0 0.0
        %961 = vmatpush1.msra.mxu0 0.0
        %962 = vmatprep.subr.mxu0 0.0
        %963 = vmatpush1.msra.mxu0 0.0
        %964 = vmatprep.subr.mxu0 0.0
        %965 = vmatpush1.msra.mxu0 0.0
        %966 = vmatprep.subr.mxu0 0.0
        %967 = vmatpush1.msra.mxu0 0.0
        %968 = vmatprep.subr.mxu0 0.0
        %969 = vmatpush1.msra.mxu0 0.0
        %970 = vmatprep.subr.mxu0 0.0
        %971 = vmatpush1.msra.mxu0 0.0
        %972 = vmatprep.subr.mxu0 0.0
        %973 = vmatpush1.msra.mxu0 0.0
        %974 = vmatprep.subr.mxu0 0.0
        %975 = vmatpush1.msra.mxu0 0.0
        %976 = vmatprep.subr.mxu0 0.0
        %977 = vmatpush1.msra.mxu0 0.0
        %978 = vmatprep.subr.mxu0 0.0
        %979 = vmatpush1.msra.mxu0 0.0
        %980 = vmatprep.subr.mxu0 0.0
        %981 = vmatpush1.msra.mxu0 0.0
        %982 = vmatprep.subr.mxu0 0.0
        %983 = vmatpush1.msra.mxu0 0.0
        %984 = vmatprep.subr.mxu0 0.0
        %985 = vmatpush1.msra.mxu0 0.0
        %986 = vmatprep.subr.mxu0 0.0
        %987 = vmatpush1.msra.mxu0 0.0
        %988 = vmatprep.subr.mxu0 0.0
        %989 = vmatpush1.msra.mxu0 0.0
        %990 = vmatprep.subr.mxu0 0.0
        %991 = vmatpush1.msra.mxu0 0.0
        %992 = vmatprep.subr.mxu0 0.0
        %993 = vmatpush1.msra.mxu0 0.0
        %994 = vmatprep.mubr.f32.mxu0 0.0
        %v995 = vand.u32 %v509, 4294901760
        %996 = vmatmul.mubr.f32.gmra.mrb[0].mxu0 %v995
        %v997 = vpop.f32.mrb[0].mxu0
        %v998 = vadd.f32 %v920, %v997
        %v999 = vpop.f32.mrb[0].mxu0
        %1000 = vmatprep.mubr.f32.mxu0 0.0
        %v1001 = vand.u32 %v512, 4294901760
        %1002 = vmatmul.mubr.f32.gmra.mrb[0].mxu0 %v1001
        %v1003 = vpop.f32.mrb[0].mxu0
        %v1004 = vadd.f32 %v926, %v1003
        %v1005 = vpop.f32.mrb[0].mxu0
        %1006 = vdwg.mxu0
        %v1007 = vld [vmem:[%s5] sm:$0x7]
        %vm1008 = vcmask 130048
        %v1009 = vsel %vm1008, %v495, inf
        %1010 = vmin.xlane.f32.xlu0 %v1009
        %v1011 = vpop.xlane.xlu0 %1010
        %v1012 = vsel %vm1008, %v496, inf
        %1013 = vmin.xlane.f32.xlu0 %v1012
        %v1014 = vpop.xlane.xlu0 %1013
        %vm1015 = vcmp.eq.f32.partialorder %v495, %v1011
        %vm1016 = vcmp.eq.f32.partialorder %v496, %v1014
        %v1017 = vsel %vm1015, %v498, 16
        %v1018 = vsel %vm1016, %v498, 16
        %v1019 = vsel %vm1008, %v1017, 2147483647
        %v1020 = vand.u32 %v1019, 65535
        %v1021 = vshra.s32 %v1019, 16
        %v1022 = vcvt.s32.f32 %v1020
        %v1023 = vcvt.s32.f32 %v1021
        %1024 = vmin.xlane.f32.xlu0 %v1023
        %v1025 = vpop.xlane.xlu0 %1024
        %vm1026 = vcmp.eq.f32.partialorder %v1023, %v1025
        %v1027 = vsel %vm1026, %v1022, inf
        %1028 = vmin.xlane.f32.xlu0 %v1027
        %v1029 = vpop.xlane.xlu0 %1028
        %v1030 = vcvt.f32.s32 %v1029
        %v1031 = vcvt.f32.s32 %v1025
        %v1032 = vshll.u32 %v1031, 16
        %v1033 = vadd.s32 %v1032, %v1030
        %v1034 = vsel %vm1008, %v1018, 2147483647
        %v1035 = vand.u32 %v1034, 65535
        %v1036 = vshra.s32 %v1034, 16
        %v1037 = vcvt.s32.f32 %v1035
        %v1038 = vcvt.s32.f32 %v1036
        %1039 = vmin.xlane.f32.xlu0 %v1038
        %v1040 = vpop.xlane.xlu0 %1039
        %vm1041 = vcmp.eq.f32.partialorder %v1038, %v1040
        %v1042 = vsel %vm1041, %v1037, inf
        %1043 = vmin.xlane.f32.xlu0 %v1042
        %v1044 = vpop.xlane.xlu0 %1043
        %v1045 = vcvt.f32.s32 %v1044
        %v1046 = vcvt.f32.s32 %v1040
        %v1047 = vshll.u32 %v1046, 16
        %v1048 = vadd.s32 %v1047, %v1045
        %vm1049 = vcmp.eq.s32.totalorder %v498, %v1033
        %vm1050 = vcmp.eq.s32.totalorder %v498, %v1048
        %v1051 = vsel %vm1049, 1, 0
        %v1052 = vsel %vm1050, 1, 0
        %v1053 = vcvt.s32.f32 %v1051
        %v1054 = vcvt.s32.f32 %v1052
        %v1056 = vsel %vm1008, %v1053, 0
        %v1059 = vsel %vm1008, %v1054, 0
        %1061 = vmatprep.subr.mxu0 0.0
        %v1062 = vand.u32 %v439, 4294901760
        %1063 = vmatpush1.msra.mxu0 %v1062
        %1064 = vmatprep.subr.mxu0 0.0
        %v1065 = vand.u32 %v440, 4294901760
        %1066 = vmatpush1.msra.mxu0 %v1065
        %1067 = vmatprep.subr.mxu0 0.0
        %1068 = vmatpush1.msra.mxu0 0.0
        %1069 = vmatprep.subr.mxu0 0.0
        %1070 = vmatpush1.msra.mxu0 0.0
        %1071 = vmatprep.subr.mxu0 0.0
        %1072 = vmatpush1.msra.mxu0 0.0
        %1073 = vmatprep.subr.mxu0 0.0
        %1074 = vmatpush1.msra.mxu0 0.0
        %1075 = vmatprep.subr.mxu0 0.0
        %1076 = vmatpush1.msra.mxu0 0.0
        %1077 = vmatprep.subr.mxu0 0.0
        %1078 = vmatpush1.msra.mxu0 0.0
        %1079 = vmatprep.subr.mxu0 0.0
        %1080 = vmatpush1.msra.mxu0 0.0
        %1081 = vmatprep.subr.mxu0 0.0
        %1082 = vmatpush1.msra.mxu0 0.0
        %1083 = vmatprep.subr.mxu0 0.0
        %1084 = vmatpush1.msra.mxu0 0.0
        %1085 = vmatprep.subr.mxu0 0.0
        %1086 = vmatpush1.msra.mxu0 0.0
        %1087 = vmatprep.subr.mxu0 0.0
        %1088 = vmatpush1.msra.mxu0 0.0
        %1089 = vmatprep.subr.mxu0 0.0
        %1090 = vmatpush1.msra.mxu0 0.0
        %1091 = vmatprep.subr.mxu0 0.0
        %1092 = vmatpush1.msra.mxu0 0.0
        %1093 = vmatprep.subr.mxu0 0.0
        %1094 = vmatpush1.msra.mxu0 0.0
        %1095 = vmatprep.subr.mxu0 0.0
        %1096 = vmatpush1.msra.mxu0 0.0
        %1097 = vmatprep.subr.mxu0 0.0
        %1098 = vmatpush1.msra.mxu0 0.0
        %1099 = vmatprep.subr.mxu0 0.0
        %1100 = vmatpush1.msra.mxu0 0.0
        %1101 = vmatprep.subr.mxu0 0.0
        %1102 = vmatpush1.msra.mxu0 0.0
        %1103 = vmatprep.subr.mxu0 0.0
        %1104 = vmatpush1.msra.mxu0 0.0
        %1105 = vmatprep.subr.mxu0 0.0
        %1106 = vmatpush1.msra.mxu0 0.0
        %1107 = vmatprep.subr.mxu0 0.0
        %1108 = vmatpush1.msra.mxu0 0.0
        %1109 = vmatprep.subr.mxu0 0.0
        %1110 = vmatpush1.msra.mxu0 0.0
        %1111 = vmatprep.subr.mxu0 0.0
        %1112 = vmatpush1.msra.mxu0 0.0
        %1113 = vmatprep.subr.mxu0 0.0
        %1114 = vmatpush1.msra.mxu0 0.0
        %1115 = vmatprep.subr.mxu0 0.0
        %1116 = vmatpush1.msra.mxu0 0.0
        %1117 = vmatprep.subr.mxu0 0.0
        %1118 = vmatpush1.msra.mxu0 0.0
        %1119 = vmatprep.subr.mxu0 0.0
        %1120 = vmatpush1.msra.mxu0 0.0
        %1121 = vmatprep.subr.mxu0 0.0
        %1122 = vmatpush1.msra.mxu0 0.0
        %1123 = vmatprep.subr.mxu0 0.0
        %1124 = vmatpush1.msra.mxu0 0.0
        %1125 = vmatprep.subr.mxu0 0.0
        %1126 = vmatpush1.msra.mxu0 0.0
        %1127 = vmatprep.mubr.f32.mxu0 0.0
        %v1128 = vand.u32 %v1056, 4294901760
        %v1129 = vsub.f32 %v1056, %v1128
        %v1130 = vand.u32 %v1129, 4294901760
        %v1131 = vsub.f32 %v1129, %v1130
        %v1132 = vand.u32 %v1131, 4294901760
        %1133 = vmatmul.mubr.f32.gmra.mrb[0].mxu0 %v1132
        %v1134 = vpop.f32.mrb[0].mxu0
        %v1135 = vadd.f32 0.0, %v1134
        %v1136 = vpop.f32.mrb[0].mxu0
        %1137 = vmatprep.mubr.f32.mxu0 0.0
        %v1138 = vand.u32 %v1059, 4294901760
        %v1139 = vsub.f32 %v1059, %v1138
        %v1140 = vand.u32 %v1139, 4294901760
        %v1141 = vsub.f32 %v1139, %v1140
        %v1142 = vand.u32 %v1141, 4294901760
        %1143 = vmatmul.mubr.f32.gmra.mrb[0].mxu0 %v1142
        %v1144 = vpop.f32.mrb[0].mxu0
        %v1145 = vadd.f32 0.0, %v1144
        %v1146 = vpop.f32.mrb[0].mxu0
        %1147 = vdwg.mxu0
        %1148 = vmatprep.subr.mxu0 0.0
        %v1149 = vand.u32 %v439, 4294901760
        %v1150 = vsub.f32 %v439, %v1149
        %v1151 = vand.u32 %v1150, 4294901760
        %v1152 = vsub.f32 %v1150, %v1151
        %v1153 = vand.u32 %v1152, 4294901760
        %1154 = vmatpush1.msra.mxu0 %v1153
        %1155 = vmatprep.subr.mxu0 0.0
        %v1156 = vand.u32 %v440, 4294901760
        %v1157 = vsub.f32 %v440, %v1156
        %v1158 = vand.u32 %v1157, 4294901760
        %v1159 = vsub.f32 %v1157, %v1158
        %v1160 = vand.u32 %v1159, 4294901760
        %1161 = vmatpush1.msra.mxu0 %v1160
        %1162 = vmatprep.subr.mxu0 0.0
        %1163 = vmatpush1.msra.mxu0 0.0
        %1164 = vmatprep.subr.mxu0 0.0
        %1165 = vmatpush1.msra.mxu0 0.0
        %1166 = vmatprep.subr.mxu0 0.0
        %1167 = vmatpush1.msra.mxu0 0.0
        %1168 = vmatprep.subr.mxu0 0.0
        %1169 = vmatpush1.msra.mxu0 0.0
        %1170 = vmatprep.subr.mxu0 0.0
        %1171 = vmatpush1.msra.mxu0 0.0
        %1172 = vmatprep.subr.mxu0 0.0
        %1173 = vmatpush1.msra.mxu0 0.0
        %1174 = vmatprep.subr.mxu0 0.0
        %1175 = vmatpush1.msra.mxu0 0.0
        %1176 = vmatprep.subr.mxu0 0.0
        %1177 = vmatpush1.msra.mxu0 0.0
        %1178 = vmatprep.subr.mxu0 0.0
        %1179 = vmatpush1.msra.mxu0 0.0
        %1180 = vmatprep.subr.mxu0 0.0
        %1181 = vmatpush1.msra.mxu0 0.0
        %1182 = vmatprep.subr.mxu0 0.0
        %1183 = vmatpush1.msra.mxu0 0.0
        %1184 = vmatprep.subr.mxu0 0.0
        %1185 = vmatpush1.msra.mxu0 0.0
        %1186 = vmatprep.subr.mxu0 0.0
        %1187 = vmatpush1.msra.mxu0 0.0
        %1188 = vmatprep.subr.mxu0 0.0
        %1189 = vmatpush1.msra.mxu0 0.0
        %1190 = vmatprep.subr.mxu0 0.0
        %1191 = vmatpush1.msra.mxu0 0.0
        %1192 = vmatprep.subr.mxu0 0.0
        %1193 = vmatpush1.msra.mxu0 0.0
        %1194 = vmatprep.subr.mxu0 0.0
        %1195 = vmatpush1.msra.mxu0 0.0
        %1196 = vmatprep.subr.mxu0 0.0
        %1197 = vmatpush1.msra.mxu0 0.0
        %1198 = vmatprep.subr.mxu0 0.0
        %1199 = vmatpush1.msra.mxu0 0.0
        %1200 = vmatprep.subr.mxu0 0.0
        %1201 = vmatpush1.msra.mxu0 0.0
        %1202 = vmatprep.subr.mxu0 0.0
        %1203 = vmatpush1.msra.mxu0 0.0
        %1204 = vmatprep.subr.mxu0 0.0
        %1205 = vmatpush1.msra.mxu0 0.0
        %1206 = vmatprep.subr.mxu0 0.0
        %1207 = vmatpush1.msra.mxu0 0.0
        %1208 = vmatprep.subr.mxu0 0.0
        %1209 = vmatpush1.msra.mxu0 0.0
        %1210 = vmatprep.subr.mxu0 0.0
        %1211 = vmatpush1.msra.mxu0 0.0
        %1212 = vmatprep.subr.mxu0 0.0
        %1213 = vmatpush1.msra.mxu0 0.0
        %1214 = vmatprep.subr.mxu0 0.0
        %1215 = vmatpush1.msra.mxu0 0.0
        %1216 = vmatprep.subr.mxu0 0.0
        %1217 = vmatpush1.msra.mxu0 0.0
        %1218 = vmatprep.subr.mxu0 0.0
        %1219 = vmatpush1.msra.mxu0 0.0
        %1220 = vmatprep.subr.mxu0 0.0
        %1221 = vmatpush1.msra.mxu0 0.0
        %1222 = vmatprep.mubr.f32.mxu0 0.0
        %v1223 = vand.u32 %v1056, 4294901760
        %1224 = vmatmul.mubr.f32.gmra.mrb[0].mxu0 %v1223
        %v1225 = vpop.f32.mrb[0].mxu0
        %v1226 = vadd.f32 %v1135, %v1225
        %v1227 = vpop.f32.mrb[0].mxu0
        %1228 = vmatprep.mubr.f32.mxu0 0.0
        %v1229 = vand.u32 %v1059, 4294901760
        %1230 = vmatmul.mubr.f32.gmra.mrb[0].mxu0 %v1229
        %v1231 = vpop.f32.mrb[0].mxu0
        %v1232 = vadd.f32 %v1145, %v1231
        %v1233 = vpop.f32.mrb[0].mxu0
        %1234 = vdwg.mxu0
        %1235 = vmatprep.subr.mxu0 0.0
        %v1236 = vand.u32 %v439, 4294901760
        %v1237 = vsub.f32 %v439, %v1236
        %1238 = vmatpush1.msra.mxu0 %v1237
        %1239 = vmatprep.subr.mxu0 0.0
        %v1240 = vand.u32 %v440, 4294901760
        %v1241 = vsub.f32 %v440, %v1240
        %1242 = vmatpush1.msra.mxu0 %v1241
        %1243 = vmatprep.subr.mxu0 0.0
        %1244 = vmatpush1.msra.mxu0 0.0
        %1245 = vmatprep.subr.mxu0 0.0
        %1246 = vmatpush1.msra.mxu0 0.0
        %1247 = vmatprep.subr.mxu0 0.0
        %1248 = vmatpush1.msra.mxu0 0.0
        %1249 = vmatprep.subr.mxu0 0.0
        %1250 = vmatpush1.msra.mxu0 0.0
        %1251 = vmatprep.subr.mxu0 0.0
        %1252 = vmatpush1.msra.mxu0 0.0
        %1253 = vmatprep.subr.mxu0 0.0
        %1254 = vmatpush1.msra.mxu0 0.0
        %1255 = vmatprep.subr.mxu0 0.0
        %1256 = vmatpush1.msra.mxu0 0.0
        %1257 = vmatprep.subr.mxu0 0.0
        %1258 = vmatpush1.msra.mxu0 0.0
        %1259 = vmatprep.subr.mxu0 0.0
        %1260 = vmatpush1.msra.mxu0 0.0
        %1261 = vmatprep.subr.mxu0 0.0
        %1262 = vmatpush1.msra.mxu0 0.0
        %1263 = vmatprep.subr.mxu0 0.0
        %1264 = vmatpush1.msra.mxu0 0.0
        %1265 = vmatprep.subr.mxu0 0.0
        %1266 = vmatpush1.msra.mxu0 0.0
        %1267 = vmatprep.subr.mxu0 0.0
        %1268 = vmatpush1.msra.mxu0 0.0
        %1269 = vmatprep.subr.mxu0 0.0
        %1270 = vmatpush1.msra.mxu0 0.0
        %1271 = vmatprep.subr.mxu0 0.0
        %1272 = vmatpush1.msra.mxu0 0.0
        %1273 = vmatprep.subr.mxu0 0.0
        %1274 = vmatpush1.msra.mxu0 0.0
        %1275 = vmatprep.subr.mxu0 0.0
        %1276 = vmatpush1.msra.mxu0 0.0
        %1277 = vmatprep.subr.mxu0 0.0
        %1278 = vmatpush1.msra.mxu0 0.0
        %1279 = vmatprep.subr.mxu0 0.0
        %1280 = vmatpush1.msra.mxu0 0.0
        %1281 = vmatprep.subr.mxu0 0.0
        %1282 = vmatpush1.msra.mxu0 0.0
        %1283 = vmatprep.subr.mxu0 0.0
        %1284 = vmatpush1.msra.mxu0 0.0
        %1285 = vmatprep.subr.mxu0 0.0
        %1286 = vmatpush1.msra.mxu0 0.0
        %1287 = vmatprep.subr.mxu0 0.0
        %1288 = vmatpush1.msra.mxu0 0.0
        %1289 = vmatprep.subr.mxu0 0.0
        %1290 = vmatpush1.msra.mxu0 0.0
        %1291 = vmatprep.subr.mxu0 0.0
        %1292 = vmatpush1.msra.mxu0 0.0
        %1293 = vmatprep.subr.mxu0 0.0
        %1294 = vmatpush1.msra.mxu0 0.0
        %1295 = vmatprep.subr.mxu0 0.0
        %1296 = vmatpush1.msra.mxu0 0.0
        %1297 = vmatprep.subr.mxu0 0.0
        %1298 = vmatpush1.msra.mxu0 0.0
        %1299 = vmatprep.subr.mxu0 0.0
        %1300 = vmatpush1.msra.mxu0 0.0
        %1301 = vmatprep.subr.mxu0 0.0
        %1302 = vmatpush1.msra.mxu0 0.0
        %1303 = vmatprep.mubr.f32.mxu0 0.0
        %v1304 = vand.u32 %v1056, 4294901760
        %v1305 = vsub.f32 %v1056, %v1304
        %1306 = vmatmul.mubr.f32.gmra.mrb[0].mxu0 %v1305
        %v1307 = vpop.f32.mrb[0].mxu0
        %v1308 = vadd.f32 %v1226, %v1307
        %v1309 = vpop.f32.mrb[0].mxu0
        %1310 = vmatprep.mubr.f32.mxu0 0.0
        %v1311 = vand.u32 %v1059, 4294901760
        %v1312 = vsub.f32 %v1059, %v1311
        %1313 = vmatmul.mubr.f32.gmra.mrb[0].mxu0 %v1312
        %v1314 = vpop.f32.mrb[0].mxu0
        %v1315 = vadd.f32 %v1232, %v1314
        %v1316 = vpop.f32.mrb[0].mxu0
        %1317 = vdwg.mxu0
        %1318 = vmatprep.subr.mxu0 0.0
        %v1319 = vand.u32 %v439, 4294901760
        %1320 = vmatpush1.msra.mxu0 %v1319
        %1321 = vmatprep.subr.mxu0 0.0
        %v1322 = vand.u32 %v440, 4294901760
        %1323 = vmatpush1.msra.mxu0 %v1322
        %1324 = vmatprep.subr.mxu0 0.0
        %1325 = vmatpush1.msra.mxu0 0.0
        %1326 = vmatprep.subr.mxu0 0.0
        %1327 = vmatpush1.msra.mxu0 0.0
        %1328 = vmatprep.subr.mxu0 0.0
        %1329 = vmatpush1.msra.mxu0 0.0
        %1330 = vmatprep.subr.mxu0 0.0
        %1331 = vmatpush1.msra.mxu0 0.0
        %1332 = vmatprep.subr.mxu0 0.0
        %1333 = vmatpush1.msra.mxu0 0.0
        %1334 = vmatprep.subr.mxu0 0.0
        %1335 = vmatpush1.msra.mxu0 0.0
        %1336 = vmatprep.subr.mxu0 0.0
        %1337 = vmatpush1.msra.mxu0 0.0
        %1338 = vmatprep.subr.mxu0 0.0
        %1339 = vmatpush1.msra.mxu0 0.0
        %1340 = vmatprep.subr.mxu0 0.0
        %1341 = vmatpush1.msra.mxu0 0.0
        %1342 = vmatprep.subr.mxu0 0.0
        %1343 = vmatpush1.msra.mxu0 0.0
        %1344 = vmatprep.subr.mxu0 0.0
        %1345 = vmatpush1.msra.mxu0 0.0
        %1346 = vmatprep.subr.mxu0 0.0
        %1347 = vmatpush1.msra.mxu0 0.0
        %1348 = vmatprep.subr.mxu0 0.0
        %1349 = vmatpush1.msra.mxu0 0.0
        %1350 = vmatprep.subr.mxu0 0.0
        %1351 = vmatpush1.msra.mxu0 0.0
        %1352 = vmatprep.subr.mxu0 0.0
        %1353 = vmatpush1.msra.mxu0 0.0
        %1354 = vmatprep.subr.mxu0 0.0
        %1355 = vmatpush1.msra.mxu0 0.0
        %1356 = vmatprep.subr.mxu0 0.0
        %1357 = vmatpush1.msra.mxu0 0.0
        %1358 = vmatprep.subr.mxu0 0.0
        %1359 = vmatpush1.msra.mxu0 0.0
        %1360 = vmatprep.subr.mxu0 0.0
        %1361 = vmatpush1.msra.mxu0 0.0
        %1362 = vmatprep.subr.mxu0 0.0
        %1363 = vmatpush1.msra.mxu0 0.0
        %1364 = vmatprep.subr.mxu0 0.0
        %1365 = vmatpush1.msra.mxu0 0.0
        %1366 = vmatprep.subr.mxu0 0.0
        %1367 = vmatpush1.msra.mxu0 0.0
        %1368 = vmatprep.subr.mxu0 0.0
        %1369 = vmatpush1.msra.mxu0 0.0
        %1370 = vmatprep.subr.mxu0 0.0
        %1371 = vmatpush1.msra.mxu0 0.0
        %1372 = vmatprep.subr.mxu0 0.0
        %1373 = vmatpush1.msra.mxu0 0.0
        %1374 = vmatprep.subr.mxu0 0.0
        %1375 = vmatpush1.msra.mxu0 0.0
        %1376 = vmatprep.subr.mxu0 0.0
        %1377 = vmatpush1.msra.mxu0 0.0
        %1378 = vmatprep.subr.mxu0 0.0
        %1379 = vmatpush1.msra.mxu0 0.0
        %1380 = vmatprep.subr.mxu0 0.0
        %1381 = vmatpush1.msra.mxu0 0.0
        %1382 = vmatprep.subr.mxu0 0.0
        %1383 = vmatpush1.msra.mxu0 0.0
        %1384 = vmatprep.mubr.f32.mxu0 0.0
        %v1385 = vand.u32 %v1056, 4294901760
        %v1386 = vsub.f32 %v1056, %v1385
        %v1387 = vand.u32 %v1386, 4294901760
        %1388 = vmatmul.mubr.f32.gmra.mrb[0].mxu0 %v1387
        %v1389 = vpop.f32.mrb[0].mxu0
        %v1390 = vadd.f32 %v1308, %v1389
        %v1391 = vpop.f32.mrb[0].mxu0
        %1392 = vmatprep.mubr.f32.mxu0 0.0
        %v1393 = vand.u32 %v1059, 4294901760
        %v1394 = vsub.f32 %v1059, %v1393
        %v1395 = vand.u32 %v1394, 4294901760
        %1396 = vmatmul.mubr.f32.gmra.mrb[0].mxu0 %v1395
        %v1397 = vpop.f32.mrb[0].mxu0
        %v1398 = vadd.f32 %v1315, %v1397
        %v1399 = vpop.f32.mrb[0].mxu0
        %1400 = vdwg.mxu0
        %1401 = vmatprep.subr.mxu0 0.0
        %v1402 = vand.u32 %v439, 4294901760
        %v1403 = vsub.f32 %v439, %v1402
        %v1404 = vand.u32 %v1403, 4294901760
        %1405 = vmatpush1.msra.mxu0 %v1404
        %1406 = vmatprep.subr.mxu0 0.0
        %v1407 = vand.u32 %v440, 4294901760
        %v1408 = vsub.f32 %v440, %v1407
        %v1409 = vand.u32 %v1408, 4294901760
        %1410 = vmatpush1.msra.mxu0 %v1409
        %1411 = vmatprep.subr.mxu0 0.0
        %1412 = vmatpush1.msra.mxu0 0.0
        %1413 = vmatprep.subr.mxu0 0.0
        %1414 = vmatpush1.msra.mxu0 0.0
        %1415 = vmatprep.subr.mxu0 0.0
        %1416 = vmatpush1.msra.mxu0 0.0
        %1417 = vmatprep.subr.mxu0 0.0
        %1418 = vmatpush1.msra.mxu0 0.0
        %1419 = vmatprep.subr.mxu0 0.0
        %1420 = vmatpush1.msra.mxu0 0.0
        %1421 = vmatprep.subr.mxu0 0.0
        %1422 = vmatpush1.msra.mxu0 0.0
        %1423 = vmatprep.subr.mxu0 0.0
        %1424 = vmatpush1.msra.mxu0 0.0
        %1425 = vmatprep.subr.mxu0 0.0
        %1426 = vmatpush1.msra.mxu0 0.0
        %1427 = vmatprep.subr.mxu0 0.0
        %1428 = vmatpush1.msra.mxu0 0.0
        %1429 = vmatprep.subr.mxu0 0.0
        %1430 = vmatpush1.msra.mxu0 0.0
        %1431 = vmatprep.subr.mxu0 0.0
        %1432 = vmatpush1.msra.mxu0 0.0
        %1433 = vmatprep.subr.mxu0 0.0
        %1434 = vmatpush1.msra.mxu0 0.0
        %1435 = vmatprep.subr.mxu0 0.0
        %1436 = vmatpush1.msra.mxu0 0.0
        %1437 = vmatprep.subr.mxu0 0.0
        %1438 = vmatpush1.msra.mxu0 0.0
        %1439 = vmatprep.subr.mxu0 0.0
        %1440 = vmatpush1.msra.mxu0 0.0
        %1441 = vmatprep.subr.mxu0 0.0
        %1442 = vmatpush1.msra.mxu0 0.0
        %1443 = vmatprep.subr.mxu0 0.0
        %1444 = vmatpush1.msra.mxu0 0.0
        %1445 = vmatprep.subr.mxu0 0.0
        %1446 = vmatpush1.msra.mxu0 0.0
        %1447 = vmatprep.subr.mxu0 0.0
        %1448 = vmatpush1.msra.mxu0 0.0
        %1449 = vmatprep.subr.mxu0 0.0
        %1450 = vmatpush1.msra.mxu0 0.0
        %1451 = vmatprep.subr.mxu0 0.0
        %1452 = vmatpush1.msra.mxu0 0.0
        %1453 = vmatprep.subr.mxu0 0.0
        %1454 = vmatpush1.msra.mxu0 0.0
        %1455 = vmatprep.subr.mxu0 0.0
        %1456 = vmatpush1.msra.mxu0 0.0
        %1457 = vmatprep.subr.mxu0 0.0
        %1458 = vmatpush1.msra.mxu0 0.0
        %1459 = vmatprep.subr.mxu0 0.0
        %1460 = vmatpush1.msra.mxu0 0.0
        %1461 = vmatprep.subr.mxu0 0.0
        %1462 = vmatpush1.msra.mxu0 0.0
        %1463 = vmatprep.subr.mxu0 0.0
        %1464 = vmatpush1.msra.mxu0 0.0
        %1465 = vmatprep.subr.mxu0 0.0
        %1466 = vmatpush1.msra.mxu0 0.0
        %1467 = vmatprep.subr.mxu0 0.0
        %1468 = vmatpush1.msra.mxu0 0.0
        %1469 = vmatprep.subr.mxu0 0.0
        %1470 = vmatpush1.msra.mxu0 0.0
        %1471 = vmatprep.mubr.f32.mxu0 0.0
        %v1472 = vand.u32 %v1056, 4294901760
        %1473 = vmatmul.mubr.f32.gmra.mrb[0].mxu0 %v1472
        %v1474 = vpop.f32.mrb[0].mxu0
        %v1475 = vadd.f32 %v1390, %v1474
        %v1476 = vpop.f32.mrb[0].mxu0
        %1477 = vmatprep.mubr.f32.mxu0 0.0
        %v1478 = vand.u32 %v1059, 4294901760
        %1479 = vmatmul.mubr.f32.gmra.mrb[0].mxu0 %v1478
        %v1480 = vpop.f32.mrb[0].mxu0
        %v1481 = vadd.f32 %v1398, %v1480
        %v1482 = vpop.f32.mrb[0].mxu0
        %1483 = vdwg.mxu0
        %1484 = vmatprep.subr.mxu0 0.0
        %v1485 = vand.u32 %v439, 4294901760
        %1486 = vmatpush1.msra.mxu0 %v1485
        %1487 = vmatprep.subr.mxu0 0.0
        %v1488 = vand.u32 %v440, 4294901760
        %1489 = vmatpush1.msra.mxu0 %v1488
        %1490 = vmatprep.subr.mxu0 0.0
        %1491 = vmatpush1.msra.mxu0 0.0
        %1492 = vmatprep.subr.mxu0 0.0
        %1493 = vmatpush1.msra.mxu0 0.0
        %1494 = vmatprep.subr.mxu0 0.0
        %1495 = vmatpush1.msra.mxu0 0.0
        %1496 = vmatprep.subr.mxu0 0.0
        %1497 = vmatpush1.msra.mxu0 0.0
        %1498 = vmatprep.subr.mxu0 0.0
        %1499 = vmatpush1.msra.mxu0 0.0
        %1500 = vmatprep.subr.mxu0 0.0
        %1501 = vmatpush1.msra.mxu0 0.0
        %1502 = vmatprep.subr.mxu0 0.0
        %1503 = vmatpush1.msra.mxu0 0.0
        %1504 = vmatprep.subr.mxu0 0.0
        %1505 = vmatpush1.msra.mxu0 0.0
        %1506 = vmatprep.subr.mxu0 0.0
        %1507 = vmatpush1.msra.mxu0 0.0
        %1508 = vmatprep.subr.mxu0 0.0
        %1509 = vmatpush1.msra.mxu0 0.0
        %1510 = vmatprep.subr.mxu0 0.0
        %1511 = vmatpush1.msra.mxu0 0.0
        %1512 = vmatprep.subr.mxu0 0.0
        %1513 = vmatpush1.msra.mxu0 0.0
        %1514 = vmatprep.subr.mxu0 0.0
        %1515 = vmatpush1.msra.mxu0 0.0
        %1516 = vmatprep.subr.mxu0 0.0
        %1517 = vmatpush1.msra.mxu0 0.0
        %1518 = vmatprep.subr.mxu0 0.0
        %1519 = vmatpush1.msra.mxu0 0.0
        %1520 = vmatprep.subr.mxu0 0.0
        %1521 = vmatpush1.msra.mxu0 0.0
        %1522 = vmatprep.subr.mxu0 0.0
        %1523 = vmatpush1.msra.mxu0 0.0
        %1524 = vmatprep.subr.mxu0 0.0
        %1525 = vmatpush1.msra.mxu0 0.0
        %1526 = vmatprep.subr.mxu0 0.0
        %1527 = vmatpush1.msra.mxu0 0.0
        %1528 = vmatprep.subr.mxu0 0.0
        %1529 = vmatpush1.msra.mxu0 0.0
        %1530 = vmatprep.subr.mxu0 0.0
        %1531 = vmatpush1.msra.mxu0 0.0
        %1532 = vmatprep.subr.mxu0 0.0
        %1533 = vmatpush1.msra.mxu0 0.0
        %1534 = vmatprep.subr.mxu0 0.0
        %1535 = vmatpush1.msra.mxu0 0.0
        %1536 = vmatprep.subr.mxu0 0.0
        %1537 = vmatpush1.msra.mxu0 0.0
        %1538 = vmatprep.subr.mxu0 0.0
        %1539 = vmatpush1.msra.mxu0 0.0
        %1540 = vmatprep.subr.mxu0 0.0
        %1541 = vmatpush1.msra.mxu0 0.0
        %1542 = vmatprep.subr.mxu0 0.0
        %1543 = vmatpush1.msra.mxu0 0.0
        %1544 = vmatprep.subr.mxu0 0.0
        %1545 = vmatpush1.msra.mxu0 0.0
        %1546 = vmatprep.subr.mxu0 0.0
        %1547 = vmatpush1.msra.mxu0 0.0
        %1548 = vmatprep.subr.mxu0 0.0
        %1549 = vmatpush1.msra.mxu0 0.0
        %1550 = vmatprep.mubr.f32.mxu0 0.0
        %v1551 = vand.u32 %v1056, 4294901760
        %1552 = vmatmul.mubr.f32.gmra.mrb[0].mxu0 %v1551
        %v1553 = vpop.f32.mrb[0].mxu0
        %v1554 = vadd.f32 %v1475, %v1553
        %v1555 = vpop.f32.mrb[0].mxu0
        %1556 = vmatprep.mubr.f32.mxu0 0.0
        %v1557 = vand.u32 %v1059, 4294901760
        %1558 = vmatmul.mubr.f32.gmra.mrb[0].mxu0 %v1557
        %v1559 = vpop.f32.mrb[0].mxu0
        %v1560 = vadd.f32 %v1481, %v1559
        %v1561 = vpop.f32.mrb[0].mxu0
        %1562 = vdwg.mxu0
        %1563 = vrot.lane.b32.xlu0 %v434, 16
        %v1564 = vpop.permute.xlu0 %1563
        %1565 = vrot.lane.b32.xlu0 %v435, 16
        %v1566 = vpop.permute.xlu0 %1565
        %v1569 = vsub.f32 %v1554, %v1564
        %v1570 = vsub.f32 %v1560, %v1566
        %v1571 = vadd.f32 %v998, %v1554
        %v1572 = vadd.f32 %v1004, %v1560
        %1574 = vset.pattern.permute.xlu0 16
        %1575 = vperm.xlu0 %1574, %v1569
        %v1576 = vpop.permute.xlu0 %1575
        %1579 = vset.pattern.permute.xlu0 16
        %1580 = vperm.xlu0 %1579, %v1570
        %v1581 = vpop.permute.xlu0 %1580
        %v1583 = vlaneseq
        %v1584 = vshrl.u32 %v1583, 7
        %v1585 = vsub.s32 0, %v1584
        %v1586 = vrot.slane %v1007, %v1585
        %v1587 = vmul.f32 %v1576, %v1586
        %v1588 = vmul.f32 %v1581, %v1586
        %v1589 = vadd.f32 %v1571, %v1587
        %v1590 = vadd.f32 %v1572, %v1588
        %1591 = vset.pattern.permute.xlu0 17
        %1592 = vperm.xlu0 %1591, %v1569
        %v1593 = vpop.permute.xlu0 %1592
        %1595 = vset.pattern.permute.xlu0 17
        %1596 = vperm.xlu0 %1595, %v1570
        %v1597 = vpop.permute.xlu0 %1596
        %v1599 = vlaneseq
        %v1600 = vshrl.u32 %v1599, 7
        %v1601 = vsub.s32 1, %v1600
        %v1602 = vrot.slane %v1007, %v1601
        %v1603 = vmul.f32 %v1593, %v1602
        %v1604 = vmul.f32 %v1597, %v1602
        %v1605 = vadd.f32 %v1589, %v1603
        %v1606 = vadd.f32 %v1590, %v1604
        %1607 = vset.pattern.permute.xlu0 18
        %1608 = vperm.xlu0 %1607, %v1569
        %v1609 = vpop.permute.xlu0 %1608
        %1611 = vset.pattern.permute.xlu0 18
        %1612 = vperm.xlu0 %1611, %v1570
        %v1613 = vpop.permute.xlu0 %1612
        %v1615 = vlaneseq
        %v1616 = vshrl.u32 %v1615, 7
        %v1617 = vsub.s32 2, %v1616
        %v1618 = vrot.slane %v1007, %v1617
        %v1619 = vmul.f32 %v1609, %v1618
        %v1620 = vmul.f32 %v1613, %v1618
        %v1621 = vadd.f32 %v1605, %v1619
        %v1622 = vadd.f32 %v1606, %v1620
        %v1623 = vmul.f32 %v1569, %v1569
        %v1624 = vmul.f32 %v1570, %v1570
        %1627 = vrot.lane.b32.xlu0 %v1623, 112
        %v1628 = vpop.permute.xlu0 %1627
        %1629 = vrot.lane.b32.xlu0 %v1624, 112
        %v1630 = vpop.permute.xlu0 %1629
        %vm1633 = vcmask 23552
        %v1634 = vsel %vm1633, %v1628, 0.0
        %1635 = vadd.xlane.f32.xlu0 %v1634
        %v1636 = vpop.xlane.xlu0 %1635
        %v1637 = vsel %vm1633, %v1630, 0.0
        %1638 = vadd.xlane.f32.xlu0 %v1637
        %v1639 = vpop.xlane.xlu0 %1638
        %v1640 = vmax.f32 %v1636, 1e-20
        %v1641 = vmax.f32 %v1639, 1e-20
        %v1642 = vrsqrt.pop %v1640
        %v1643 = vrsqrt.pop %v1641
        %v1644 = vsel %vm1049, inf, %v495
        %v1645 = vsel %vm1050, inf, %v496
        %v1646 = vsel %vm1008, %v1644, inf
        %1647 = vmin.xlane.f32.xlu0 %v1646
        %v1648 = vpop.xlane.xlu0 %1647
        %v1649 = vsel %vm1008, %v1645, inf
        %1650 = vmin.xlane.f32.xlu0 %v1649
        %v1651 = vpop.xlane.xlu0 %1650
        %vm1652 = vcmp.eq.f32.partialorder %v1644, %v1648
        %vm1653 = vcmp.eq.f32.partialorder %v1645, %v1651
        %v1654 = vsel %vm1652, %v498, 16
        %v1655 = vsel %vm1653, %v498, 16
        %v1656 = vsel %vm1008, %v1654, 2147483647
        %v1657 = vand.u32 %v1656, 65535
        %v1658 = vshra.s32 %v1656, 16
        %v1659 = vcvt.s32.f32 %v1657
        %v1660 = vcvt.s32.f32 %v1658
        %1661 = vmin.xlane.f32.xlu0 %v1660
        %v1662 = vpop.xlane.xlu0 %1661
        %vm1663 = vcmp.eq.f32.partialorder %v1660, %v1662
        %v1664 = vsel %vm1663, %v1659, inf
        %1665 = vmin.xlane.f32.xlu0 %v1664
        %v1666 = vpop.xlane.xlu0 %1665
        %v1667 = vcvt.f32.s32 %v1666
        %v1668 = vcvt.f32.s32 %v1662
        %v1669 = vshll.u32 %v1668, 16
        %v1670 = vadd.s32 %v1669, %v1667
        %v1671 = vsel %vm1008, %v1655, 2147483647
        %v1672 = vand.u32 %v1671, 65535
        %v1673 = vshra.s32 %v1671, 16
        %v1674 = vcvt.s32.f32 %v1672
        %v1675 = vcvt.s32.f32 %v1673
        %1676 = vmin.xlane.f32.xlu0 %v1675
        %v1677 = vpop.xlane.xlu0 %1676
        %vm1678 = vcmp.eq.f32.partialorder %v1675, %v1677
        %v1679 = vsel %vm1678, %v1674, inf
        %1680 = vmin.xlane.f32.xlu0 %v1679
        %v1681 = vpop.xlane.xlu0 %1680
        %v1682 = vcvt.f32.s32 %v1681
        %v1683 = vcvt.f32.s32 %v1677
        %v1684 = vshll.u32 %v1683, 16
        %v1685 = vadd.s32 %v1684, %v1682
        %vm1686 = vcmp.eq.s32.totalorder %v498, %v1670
        %vm1687 = vcmp.eq.s32.totalorder %v498, %v1685
        %v1688 = vsel %vm1686, 1, 0
        %v1689 = vsel %vm1687, 1, 0
        %v1690 = vcvt.s32.f32 %v1688
        %v1691 = vcvt.s32.f32 %v1689
        %v1693 = vsel %vm1008, %v1690, 0
        %v1696 = vsel %vm1008, %v1691, 0
        %1698 = vmatprep.subr.mxu0 0.0
        %v1699 = vand.u32 %v439, 4294901760
        %1700 = vmatpush1.msra.mxu0 %v1699
        %1701 = vmatprep.subr.mxu0 0.0
        %v1702 = vand.u32 %v440, 4294901760
        %1703 = vmatpush1.msra.mxu0 %v1702
        %1704 = vmatprep.subr.mxu0 0.0
        %1705 = vmatpush1.msra.mxu0 0.0
        %1706 = vmatprep.subr.mxu0 0.0
        %1707 = vmatpush1.msra.mxu0 0.0
        %1708 = vmatprep.subr.mxu0 0.0
        %1709 = vmatpush1.msra.mxu0 0.0
        %1710 = vmatprep.subr.mxu0 0.0
        %1711 = vmatpush1.msra.mxu0 0.0
        %1712 = vmatprep.subr.mxu0 0.0
        %1713 = vmatpush1.msra.mxu0 0.0
        %1714 = vmatprep.subr.mxu0 0.0
        %1715 = vmatpush1.msra.mxu0 0.0
        %1716 = vmatprep.subr.mxu0 0.0
        %1717 = vmatpush1.msra.mxu0 0.0
        %1718 = vmatprep.subr.mxu0 0.0
        %1719 = vmatpush1.msra.mxu0 0.0
        %1720 = vmatprep.subr.mxu0 0.0
        %1721 = vmatpush1.msra.mxu0 0.0
        %1722 = vmatprep.subr.mxu0 0.0
        %1723 = vmatpush1.msra.mxu0 0.0
        %1724 = vmatprep.subr.mxu0 0.0
        %1725 = vmatpush1.msra.mxu0 0.0
        %1726 = vmatprep.subr.mxu0 0.0
        %1727 = vmatpush1.msra.mxu0 0.0
        %1728 = vmatprep.subr.mxu0 0.0
        %1729 = vmatpush1.msra.mxu0 0.0
        %1730 = vmatprep.subr.mxu0 0.0
        %1731 = vmatpush1.msra.mxu0 0.0
        %1732 = vmatprep.subr.mxu0 0.0
        %1733 = vmatpush1.msra.mxu0 0.0
        %1734 = vmatprep.subr.mxu0 0.0
        %1735 = vmatpush1.msra.mxu0 0.0
        %1736 = vmatprep.subr.mxu0 0.0
        %1737 = vmatpush1.msra.mxu0 0.0
        %1738 = vmatprep.subr.mxu0 0.0
        %1739 = vmatpush1.msra.mxu0 0.0
        %1740 = vmatprep.subr.mxu0 0.0
        %1741 = vmatpush1.msra.mxu0 0.0
        %1742 = vmatprep.subr.mxu0 0.0
        %1743 = vmatpush1.msra.mxu0 0.0
        %1744 = vmatprep.subr.mxu0 0.0
        %1745 = vmatpush1.msra.mxu0 0.0
        %1746 = vmatprep.subr.mxu0 0.0
        %1747 = vmatpush1.msra.mxu0 0.0
        %1748 = vmatprep.subr.mxu0 0.0
        %1749 = vmatpush1.msra.mxu0 0.0
        %1750 = vmatprep.subr.mxu0 0.0
        %1751 = vmatpush1.msra.mxu0 0.0
        %1752 = vmatprep.subr.mxu0 0.0
        %1753 = vmatpush1.msra.mxu0 0.0
        %1754 = vmatprep.subr.mxu0 0.0
        %1755 = vmatpush1.msra.mxu0 0.0
        %1756 = vmatprep.subr.mxu0 0.0
        %1757 = vmatpush1.msra.mxu0 0.0
        %1758 = vmatprep.subr.mxu0 0.0
        %1759 = vmatpush1.msra.mxu0 0.0
        %1760 = vmatprep.subr.mxu0 0.0
        %1761 = vmatpush1.msra.mxu0 0.0
        %1762 = vmatprep.subr.mxu0 0.0
        %1763 = vmatpush1.msra.mxu0 0.0
        %1764 = vmatprep.mubr.f32.mxu0 0.0
        %v1765 = vand.u32 %v1693, 4294901760
        %v1766 = vsub.f32 %v1693, %v1765
        %v1767 = vand.u32 %v1766, 4294901760
        %v1768 = vsub.f32 %v1766, %v1767
        %v1769 = vand.u32 %v1768, 4294901760
        %1770 = vmatmul.mubr.f32.gmra.mrb[0].mxu0 %v1769
        %v1771 = vpop.f32.mrb[0].mxu0
        %v1772 = vadd.f32 0.0, %v1771
        %v1773 = vpop.f32.mrb[0].mxu0
        %1774 = vmatprep.mubr.f32.mxu0 0.0
        %v1775 = vand.u32 %v1696, 4294901760
        %v1776 = vsub.f32 %v1696, %v1775
        %v1777 = vand.u32 %v1776, 4294901760
        %v1778 = vsub.f32 %v1776, %v1777
        %v1779 = vand.u32 %v1778, 4294901760
        %1780 = vmatmul.mubr.f32.gmra.mrb[0].mxu0 %v1779
        %v1781 = vpop.f32.mrb[0].mxu0
        %v1782 = vadd.f32 0.0, %v1781
        %v1783 = vpop.f32.mrb[0].mxu0
        %1784 = vdwg.mxu0
        %1785 = vmatprep.subr.mxu0 0.0
        %v1786 = vand.u32 %v439, 4294901760
        %v1787 = vsub.f32 %v439, %v1786
        %v1788 = vand.u32 %v1787, 4294901760
        %v1789 = vsub.f32 %v1787, %v1788
        %v1790 = vand.u32 %v1789, 4294901760
        %1791 = vmatpush1.msra.mxu0 %v1790
        %1792 = vmatprep.subr.mxu0 0.0
        %v1793 = vand.u32 %v440, 4294901760
        %v1794 = vsub.f32 %v440, %v1793
        %v1795 = vand.u32 %v1794, 4294901760
        %v1796 = vsub.f32 %v1794, %v1795
        %v1797 = vand.u32 %v1796, 4294901760
        %1798 = vmatpush1.msra.mxu0 %v1797
        %1799 = vmatprep.subr.mxu0 0.0
        %1800 = vmatpush1.msra.mxu0 0.0
        %1801 = vmatprep.subr.mxu0 0.0
        %1802 = vmatpush1.msra.mxu0 0.0
        %1803 = vmatprep.subr.mxu0 0.0
        %1804 = vmatpush1.msra.mxu0 0.0
        %1805 = vmatprep.subr.mxu0 0.0
        %1806 = vmatpush1.msra.mxu0 0.0
        %1807 = vmatprep.subr.mxu0 0.0
        %1808 = vmatpush1.msra.mxu0 0.0
        %1809 = vmatprep.subr.mxu0 0.0
        %1810 = vmatpush1.msra.mxu0 0.0
        %1811 = vmatprep.subr.mxu0 0.0
        %1812 = vmatpush1.msra.mxu0 0.0
        %1813 = vmatprep.subr.mxu0 0.0
        %1814 = vmatpush1.msra.mxu0 0.0
        %1815 = vmatprep.subr.mxu0 0.0
        %1816 = vmatpush1.msra.mxu0 0.0
        %1817 = vmatprep.subr.mxu0 0.0
        %1818 = vmatpush1.msra.mxu0 0.0
        %1819 = vmatprep.subr.mxu0 0.0
        %1820 = vmatpush1.msra.mxu0 0.0
        %1821 = vmatprep.subr.mxu0 0.0
        %1822 = vmatpush1.msra.mxu0 0.0
        %1823 = vmatprep.subr.mxu0 0.0
        %1824 = vmatpush1.msra.mxu0 0.0
        %1825 = vmatprep.subr.mxu0 0.0
        %1826 = vmatpush1.msra.mxu0 0.0
        %1827 = vmatprep.subr.mxu0 0.0
        %1828 = vmatpush1.msra.mxu0 0.0
        %1829 = vmatprep.subr.mxu0 0.0
        %1830 = vmatpush1.msra.mxu0 0.0
        %1831 = vmatprep.subr.mxu0 0.0
        %1832 = vmatpush1.msra.mxu0 0.0
        %1833 = vmatprep.subr.mxu0 0.0
        %1834 = vmatpush1.msra.mxu0 0.0
        %1835 = vmatprep.subr.mxu0 0.0
        %1836 = vmatpush1.msra.mxu0 0.0
        %1837 = vmatprep.subr.mxu0 0.0
        %1838 = vmatpush1.msra.mxu0 0.0
        %1839 = vmatprep.subr.mxu0 0.0
        %1840 = vmatpush1.msra.mxu0 0.0
        %1841 = vmatprep.subr.mxu0 0.0
        %1842 = vmatpush1.msra.mxu0 0.0
        %1843 = vmatprep.subr.mxu0 0.0
        %1844 = vmatpush1.msra.mxu0 0.0
        %1845 = vmatprep.subr.mxu0 0.0
        %1846 = vmatpush1.msra.mxu0 0.0
        %1847 = vmatprep.subr.mxu0 0.0
        %1848 = vmatpush1.msra.mxu0 0.0
        %1849 = vmatprep.subr.mxu0 0.0
        %1850 = vmatpush1.msra.mxu0 0.0
        %1851 = vmatprep.subr.mxu0 0.0
        %1852 = vmatpush1.msra.mxu0 0.0
        %1853 = vmatprep.subr.mxu0 0.0
        %1854 = vmatpush1.msra.mxu0 0.0
        %1855 = vmatprep.subr.mxu0 0.0
        %1856 = vmatpush1.msra.mxu0 0.0
        %1857 = vmatprep.subr.mxu0 0.0
        %1858 = vmatpush1.msra.mxu0 0.0
        %1859 = vmatprep.mubr.f32.mxu0 0.0
        %v1860 = vand.u32 %v1693, 4294901760
        %1861 = vmatmul.mubr.f32.gmra.mrb[0].mxu0 %v1860
        %v1862 = vpop.f32.mrb[0].mxu0
        %v1863 = vadd.f32 %v1772, %v1862
        %v1864 = vpop.f32.mrb[0].mxu0
        %1865 = vmatprep.mubr.f32.mxu0 0.0
        %v1866 = vand.u32 %v1696, 4294901760
        %1867 = vmatmul.mubr.f32.gmra.mrb[0].mxu0 %v1866
        %v1868 = vpop.f32.mrb[0].mxu0
        %v1869 = vadd.f32 %v1782, %v1868
        %v1870 = vpop.f32.mrb[0].mxu0
        %1871 = vdwg.mxu0
        %1872 = vmatprep.subr.mxu0 0.0
        %v1873 = vand.u32 %v439, 4294901760
        %v1874 = vsub.f32 %v439, %v1873
        %1875 = vmatpush1.msra.mxu0 %v1874
        %1876 = vmatprep.subr.mxu0 0.0
        %v1877 = vand.u32 %v440, 4294901760
        %v1878 = vsub.f32 %v440, %v1877
        %1879 = vmatpush1.msra.mxu0 %v1878
        %1880 = vmatprep.subr.mxu0 0.0
        %1881 = vmatpush1.msra.mxu0 0.0
        %1882 = vmatprep.subr.mxu0 0.0
        %1883 = vmatpush1.msra.mxu0 0.0
        %1884 = vmatprep.subr.mxu0 0.0
        %1885 = vmatpush1.msra.mxu0 0.0
        %1886 = vmatprep.subr.mxu0 0.0
        %1887 = vmatpush1.msra.mxu0 0.0
        %1888 = vmatprep.subr.mxu0 0.0
        %1889 = vmatpush1.msra.mxu0 0.0
        %1890 = vmatprep.subr.mxu0 0.0
        %1891 = vmatpush1.msra.mxu0 0.0
        %1892 = vmatprep.subr.mxu0 0.0
        %1893 = vmatpush1.msra.mxu0 0.0
        %1894 = vmatprep.subr.mxu0 0.0
        %1895 = vmatpush1.msra.mxu0 0.0
        %1896 = vmatprep.subr.mxu0 0.0
        %1897 = vmatpush1.msra.mxu0 0.0
        %1898 = vmatprep.subr.mxu0 0.0
        %1899 = vmatpush1.msra.mxu0 0.0
        %1900 = vmatprep.subr.mxu0 0.0
        %1901 = vmatpush1.msra.mxu0 0.0
        %1902 = vmatprep.subr.mxu0 0.0
        %1903 = vmatpush1.msra.mxu0 0.0
        %1904 = vmatprep.subr.mxu0 0.0
        %1905 = vmatpush1.msra.mxu0 0.0
        %1906 = vmatprep.subr.mxu0 0.0
        %1907 = vmatpush1.msra.mxu0 0.0
        %1908 = vmatprep.subr.mxu0 0.0
        %1909 = vmatpush1.msra.mxu0 0.0
        %1910 = vmatprep.subr.mxu0 0.0
        %1911 = vmatpush1.msra.mxu0 0.0
        %1912 = vmatprep.subr.mxu0 0.0
        %1913 = vmatpush1.msra.mxu0 0.0
        %1914 = vmatprep.subr.mxu0 0.0
        %1915 = vmatpush1.msra.mxu0 0.0
        %1916 = vmatprep.subr.mxu0 0.0
        %1917 = vmatpush1.msra.mxu0 0.0
        %1918 = vmatprep.subr.mxu0 0.0
        %1919 = vmatpush1.msra.mxu0 0.0
        %1920 = vmatprep.subr.mxu0 0.0
        %1921 = vmatpush1.msra.mxu0 0.0
        %1922 = vmatprep.subr.mxu0 0.0
        %1923 = vmatpush1.msra.mxu0 0.0
        %1924 = vmatprep.subr.mxu0 0.0
        %1925 = vmatpush1.msra.mxu0 0.0
        %1926 = vmatprep.subr.mxu0 0.0
        %1927 = vmatpush1.msra.mxu0 0.0
        %1928 = vmatprep.subr.mxu0 0.0
        %1929 = vmatpush1.msra.mxu0 0.0
        %1930 = vmatprep.subr.mxu0 0.0
        %1931 = vmatpush1.msra.mxu0 0.0
        %1932 = vmatprep.subr.mxu0 0.0
        %1933 = vmatpush1.msra.mxu0 0.0
        %1934 = vmatprep.subr.mxu0 0.0
        %1935 = vmatpush1.msra.mxu0 0.0
        %1936 = vmatprep.subr.mxu0 0.0
        %1937 = vmatpush1.msra.mxu0 0.0
        %1938 = vmatprep.subr.mxu0 0.0
        %1939 = vmatpush1.msra.mxu0 0.0
        %1940 = vmatprep.mubr.f32.mxu0 0.0
        %v1941 = vand.u32 %v1693, 4294901760
        %v1942 = vsub.f32 %v1693, %v1941
        %1943 = vmatmul.mubr.f32.gmra.mrb[0].mxu0 %v1942
        %v1944 = vpop.f32.mrb[0].mxu0
        %v1945 = vadd.f32 %v1863, %v1944
        %v1946 = vpop.f32.mrb[0].mxu0
        %1947 = vmatprep.mubr.f32.mxu0 0.0
        %v1948 = vand.u32 %v1696, 4294901760
        %v1949 = vsub.f32 %v1696, %v1948
        %1950 = vmatmul.mubr.f32.gmra.mrb[0].mxu0 %v1949
        %v1951 = vpop.f32.mrb[0].mxu0
        %v1952 = vadd.f32 %v1869, %v1951
        %v1953 = vpop.f32.mrb[0].mxu0
        %1954 = vdwg.mxu0
        %1955 = vmatprep.subr.mxu0 0.0
        %v1956 = vand.u32 %v439, 4294901760
        %1957 = vmatpush1.msra.mxu0 %v1956
        %1958 = vmatprep.subr.mxu0 0.0
        %v1959 = vand.u32 %v440, 4294901760
        %1960 = vmatpush1.msra.mxu0 %v1959
        %1961 = vmatprep.subr.mxu0 0.0
        %1962 = vmatpush1.msra.mxu0 0.0
        %1963 = vmatprep.subr.mxu0 0.0
        %1964 = vmatpush1.msra.mxu0 0.0
        %1965 = vmatprep.subr.mxu0 0.0
        %1966 = vmatpush1.msra.mxu0 0.0
        %1967 = vmatprep.subr.mxu0 0.0
        %1968 = vmatpush1.msra.mxu0 0.0
        %1969 = vmatprep.subr.mxu0 0.0
        %1970 = vmatpush1.msra.mxu0 0.0
        %1971 = vmatprep.subr.mxu0 0.0
        %1972 = vmatpush1.msra.mxu0 0.0
        %1973 = vmatprep.subr.mxu0 0.0
        %1974 = vmatpush1.msra.mxu0 0.0
        %1975 = vmatprep.subr.mxu0 0.0
        %1976 = vmatpush1.msra.mxu0 0.0
        %1977 = vmatprep.subr.mxu0 0.0
        %1978 = vmatpush1.msra.mxu0 0.0
        %1979 = vmatprep.subr.mxu0 0.0
        %1980 = vmatpush1.msra.mxu0 0.0
        %1981 = vmatprep.subr.mxu0 0.0
        %1982 = vmatpush1.msra.mxu0 0.0
        %1983 = vmatprep.subr.mxu0 0.0
        %1984 = vmatpush1.msra.mxu0 0.0
        %1985 = vmatprep.subr.mxu0 0.0
        %1986 = vmatpush1.msra.mxu0 0.0
        %1987 = vmatprep.subr.mxu0 0.0
        %1988 = vmatpush1.msra.mxu0 0.0
        %1989 = vmatprep.subr.mxu0 0.0
        %1990 = vmatpush1.msra.mxu0 0.0
        %1991 = vmatprep.subr.mxu0 0.0
        %1992 = vmatpush1.msra.mxu0 0.0
        %1993 = vmatprep.subr.mxu0 0.0
        %1994 = vmatpush1.msra.mxu0 0.0
        %1995 = vmatprep.subr.mxu0 0.0
        %1996 = vmatpush1.msra.mxu0 0.0
        %1997 = vmatprep.subr.mxu0 0.0
        %1998 = vmatpush1.msra.mxu0 0.0
        %1999 = vmatprep.subr.mxu0 0.0
        %2000 = vmatpush1.msra.mxu0 0.0
        %2001 = vmatprep.subr.mxu0 0.0
        %2002 = vmatpush1.msra.mxu0 0.0
        %2003 = vmatprep.subr.mxu0 0.0
        %2004 = vmatpush1.msra.mxu0 0.0
        %2005 = vmatprep.subr.mxu0 0.0
        %2006 = vmatpush1.msra.mxu0 0.0
        %2007 = vmatprep.subr.mxu0 0.0
        %2008 = vmatpush1.msra.mxu0 0.0
        %2009 = vmatprep.subr.mxu0 0.0
        %2010 = vmatpush1.msra.mxu0 0.0
        %2011 = vmatprep.subr.mxu0 0.0
        %2012 = vmatpush1.msra.mxu0 0.0
        %2013 = vmatprep.subr.mxu0 0.0
        %2014 = vmatpush1.msra.mxu0 0.0
        %2015 = vmatprep.subr.mxu0 0.0
        %2016 = vmatpush1.msra.mxu0 0.0
        %2017 = vmatprep.subr.mxu0 0.0
        %2018 = vmatpush1.msra.mxu0 0.0
        %2019 = vmatprep.subr.mxu0 0.0
        %2020 = vmatpush1.msra.mxu0 0.0
        %2021 = vmatprep.mubr.f32.mxu0 0.0
        %v2022 = vand.u32 %v1693, 4294901760
        %v2023 = vsub.f32 %v1693, %v2022
        %v2024 = vand.u32 %v2023, 4294901760
        %2025 = vmatmul.mubr.f32.gmra.mrb[0].mxu0 %v2024
        %v2026 = vpop.f32.mrb[0].mxu0
        %v2027 = vadd.f32 %v1945, %v2026
        %v2028 = vpop.f32.mrb[0].mxu0
        %2029 = vmatprep.mubr.f32.mxu0 0.0
        %v2030 = vand.u32 %v1696, 4294901760
        %v2031 = vsub.f32 %v1696, %v2030
        %v2032 = vand.u32 %v2031, 4294901760
        %2033 = vmatmul.mubr.f32.gmra.mrb[0].mxu0 %v2032
        %v2034 = vpop.f32.mrb[0].mxu0
        %v2035 = vadd.f32 %v1952, %v2034
        %v2036 = vpop.f32.mrb[0].mxu0
        %2037 = vdwg.mxu0
        %2038 = vmatprep.subr.mxu0 0.0
        %v2039 = vand.u32 %v439, 4294901760
        %v2040 = vsub.f32 %v439, %v2039
        %v2041 = vand.u32 %v2040, 4294901760
        %2042 = vmatpush1.msra.mxu0 %v2041
        %2043 = vmatprep.subr.mxu0 0.0
        %v2044 = vand.u32 %v440, 4294901760
        %v2045 = vsub.f32 %v440, %v2044
        %v2046 = vand.u32 %v2045, 4294901760
        %2047 = vmatpush1.msra.mxu0 %v2046
        %2048 = vmatprep.subr.mxu0 0.0
        %2049 = vmatpush1.msra.mxu0 0.0
        %2050 = vmatprep.subr.mxu0 0.0
        %2051 = vmatpush1.msra.mxu0 0.0
        %2052 = vmatprep.subr.mxu0 0.0
        %2053 = vmatpush1.msra.mxu0 0.0
        %2054 = vmatprep.subr.mxu0 0.0
        %2055 = vmatpush1.msra.mxu0 0.0
        %2056 = vmatprep.subr.mxu0 0.0
        %2057 = vmatpush1.msra.mxu0 0.0
        %2058 = vmatprep.subr.mxu0 0.0
        %2059 = vmatpush1.msra.mxu0 0.0
        %2060 = vmatprep.subr.mxu0 0.0
        %2061 = vmatpush1.msra.mxu0 0.0
        %2062 = vmatprep.subr.mxu0 0.0
        %2063 = vmatpush1.msra.mxu0 0.0
        %2064 = vmatprep.subr.mxu0 0.0
        %2065 = vmatpush1.msra.mxu0 0.0
        %2066 = vmatprep.subr.mxu0 0.0
        %2067 = vmatpush1.msra.mxu0 0.0
        %2068 = vmatprep.subr.mxu0 0.0
        %2069 = vmatpush1.msra.mxu0 0.0
        %2070 = vmatprep.subr.mxu0 0.0
        %2071 = vmatpush1.msra.mxu0 0.0
        %2072 = vmatprep.subr.mxu0 0.0
        %2073 = vmatpush1.msra.mxu0 0.0
        %2074 = vmatprep.subr.mxu0 0.0
        %2075 = vmatpush1.msra.mxu0 0.0
        %2076 = vmatprep.subr.mxu0 0.0
        %2077 = vmatpush1.msra.mxu0 0.0
        %2078 = vmatprep.subr.mxu0 0.0
        %2079 = vmatpush1.msra.mxu0 0.0
        %2080 = vmatprep.subr.mxu0 0.0
        %2081 = vmatpush1.msra.mxu0 0.0
        %2082 = vmatprep.subr.mxu0 0.0
        %2083 = vmatpush1.msra.mxu0 0.0
        %2084 = vmatprep.subr.mxu0 0.0
        %2085 = vmatpush1.msra.mxu0 0.0
        %2086 = vmatprep.subr.mxu0 0.0
        %2087 = vmatpush1.msra.mxu0 0.0
        %2088 = vmatprep.subr.mxu0 0.0
        %2089 = vmatpush1.msra.mxu0 0.0
        %2090 = vmatprep.subr.mxu0 0.0
        %2091 = vmatpush1.msra.mxu0 0.0
        %2092 = vmatprep.subr.mxu0 0.0
        %2093 = vmatpush1.msra.mxu0 0.0
        %2094 = vmatprep.subr.mxu0 0.0
        %2095 = vmatpush1.msra.mxu0 0.0
        %2096 = vmatprep.subr.mxu0 0.0
        %2097 = vmatpush1.msra.mxu0 0.0
        %2098 = vmatprep.subr.mxu0 0.0
        %2099 = vmatpush1.msra.mxu0 0.0
        %2100 = vmatprep.subr.mxu0 0.0
        %2101 = vmatpush1.msra.mxu0 0.0
        %2102 = vmatprep.subr.mxu0 0.0
        %2103 = vmatpush1.msra.mxu0 0.0
        %2104 = vmatprep.subr.mxu0 0.0
        %2105 = vmatpush1.msra.mxu0 0.0
        %2106 = vmatprep.subr.mxu0 0.0
        %2107 = vmatpush1.msra.mxu0 0.0
        %2108 = vmatprep.mubr.f32.mxu0 0.0
        %v2109 = vand.u32 %v1693, 4294901760
        %2110 = vmatmul.mubr.f32.gmra.mrb[0].mxu0 %v2109
        %v2111 = vpop.f32.mrb[0].mxu0
        %v2112 = vadd.f32 %v2027, %v2111
        %v2113 = vpop.f32.mrb[0].mxu0
        %2114 = vmatprep.mubr.f32.mxu0 0.0
        %v2115 = vand.u32 %v1696, 4294901760
        %2116 = vmatmul.mubr.f32.gmra.mrb[0].mxu0 %v2115
        %v2117 = vpop.f32.mrb[0].mxu0
        %v2118 = vadd.f32 %v2035, %v2117
        %v2119 = vpop.f32.mrb[0].mxu0
        %2120 = vdwg.mxu0
        %2121 = vmatprep.subr.mxu0 0.0
        %v2122 = vand.u32 %v439, 4294901760
        %2123 = vmatpush1.msra.mxu0 %v2122
        %2124 = vmatprep.subr.mxu0 0.0
        %v2125 = vand.u32 %v440, 4294901760
        %2126 = vmatpush1.msra.mxu0 %v2125
        %2127 = vmatprep.subr.mxu0 0.0
        %2128 = vmatpush1.msra.mxu0 0.0
        %2129 = vmatprep.subr.mxu0 0.0
        %2130 = vmatpush1.msra.mxu0 0.0
        %2131 = vmatprep.subr.mxu0 0.0
        %2132 = vmatpush1.msra.mxu0 0.0
        %2133 = vmatprep.subr.mxu0 0.0
        %2134 = vmatpush1.msra.mxu0 0.0
        %2135 = vmatprep.subr.mxu0 0.0
        %2136 = vmatpush1.msra.mxu0 0.0
        %2137 = vmatprep.subr.mxu0 0.0
        %2138 = vmatpush1.msra.mxu0 0.0
        %2139 = vmatprep.subr.mxu0 0.0
        %2140 = vmatpush1.msra.mxu0 0.0
        %2141 = vmatprep.subr.mxu0 0.0
        %2142 = vmatpush1.msra.mxu0 0.0
        %2143 = vmatprep.subr.mxu0 0.0
        %2144 = vmatpush1.msra.mxu0 0.0
        %2145 = vmatprep.subr.mxu0 0.0
        %2146 = vmatpush1.msra.mxu0 0.0
        %2147 = vmatprep.subr.mxu0 0.0
        %2148 = vmatpush1.msra.mxu0 0.0
        %2149 = vmatprep.subr.mxu0 0.0
        %2150 = vmatpush1.msra.mxu0 0.0
        %2151 = vmatprep.subr.mxu0 0.0
        %2152 = vmatpush1.msra.mxu0 0.0
        %2153 = vmatprep.subr.mxu0 0.0
        %2154 = vmatpush1.msra.mxu0 0.0
        %2155 = vmatprep.subr.mxu0 0.0
        %2156 = vmatpush1.msra.mxu0 0.0
        %2157 = vmatprep.subr.mxu0 0.0
        %2158 = vmatpush1.msra.mxu0 0.0
        %2159 = vmatprep.subr.mxu0 0.0
        %2160 = vmatpush1.msra.mxu0 0.0
        %2161 = vmatprep.subr.mxu0 0.0
        %2162 = vmatpush1.msra.mxu0 0.0
        %2163 = vmatprep.subr.mxu0 0.0
        %2164 = vmatpush1.msra.mxu0 0.0
        %2165 = vmatprep.subr.mxu0 0.0
        %2166 = vmatpush1.msra.mxu0 0.0
        %2167 = vmatprep.subr.mxu0 0.0
        %2168 = vmatpush1.msra.mxu0 0.0
        %2169 = vmatprep.subr.mxu0 0.0
        %2170 = vmatpush1.msra.mxu0 0.0
        %2171 = vmatprep.subr.mxu0 0.0
        %2172 = vmatpush1.msra.mxu0 0.0
        %2173 = vmatprep.subr.mxu0 0.0
        %2174 = vmatpush1.msra.mxu0 0.0
        %2175 = vmatprep.subr.mxu0 0.0
        %2176 = vmatpush1.msra.mxu0 0.0
        %2177 = vmatprep.subr.mxu0 0.0
        %2178 = vmatpush1.msra.mxu0 0.0
        %2179 = vmatprep.subr.mxu0 0.0
        %2180 = vmatpush1.msra.mxu0 0.0
        %2181 = vmatprep.subr.mxu0 0.0
        %2182 = vmatpush1.msra.mxu0 0.0
        %2183 = vmatprep.subr.mxu0 0.0
        %2184 = vmatpush1.msra.mxu0 0.0
        %2185 = vmatprep.subr.mxu0 0.0
        %2186 = vmatpush1.msra.mxu0 0.0
        %2187 = vmatprep.mubr.f32.mxu0 0.0
        %v2188 = vand.u32 %v1693, 4294901760
        %2189 = vmatmul.mubr.f32.gmra.mrb[0].mxu0 %v2188
        %v2190 = vpop.f32.mrb[0].mxu0
        %v2191 = vadd.f32 %v2112, %v2190
        %v2192 = vpop.f32.mrb[0].mxu0
        %2193 = vmatprep.mubr.f32.mxu0 0.0
        %v2194 = vand.u32 %v1696, 4294901760
        %2195 = vmatmul.mubr.f32.gmra.mrb[0].mxu0 %v2194
        %v2196 = vpop.f32.mrb[0].mxu0
        %v2197 = vadd.f32 %v2118, %v2196
        %v2198 = vpop.f32.mrb[0].mxu0
        %2199 = vdwg.mxu0
        %v2200 = vsub.f32 %v2191, %v1564
        %v2201 = vsub.f32 %v2197, %v1566
        %v2202 = vadd.f32 %v998, %v2191
        %v2203 = vadd.f32 %v1004, %v2197
        %2205 = vset.pattern.permute.xlu0 16
        %2206 = vperm.xlu0 %2205, %v2200
        %v2207 = vpop.permute.xlu0 %2206
        %2210 = vset.pattern.permute.xlu0 16
        %2211 = vperm.xlu0 %2210, %v2201
        %v2212 = vpop.permute.xlu0 %2211
        %v2214 = vmul.f32 %v2207, %v1586
        %v2215 = vmul.f32 %v2212, %v1586
        %v2216 = vadd.f32 %v2202, %v2214
        %v2217 = vadd.f32 %v2203, %v2215
        %2218 = vset.pattern.permute.xlu0 17
        %2219 = vperm.xlu0 %2218, %v2200
        %v2220 = vpop.permute.xlu0 %2219
        %2222 = vset.pattern.permute.xlu0 17
        %2223 = vperm.xlu0 %2222, %v2201
        %v2224 = vpop.permute.xlu0 %2223
        %v2226 = vmul.f32 %v2220, %v1602
        %v2227 = vmul.f32 %v2224, %v1602
        %v2228 = vadd.f32 %v2216, %v2226
        %v2229 = vadd.f32 %v2217, %v2227
        %2230 = vset.pattern.permute.xlu0 18
        %2231 = vperm.xlu0 %2230, %v2200
        %v2232 = vpop.permute.xlu0 %2231
        %2234 = vset.pattern.permute.xlu0 18
        %2235 = vperm.xlu0 %2234, %v2201
        %v2236 = vpop.permute.xlu0 %2235
        %v2238 = vmul.f32 %v2232, %v1618
        %v2239 = vmul.f32 %v2236, %v1618
        %v2240 = vadd.f32 %v2228, %v2238
        %v2241 = vadd.f32 %v2229, %v2239
        %v2242 = vmul.f32 %v2200, %v2200
        %v2243 = vmul.f32 %v2201, %v2201
        %2246 = vrot.lane.b32.xlu0 %v2242, 112
        %v2247 = vpop.permute.xlu0 %2246
        %2248 = vrot.lane.b32.xlu0 %v2243, 112
        %v2249 = vpop.permute.xlu0 %2248
        %v2252 = vsel %vm1633, %v2247, 0.0
        %2253 = vadd.xlane.f32.xlu0 %v2252
        %v2254 = vpop.xlane.xlu0 %2253
        %v2255 = vsel %vm1633, %v2249, 0.0
        %2256 = vadd.xlane.f32.xlu0 %v2255
        %v2257 = vpop.xlane.xlu0 %2256
        %v2258 = vmax.f32 %v2254, 1e-20
        %v2259 = vmax.f32 %v2257, 1e-20
        %v2260 = vrsqrt.pop %v2258
        %v2261 = vrsqrt.pop %v2259
        %v2262 = vsel %vm1686, inf, %v1644
        %v2263 = vsel %vm1687, inf, %v1645
        %v2264 = vsel %vm1008, %v2262, inf
        %2265 = vmin.xlane.f32.xlu0 %v2264
        %v2266 = vpop.xlane.xlu0 %2265
        %v2267 = vsel %vm1008, %v2263, inf
        %2268 = vmin.xlane.f32.xlu0 %v2267
        %v2269 = vpop.xlane.xlu0 %2268
        %vm2270 = vcmp.eq.f32.partialorder %v2262, %v2266
        %vm2271 = vcmp.eq.f32.partialorder %v2263, %v2269
        %v2272 = vsel %vm2270, %v498, 16
        %v2273 = vsel %vm2271, %v498, 16
        %v2274 = vsel %vm1008, %v2272, 2147483647
        %v2275 = vand.u32 %v2274, 65535
        %v2276 = vshra.s32 %v2274, 16
        %v2277 = vcvt.s32.f32 %v2275
        %v2278 = vcvt.s32.f32 %v2276
        %2279 = vmin.xlane.f32.xlu0 %v2278
        %v2280 = vpop.xlane.xlu0 %2279
        %vm2281 = vcmp.eq.f32.partialorder %v2278, %v2280
        %v2282 = vsel %vm2281, %v2277, inf
        %2283 = vmin.xlane.f32.xlu0 %v2282
        %v2284 = vpop.xlane.xlu0 %2283
        %v2285 = vcvt.f32.s32 %v2284
        %v2286 = vcvt.f32.s32 %v2280
        %v2287 = vshll.u32 %v2286, 16
        %v2288 = vadd.s32 %v2287, %v2285
        %v2289 = vsel %vm1008, %v2273, 2147483647
        %v2290 = vand.u32 %v2289, 65535
        %v2291 = vshra.s32 %v2289, 16
        %v2292 = vcvt.s32.f32 %v2290
        %v2293 = vcvt.s32.f32 %v2291
        %2294 = vmin.xlane.f32.xlu0 %v2293
        %v2295 = vpop.xlane.xlu0 %2294
        %vm2296 = vcmp.eq.f32.partialorder %v2293, %v2295
        %v2297 = vsel %vm2296, %v2292, inf
        %2298 = vmin.xlane.f32.xlu0 %v2297
        %v2299 = vpop.xlane.xlu0 %2298
        %v2300 = vcvt.f32.s32 %v2299
        %v2301 = vcvt.f32.s32 %v2295
        %v2302 = vshll.u32 %v2301, 16
        %v2303 = vadd.s32 %v2302, %v2300
        %vm2304 = vcmp.eq.s32.totalorder %v498, %v2288
        %vm2305 = vcmp.eq.s32.totalorder %v498, %v2303
        %v2306 = vsel %vm2304, 1, 0
        %v2307 = vsel %vm2305, 1, 0
        %v2308 = vcvt.s32.f32 %v2306
        %v2309 = vcvt.s32.f32 %v2307
        %v2311 = vsel %vm1008, %v2308, 0
        %v2314 = vsel %vm1008, %v2309, 0
        %2316 = vmatprep.subr.mxu0 0.0
        %v2317 = vand.u32 %v439, 4294901760
        %2318 = vmatpush1.msra.mxu0 %v2317
        %2319 = vmatprep.subr.mxu0 0.0
        %v2320 = vand.u32 %v440, 4294901760
        %2321 = vmatpush1.msra.mxu0 %v2320
        %2322 = vmatprep.subr.mxu0 0.0
        %2323 = vmatpush1.msra.mxu0 0.0
        %2324 = vmatprep.subr.mxu0 0.0
        %2325 = vmatpush1.msra.mxu0 0.0
        %2326 = vmatprep.subr.mxu0 0.0
        %2327 = vmatpush1.msra.mxu0 0.0
        %2328 = vmatprep.subr.mxu0 0.0
        %2329 = vmatpush1.msra.mxu0 0.0
        %2330 = vmatprep.subr.mxu0 0.0
        %2331 = vmatpush1.msra.mxu0 0.0
        %2332 = vmatprep.subr.mxu0 0.0
        %2333 = vmatpush1.msra.mxu0 0.0
        %2334 = vmatprep.subr.mxu0 0.0
        %2335 = vmatpush1.msra.mxu0 0.0
        %2336 = vmatprep.subr.mxu0 0.0
        %2337 = vmatpush1.msra.mxu0 0.0
        %2338 = vmatprep.subr.mxu0 0.0
        %2339 = vmatpush1.msra.mxu0 0.0
        %2340 = vmatprep.subr.mxu0 0.0
        %2341 = vmatpush1.msra.mxu0 0.0
        %2342 = vmatprep.subr.mxu0 0.0
        %2343 = vmatpush1.msra.mxu0 0.0
        %2344 = vmatprep.subr.mxu0 0.0
        %2345 = vmatpush1.msra.mxu0 0.0
        %2346 = vmatprep.subr.mxu0 0.0
        %2347 = vmatpush1.msra.mxu0 0.0
        %2348 = vmatprep.subr.mxu0 0.0
        %2349 = vmatpush1.msra.mxu0 0.0
        %2350 = vmatprep.subr.mxu0 0.0
        %2351 = vmatpush1.msra.mxu0 0.0
        %2352 = vmatprep.subr.mxu0 0.0
        %2353 = vmatpush1.msra.mxu0 0.0
        %2354 = vmatprep.subr.mxu0 0.0
        %2355 = vmatpush1.msra.mxu0 0.0
        %2356 = vmatprep.subr.mxu0 0.0
        %2357 = vmatpush1.msra.mxu0 0.0
        %2358 = vmatprep.subr.mxu0 0.0
        %2359 = vmatpush1.msra.mxu0 0.0
        %2360 = vmatprep.subr.mxu0 0.0
        %2361 = vmatpush1.msra.mxu0 0.0
        %2362 = vmatprep.subr.mxu0 0.0
        %2363 = vmatpush1.msra.mxu0 0.0
        %2364 = vmatprep.subr.mxu0 0.0
        %2365 = vmatpush1.msra.mxu0 0.0
        %2366 = vmatprep.subr.mxu0 0.0
        %2367 = vmatpush1.msra.mxu0 0.0
        %2368 = vmatprep.subr.mxu0 0.0
        %2369 = vmatpush1.msra.mxu0 0.0
        %2370 = vmatprep.subr.mxu0 0.0
        %2371 = vmatpush1.msra.mxu0 0.0
        %2372 = vmatprep.subr.mxu0 0.0
        %2373 = vmatpush1.msra.mxu0 0.0
        %2374 = vmatprep.subr.mxu0 0.0
        %2375 = vmatpush1.msra.mxu0 0.0
        %2376 = vmatprep.subr.mxu0 0.0
        %2377 = vmatpush1.msra.mxu0 0.0
        %2378 = vmatprep.subr.mxu0 0.0
        %2379 = vmatpush1.msra.mxu0 0.0
        %2380 = vmatprep.subr.mxu0 0.0
        %2381 = vmatpush1.msra.mxu0 0.0
        %2382 = vmatprep.mubr.f32.mxu0 0.0
        %v2383 = vand.u32 %v2311, 4294901760
        %v2384 = vsub.f32 %v2311, %v2383
        %v2385 = vand.u32 %v2384, 4294901760
        %v2386 = vsub.f32 %v2384, %v2385
        %v2387 = vand.u32 %v2386, 4294901760
        %2388 = vmatmul.mubr.f32.gmra.mrb[0].mxu0 %v2387
        %v2389 = vpop.f32.mrb[0].mxu0
        %v2390 = vadd.f32 0.0, %v2389
        %v2391 = vpop.f32.mrb[0].mxu0
        %2392 = vmatprep.mubr.f32.mxu0 0.0
        %v2393 = vand.u32 %v2314, 4294901760
        %v2394 = vsub.f32 %v2314, %v2393
        %v2395 = vand.u32 %v2394, 4294901760
        %v2396 = vsub.f32 %v2394, %v2395
        %v2397 = vand.u32 %v2396, 4294901760
        %2398 = vmatmul.mubr.f32.gmra.mrb[0].mxu0 %v2397
        %v2399 = vpop.f32.mrb[0].mxu0
        %v2400 = vadd.f32 0.0, %v2399
        %v2401 = vpop.f32.mrb[0].mxu0
        %2402 = vdwg.mxu0
        %2403 = vmatprep.subr.mxu0 0.0
        %v2404 = vand.u32 %v439, 4294901760
        %v2405 = vsub.f32 %v439, %v2404
        %v2406 = vand.u32 %v2405, 4294901760
        %v2407 = vsub.f32 %v2405, %v2406
        %v2408 = vand.u32 %v2407, 4294901760
        %2409 = vmatpush1.msra.mxu0 %v2408
        %2410 = vmatprep.subr.mxu0 0.0
        %v2411 = vand.u32 %v440, 4294901760
        %v2412 = vsub.f32 %v440, %v2411
        %v2413 = vand.u32 %v2412, 4294901760
        %v2414 = vsub.f32 %v2412, %v2413
        %v2415 = vand.u32 %v2414, 4294901760
        %2416 = vmatpush1.msra.mxu0 %v2415
        %2417 = vmatprep.subr.mxu0 0.0
        %2418 = vmatpush1.msra.mxu0 0.0
        %2419 = vmatprep.subr.mxu0 0.0
        %2420 = vmatpush1.msra.mxu0 0.0
        %2421 = vmatprep.subr.mxu0 0.0
        %2422 = vmatpush1.msra.mxu0 0.0
        %2423 = vmatprep.subr.mxu0 0.0
        %2424 = vmatpush1.msra.mxu0 0.0
        %2425 = vmatprep.subr.mxu0 0.0
        %2426 = vmatpush1.msra.mxu0 0.0
        %2427 = vmatprep.subr.mxu0 0.0
        %2428 = vmatpush1.msra.mxu0 0.0
        %2429 = vmatprep.subr.mxu0 0.0
        %2430 = vmatpush1.msra.mxu0 0.0
        %2431 = vmatprep.subr.mxu0 0.0
        %2432 = vmatpush1.msra.mxu0 0.0
        %2433 = vmatprep.subr.mxu0 0.0
        %2434 = vmatpush1.msra.mxu0 0.0
        %2435 = vmatprep.subr.mxu0 0.0
        %2436 = vmatpush1.msra.mxu0 0.0
        %2437 = vmatprep.subr.mxu0 0.0
        %2438 = vmatpush1.msra.mxu0 0.0
        %2439 = vmatprep.subr.mxu0 0.0
        %2440 = vmatpush1.msra.mxu0 0.0
        %2441 = vmatprep.subr.mxu0 0.0
        %2442 = vmatpush1.msra.mxu0 0.0
        %2443 = vmatprep.subr.mxu0 0.0
        %2444 = vmatpush1.msra.mxu0 0.0
        %2445 = vmatprep.subr.mxu0 0.0
        %2446 = vmatpush1.msra.mxu0 0.0
        %2447 = vmatprep.subr.mxu0 0.0
        %2448 = vmatpush1.msra.mxu0 0.0
        %2449 = vmatprep.subr.mxu0 0.0
        %2450 = vmatpush1.msra.mxu0 0.0
        %2451 = vmatprep.subr.mxu0 0.0
        %2452 = vmatpush1.msra.mxu0 0.0
        %2453 = vmatprep.subr.mxu0 0.0
        %2454 = vmatpush1.msra.mxu0 0.0
        %2455 = vmatprep.subr.mxu0 0.0
        %2456 = vmatpush1.msra.mxu0 0.0
        %2457 = vmatprep.subr.mxu0 0.0
        %2458 = vmatpush1.msra.mxu0 0.0
        %2459 = vmatprep.subr.mxu0 0.0
        %2460 = vmatpush1.msra.mxu0 0.0
        %2461 = vmatprep.subr.mxu0 0.0
        %2462 = vmatpush1.msra.mxu0 0.0
        %2463 = vmatprep.subr.mxu0 0.0
        %2464 = vmatpush1.msra.mxu0 0.0
        %2465 = vmatprep.subr.mxu0 0.0
        %2466 = vmatpush1.msra.mxu0 0.0
        %2467 = vmatprep.subr.mxu0 0.0
        %2468 = vmatpush1.msra.mxu0 0.0
        %2469 = vmatprep.subr.mxu0 0.0
        %2470 = vmatpush1.msra.mxu0 0.0
        %2471 = vmatprep.subr.mxu0 0.0
        %2472 = vmatpush1.msra.mxu0 0.0
        %2473 = vmatprep.subr.mxu0 0.0
        %2474 = vmatpush1.msra.mxu0 0.0
        %2475 = vmatprep.subr.mxu0 0.0
        %2476 = vmatpush1.msra.mxu0 0.0
        %2477 = vmatprep.mubr.f32.mxu0 0.0
        %v2478 = vand.u32 %v2311, 4294901760
        %2479 = vmatmul.mubr.f32.gmra.mrb[0].mxu0 %v2478
        %v2480 = vpop.f32.mrb[0].mxu0
        %v2481 = vadd.f32 %v2390, %v2480
        %v2482 = vpop.f32.mrb[0].mxu0
        %2483 = vmatprep.mubr.f32.mxu0 0.0
        %v2484 = vand.u32 %v2314, 4294901760
        %2485 = vmatmul.mubr.f32.gmra.mrb[0].mxu0 %v2484
        %v2486 = vpop.f32.mrb[0].mxu0
        %v2487 = vadd.f32 %v2400, %v2486
        %v2488 = vpop.f32.mrb[0].mxu0
        %2489 = vdwg.mxu0
        %2490 = vmatprep.subr.mxu0 0.0
        %v2491 = vand.u32 %v439, 4294901760
        %v2492 = vsub.f32 %v439, %v2491
        %2493 = vmatpush1.msra.mxu0 %v2492
        %2494 = vmatprep.subr.mxu0 0.0
        %v2495 = vand.u32 %v440, 4294901760
        %v2496 = vsub.f32 %v440, %v2495
        %2497 = vmatpush1.msra.mxu0 %v2496
        %2498 = vmatprep.subr.mxu0 0.0
        %2499 = vmatpush1.msra.mxu0 0.0
        %2500 = vmatprep.subr.mxu0 0.0
        %2501 = vmatpush1.msra.mxu0 0.0
        %2502 = vmatprep.subr.mxu0 0.0
        %2503 = vmatpush1.msra.mxu0 0.0
        %2504 = vmatprep.subr.mxu0 0.0
        %2505 = vmatpush1.msra.mxu0 0.0
        %2506 = vmatprep.subr.mxu0 0.0
        %2507 = vmatpush1.msra.mxu0 0.0
        %2508 = vmatprep.subr.mxu0 0.0
        %2509 = vmatpush1.msra.mxu0 0.0
        %2510 = vmatprep.subr.mxu0 0.0
        %2511 = vmatpush1.msra.mxu0 0.0
        %2512 = vmatprep.subr.mxu0 0.0
        %2513 = vmatpush1.msra.mxu0 0.0
        %2514 = vmatprep.subr.mxu0 0.0
        %2515 = vmatpush1.msra.mxu0 0.0
        %2516 = vmatprep.subr.mxu0 0.0
        %2517 = vmatpush1.msra.mxu0 0.0
        %2518 = vmatprep.subr.mxu0 0.0
        %2519 = vmatpush1.msra.mxu0 0.0
        %2520 = vmatprep.subr.mxu0 0.0
        %2521 = vmatpush1.msra.mxu0 0.0
        %2522 = vmatprep.subr.mxu0 0.0
        %2523 = vmatpush1.msra.mxu0 0.0
        %2524 = vmatprep.subr.mxu0 0.0
        %2525 = vmatpush1.msra.mxu0 0.0
        %2526 = vmatprep.subr.mxu0 0.0
        %2527 = vmatpush1.msra.mxu0 0.0
        %2528 = vmatprep.subr.mxu0 0.0
        %2529 = vmatpush1.msra.mxu0 0.0
        %2530 = vmatprep.subr.mxu0 0.0
        %2531 = vmatpush1.msra.mxu0 0.0
        %2532 = vmatprep.subr.mxu0 0.0
        %2533 = vmatpush1.msra.mxu0 0.0
        %2534 = vmatprep.subr.mxu0 0.0
        %2535 = vmatpush1.msra.mxu0 0.0
        %2536 = vmatprep.subr.mxu0 0.0
        %2537 = vmatpush1.msra.mxu0 0.0
        %2538 = vmatprep.subr.mxu0 0.0
        %2539 = vmatpush1.msra.mxu0 0.0
        %2540 = vmatprep.subr.mxu0 0.0
        %2541 = vmatpush1.msra.mxu0 0.0
        %2542 = vmatprep.subr.mxu0 0.0
        %2543 = vmatpush1.msra.mxu0 0.0
        %2544 = vmatprep.subr.mxu0 0.0
        %2545 = vmatpush1.msra.mxu0 0.0
        %2546 = vmatprep.subr.mxu0 0.0
        %2547 = vmatpush1.msra.mxu0 0.0
        %2548 = vmatprep.subr.mxu0 0.0
        %2549 = vmatpush1.msra.mxu0 0.0
        %2550 = vmatprep.subr.mxu0 0.0
        %2551 = vmatpush1.msra.mxu0 0.0
        %2552 = vmatprep.subr.mxu0 0.0
        %2553 = vmatpush1.msra.mxu0 0.0
        %2554 = vmatprep.subr.mxu0 0.0
        %2555 = vmatpush1.msra.mxu0 0.0
        %2556 = vmatprep.subr.mxu0 0.0
        %2557 = vmatpush1.msra.mxu0 0.0
        %2558 = vmatprep.mubr.f32.mxu0 0.0
        %v2559 = vand.u32 %v2311, 4294901760
        %v2560 = vsub.f32 %v2311, %v2559
        %2561 = vmatmul.mubr.f32.gmra.mrb[0].mxu0 %v2560
        %v2562 = vpop.f32.mrb[0].mxu0
        %v2563 = vadd.f32 %v2481, %v2562
        %v2564 = vpop.f32.mrb[0].mxu0
        %2565 = vmatprep.mubr.f32.mxu0 0.0
        %v2566 = vand.u32 %v2314, 4294901760
        %v2567 = vsub.f32 %v2314, %v2566
        %2568 = vmatmul.mubr.f32.gmra.mrb[0].mxu0 %v2567
        %v2569 = vpop.f32.mrb[0].mxu0
        %v2570 = vadd.f32 %v2487, %v2569
        %v2571 = vpop.f32.mrb[0].mxu0
        %2572 = vdwg.mxu0
        %2573 = vmatprep.subr.mxu0 0.0
        %v2574 = vand.u32 %v439, 4294901760
        %2575 = vmatpush1.msra.mxu0 %v2574
        %2576 = vmatprep.subr.mxu0 0.0
        %v2577 = vand.u32 %v440, 4294901760
        %2578 = vmatpush1.msra.mxu0 %v2577
        %2579 = vmatprep.subr.mxu0 0.0
        %2580 = vmatpush1.msra.mxu0 0.0
        %2581 = vmatprep.subr.mxu0 0.0
        %2582 = vmatpush1.msra.mxu0 0.0
        %2583 = vmatprep.subr.mxu0 0.0
        %2584 = vmatpush1.msra.mxu0 0.0
        %2585 = vmatprep.subr.mxu0 0.0
        %2586 = vmatpush1.msra.mxu0 0.0
        %2587 = vmatprep.subr.mxu0 0.0
        %2588 = vmatpush1.msra.mxu0 0.0
        %2589 = vmatprep.subr.mxu0 0.0
        %2590 = vmatpush1.msra.mxu0 0.0
        %2591 = vmatprep.subr.mxu0 0.0
        %2592 = vmatpush1.msra.mxu0 0.0
        %2593 = vmatprep.subr.mxu0 0.0
        %2594 = vmatpush1.msra.mxu0 0.0
        %2595 = vmatprep.subr.mxu0 0.0
        %2596 = vmatpush1.msra.mxu0 0.0
        %2597 = vmatprep.subr.mxu0 0.0
        %2598 = vmatpush1.msra.mxu0 0.0
        %2599 = vmatprep.subr.mxu0 0.0
        %2600 = vmatpush1.msra.mxu0 0.0
        %2601 = vmatprep.subr.mxu0 0.0
        %2602 = vmatpush1.msra.mxu0 0.0
        %2603 = vmatprep.subr.mxu0 0.0
        %2604 = vmatpush1.msra.mxu0 0.0
        %2605 = vmatprep.subr.mxu0 0.0
        %2606 = vmatpush1.msra.mxu0 0.0
        %2607 = vmatprep.subr.mxu0 0.0
        %2608 = vmatpush1.msra.mxu0 0.0
        %2609 = vmatprep.subr.mxu0 0.0
        %2610 = vmatpush1.msra.mxu0 0.0
        %2611 = vmatprep.subr.mxu0 0.0
        %2612 = vmatpush1.msra.mxu0 0.0
        %2613 = vmatprep.subr.mxu0 0.0
        %2614 = vmatpush1.msra.mxu0 0.0
        %2615 = vmatprep.subr.mxu0 0.0
        %2616 = vmatpush1.msra.mxu0 0.0
        %2617 = vmatprep.subr.mxu0 0.0
        %2618 = vmatpush1.msra.mxu0 0.0
        %2619 = vmatprep.subr.mxu0 0.0
        %2620 = vmatpush1.msra.mxu0 0.0
        %2621 = vmatprep.subr.mxu0 0.0
        %2622 = vmatpush1.msra.mxu0 0.0
        %2623 = vmatprep.subr.mxu0 0.0
        %2624 = vmatpush1.msra.mxu0 0.0
        %2625 = vmatprep.subr.mxu0 0.0
        %2626 = vmatpush1.msra.mxu0 0.0
        %2627 = vmatprep.subr.mxu0 0.0
        %2628 = vmatpush1.msra.mxu0 0.0
        %2629 = vmatprep.subr.mxu0 0.0
        %2630 = vmatpush1.msra.mxu0 0.0
        %2631 = vmatprep.subr.mxu0 0.0
        %2632 = vmatpush1.msra.mxu0 0.0
        %2633 = vmatprep.subr.mxu0 0.0
        %2634 = vmatpush1.msra.mxu0 0.0
        %2635 = vmatprep.subr.mxu0 0.0
        %2636 = vmatpush1.msra.mxu0 0.0
        %2637 = vmatprep.subr.mxu0 0.0
        %2638 = vmatpush1.msra.mxu0 0.0
        %2639 = vmatprep.mubr.f32.mxu0 0.0
        %v2640 = vand.u32 %v2311, 4294901760
        %v2641 = vsub.f32 %v2311, %v2640
        %v2642 = vand.u32 %v2641, 4294901760
        %2643 = vmatmul.mubr.f32.gmra.mrb[0].mxu0 %v2642
        %v2644 = vpop.f32.mrb[0].mxu0
        %v2645 = vadd.f32 %v2563, %v2644
        %v2646 = vpop.f32.mrb[0].mxu0
        %2647 = vmatprep.mubr.f32.mxu0 0.0
        %v2648 = vand.u32 %v2314, 4294901760
        %v2649 = vsub.f32 %v2314, %v2648
        %v2650 = vand.u32 %v2649, 4294901760
        %2651 = vmatmul.mubr.f32.gmra.mrb[0].mxu0 %v2650
        %v2652 = vpop.f32.mrb[0].mxu0
        %v2653 = vadd.f32 %v2570, %v2652
        %v2654 = vpop.f32.mrb[0].mxu0
        %2655 = vdwg.mxu0
        %2656 = vmatprep.subr.mxu0 0.0
        %v2657 = vand.u32 %v439, 4294901760
        %v2658 = vsub.f32 %v439, %v2657
        %v2659 = vand.u32 %v2658, 4294901760
        %2660 = vmatpush1.msra.mxu0 %v2659
        %2661 = vmatprep.subr.mxu0 0.0
        %v2662 = vand.u32 %v440, 4294901760
        %v2663 = vsub.f32 %v440, %v2662
        %v2664 = vand.u32 %v2663, 4294901760
        %2665 = vmatpush1.msra.mxu0 %v2664
        %2666 = vmatprep.subr.mxu0 0.0
        %2667 = vmatpush1.msra.mxu0 0.0
        %2668 = vmatprep.subr.mxu0 0.0
        %2669 = vmatpush1.msra.mxu0 0.0
        %2670 = vmatprep.subr.mxu0 0.0
        %2671 = vmatpush1.msra.mxu0 0.0
        %2672 = vmatprep.subr.mxu0 0.0
        %2673 = vmatpush1.msra.mxu0 0.0
        %2674 = vmatprep.subr.mxu0 0.0
        %2675 = vmatpush1.msra.mxu0 0.0
        %2676 = vmatprep.subr.mxu0 0.0
        %2677 = vmatpush1.msra.mxu0 0.0
        %2678 = vmatprep.subr.mxu0 0.0
        %2679 = vmatpush1.msra.mxu0 0.0
        %2680 = vmatprep.subr.mxu0 0.0
        %2681 = vmatpush1.msra.mxu0 0.0
        %2682 = vmatprep.subr.mxu0 0.0
        %2683 = vmatpush1.msra.mxu0 0.0
        %2684 = vmatprep.subr.mxu0 0.0
        %2685 = vmatpush1.msra.mxu0 0.0
        %2686 = vmatprep.subr.mxu0 0.0
        %2687 = vmatpush1.msra.mxu0 0.0
        %2688 = vmatprep.subr.mxu0 0.0
        %2689 = vmatpush1.msra.mxu0 0.0
        %2690 = vmatprep.subr.mxu0 0.0
        %2691 = vmatpush1.msra.mxu0 0.0
        %2692 = vmatprep.subr.mxu0 0.0
        %2693 = vmatpush1.msra.mxu0 0.0
        %2694 = vmatprep.subr.mxu0 0.0
        %2695 = vmatpush1.msra.mxu0 0.0
        %2696 = vmatprep.subr.mxu0 0.0
        %2697 = vmatpush1.msra.mxu0 0.0
        %2698 = vmatprep.subr.mxu0 0.0
        %2699 = vmatpush1.msra.mxu0 0.0
        %2700 = vmatprep.subr.mxu0 0.0
        %2701 = vmatpush1.msra.mxu0 0.0
        %2702 = vmatprep.subr.mxu0 0.0
        %2703 = vmatpush1.msra.mxu0 0.0
        %2704 = vmatprep.subr.mxu0 0.0
        %2705 = vmatpush1.msra.mxu0 0.0
        %2706 = vmatprep.subr.mxu0 0.0
        %2707 = vmatpush1.msra.mxu0 0.0
        %2708 = vmatprep.subr.mxu0 0.0
        %2709 = vmatpush1.msra.mxu0 0.0
        %2710 = vmatprep.subr.mxu0 0.0
        %2711 = vmatpush1.msra.mxu0 0.0
        %2712 = vmatprep.subr.mxu0 0.0
        %2713 = vmatpush1.msra.mxu0 0.0
        %2714 = vmatprep.subr.mxu0 0.0
        %2715 = vmatpush1.msra.mxu0 0.0
        %2716 = vmatprep.subr.mxu0 0.0
        %2717 = vmatpush1.msra.mxu0 0.0
        %2718 = vmatprep.subr.mxu0 0.0
        %2719 = vmatpush1.msra.mxu0 0.0
        %2720 = vmatprep.subr.mxu0 0.0
        %2721 = vmatpush1.msra.mxu0 0.0
        %2722 = vmatprep.subr.mxu0 0.0
        %2723 = vmatpush1.msra.mxu0 0.0
        %2724 = vmatprep.subr.mxu0 0.0
        %2725 = vmatpush1.msra.mxu0 0.0
        %2726 = vmatprep.mubr.f32.mxu0 0.0
        %v2727 = vand.u32 %v2311, 4294901760
        %2728 = vmatmul.mubr.f32.gmra.mrb[0].mxu0 %v2727
        %v2729 = vpop.f32.mrb[0].mxu0
        %v2730 = vadd.f32 %v2645, %v2729
        %v2731 = vpop.f32.mrb[0].mxu0
        %2732 = vmatprep.mubr.f32.mxu0 0.0
        %v2733 = vand.u32 %v2314, 4294901760
        %2734 = vmatmul.mubr.f32.gmra.mrb[0].mxu0 %v2733
        %v2735 = vpop.f32.mrb[0].mxu0
        %v2736 = vadd.f32 %v2653, %v2735
        %v2737 = vpop.f32.mrb[0].mxu0
        %2738 = vdwg.mxu0
        %2739 = vmatprep.subr.mxu0 0.0
        %v2740 = vand.u32 %v439, 4294901760
        %2741 = vmatpush1.msra.mxu0 %v2740
        %2742 = vmatprep.subr.mxu0 0.0
        %v2743 = vand.u32 %v440, 4294901760
        %2744 = vmatpush1.msra.mxu0 %v2743
        %2745 = vmatprep.subr.mxu0 0.0
        %2746 = vmatpush1.msra.mxu0 0.0
        %2747 = vmatprep.subr.mxu0 0.0
        %2748 = vmatpush1.msra.mxu0 0.0
        %2749 = vmatprep.subr.mxu0 0.0
        %2750 = vmatpush1.msra.mxu0 0.0
        %2751 = vmatprep.subr.mxu0 0.0
        %2752 = vmatpush1.msra.mxu0 0.0
        %2753 = vmatprep.subr.mxu0 0.0
        %2754 = vmatpush1.msra.mxu0 0.0
        %2755 = vmatprep.subr.mxu0 0.0
        %2756 = vmatpush1.msra.mxu0 0.0
        %2757 = vmatprep.subr.mxu0 0.0
        %2758 = vmatpush1.msra.mxu0 0.0
        %2759 = vmatprep.subr.mxu0 0.0
        %2760 = vmatpush1.msra.mxu0 0.0
        %2761 = vmatprep.subr.mxu0 0.0
        %2762 = vmatpush1.msra.mxu0 0.0
        %2763 = vmatprep.subr.mxu0 0.0
        %2764 = vmatpush1.msra.mxu0 0.0
        %2765 = vmatprep.subr.mxu0 0.0
        %2766 = vmatpush1.msra.mxu0 0.0
        %2767 = vmatprep.subr.mxu0 0.0
        %2768 = vmatpush1.msra.mxu0 0.0
        %2769 = vmatprep.subr.mxu0 0.0
        %2770 = vmatpush1.msra.mxu0 0.0
        %2771 = vmatprep.subr.mxu0 0.0
        %2772 = vmatpush1.msra.mxu0 0.0
        %2773 = vmatprep.subr.mxu0 0.0
        %2774 = vmatpush1.msra.mxu0 0.0
        %2775 = vmatprep.subr.mxu0 0.0
        %2776 = vmatpush1.msra.mxu0 0.0
        %2777 = vmatprep.subr.mxu0 0.0
        %2778 = vmatpush1.msra.mxu0 0.0
        %2779 = vmatprep.subr.mxu0 0.0
        %2780 = vmatpush1.msra.mxu0 0.0
        %2781 = vmatprep.subr.mxu0 0.0
        %2782 = vmatpush1.msra.mxu0 0.0
        %2783 = vmatprep.subr.mxu0 0.0
        %2784 = vmatpush1.msra.mxu0 0.0
        %2785 = vmatprep.subr.mxu0 0.0
        %2786 = vmatpush1.msra.mxu0 0.0
        %2787 = vmatprep.subr.mxu0 0.0
        %2788 = vmatpush1.msra.mxu0 0.0
        %2789 = vmatprep.subr.mxu0 0.0
        %2790 = vmatpush1.msra.mxu0 0.0
        %2791 = vmatprep.subr.mxu0 0.0
        %2792 = vmatpush1.msra.mxu0 0.0
        %2793 = vmatprep.subr.mxu0 0.0
        %2794 = vmatpush1.msra.mxu0 0.0
        %2795 = vmatprep.subr.mxu0 0.0
        %2796 = vmatpush1.msra.mxu0 0.0
        %2797 = vmatprep.subr.mxu0 0.0
        %2798 = vmatpush1.msra.mxu0 0.0
        %2799 = vmatprep.subr.mxu0 0.0
        %2800 = vmatpush1.msra.mxu0 0.0
        %2801 = vmatprep.subr.mxu0 0.0
        %2802 = vmatpush1.msra.mxu0 0.0
        %2803 = vmatprep.subr.mxu0 0.0
        %2804 = vmatpush1.msra.mxu0 0.0
        %2805 = vmatprep.mubr.f32.mxu0 0.0
        %v2806 = vand.u32 %v2311, 4294901760
        %2807 = vmatmul.mubr.f32.gmra.mrb[0].mxu0 %v2806
        %v2808 = vpop.f32.mrb[0].mxu0
        %v2809 = vadd.f32 %v2730, %v2808
        %v2810 = vpop.f32.mrb[0].mxu0
        %2811 = vmatprep.mubr.f32.mxu0 0.0
        %v2812 = vand.u32 %v2314, 4294901760
        %2813 = vmatmul.mubr.f32.gmra.mrb[0].mxu0 %v2812
        %v2814 = vpop.f32.mrb[0].mxu0
        %v2815 = vadd.f32 %v2736, %v2814
        %v2816 = vpop.f32.mrb[0].mxu0
        %2817 = vdwg.mxu0
        %v2818 = vsub.f32 %v2809, %v1564
        %v2819 = vsub.f32 %v2815, %v1566
        %v2820 = vadd.f32 %v998, %v2809
        %v2821 = vadd.f32 %v1004, %v2815
        %2823 = vset.pattern.permute.xlu0 16
        %2824 = vperm.xlu0 %2823, %v2818
        %v2825 = vpop.permute.xlu0 %2824
        %2828 = vset.pattern.permute.xlu0 16
        %2829 = vperm.xlu0 %2828, %v2819
        %v2830 = vpop.permute.xlu0 %2829
        %v2832 = vmul.f32 %v2825, %v1586
        %v2833 = vmul.f32 %v2830, %v1586
        %v2834 = vadd.f32 %v2820, %v2832
        %v2835 = vadd.f32 %v2821, %v2833
        %2836 = vset.pattern.permute.xlu0 17
        %2837 = vperm.xlu0 %2836, %v2818
        %v2838 = vpop.permute.xlu0 %2837
        %2840 = vset.pattern.permute.xlu0 17
        %2841 = vperm.xlu0 %2840, %v2819
        %v2842 = vpop.permute.xlu0 %2841
        %v2844 = vmul.f32 %v2838, %v1602
        %v2845 = vmul.f32 %v2842, %v1602
        %v2846 = vadd.f32 %v2834, %v2844
        %v2847 = vadd.f32 %v2835, %v2845
        %2848 = vset.pattern.permute.xlu0 18
        %2849 = vperm.xlu0 %2848, %v2818
        %v2850 = vpop.permute.xlu0 %2849
        %2852 = vset.pattern.permute.xlu0 18
        %2853 = vperm.xlu0 %2852, %v2819
        %v2854 = vpop.permute.xlu0 %2853
        %v2856 = vmul.f32 %v2850, %v1618
        %v2857 = vmul.f32 %v2854, %v1618
        %v2858 = vadd.f32 %v2846, %v2856
        %v2859 = vadd.f32 %v2847, %v2857
        %v2860 = vmul.f32 %v2818, %v2818
        %v2861 = vmul.f32 %v2819, %v2819
        %2864 = vrot.lane.b32.xlu0 %v2860, 112
        %v2865 = vpop.permute.xlu0 %2864
        %2866 = vrot.lane.b32.xlu0 %v2861, 112
        %v2867 = vpop.permute.xlu0 %2866
        %v2870 = vsel %vm1633, %v2865, 0.0
        %2871 = vadd.xlane.f32.xlu0 %v2870
        %v2872 = vpop.xlane.xlu0 %2871
        %v2873 = vsel %vm1633, %v2867, 0.0
        %2874 = vadd.xlane.f32.xlu0 %v2873
        %v2875 = vpop.xlane.xlu0 %2874
        %v2876 = vmax.f32 %v2872, 1e-20
        %v2877 = vmax.f32 %v2875, 1e-20
        %v2878 = vrsqrt.pop %v2876
        %v2879 = vrsqrt.pop %v2877
        %v2880 = vsel %vm2304, inf, %v2262
        %v2881 = vsel %vm2305, inf, %v2263
        %v2882 = vsel %vm1008, %v2880, inf
        %2883 = vmin.xlane.f32.xlu0 %v2882
        %v2884 = vpop.xlane.xlu0 %2883
        %v2885 = vsel %vm1008, %v2881, inf
        %2886 = vmin.xlane.f32.xlu0 %v2885
        %v2887 = vpop.xlane.xlu0 %2886
        %vm2888 = vcmp.eq.f32.partialorder %v2880, %v2884
        %vm2889 = vcmp.eq.f32.partialorder %v2881, %v2887
        %v2890 = vsel %vm2888, %v498, 16
        %v2891 = vsel %vm2889, %v498, 16
        %v2892 = vsel %vm1008, %v2890, 2147483647
        %v2893 = vand.u32 %v2892, 65535
        %v2894 = vshra.s32 %v2892, 16
        %v2895 = vcvt.s32.f32 %v2893
        %v2896 = vcvt.s32.f32 %v2894
        %2897 = vmin.xlane.f32.xlu0 %v2896
        %v2898 = vpop.xlane.xlu0 %2897
        %vm2899 = vcmp.eq.f32.partialorder %v2896, %v2898
        %v2900 = vsel %vm2899, %v2895, inf
        %2901 = vmin.xlane.f32.xlu0 %v2900
        %v2902 = vpop.xlane.xlu0 %2901
        %v2903 = vcvt.f32.s32 %v2902
        %v2904 = vcvt.f32.s32 %v2898
        %v2905 = vshll.u32 %v2904, 16
        %v2906 = vadd.s32 %v2905, %v2903
        %v2907 = vsel %vm1008, %v2891, 2147483647
        %v2908 = vand.u32 %v2907, 65535
        %v2909 = vshra.s32 %v2907, 16
        %v2910 = vcvt.s32.f32 %v2908
        %v2911 = vcvt.s32.f32 %v2909
        %2912 = vmin.xlane.f32.xlu0 %v2911
        %v2913 = vpop.xlane.xlu0 %2912
        %vm2914 = vcmp.eq.f32.partialorder %v2911, %v2913
        %v2915 = vsel %vm2914, %v2910, inf
        %2916 = vmin.xlane.f32.xlu0 %v2915
        %v2917 = vpop.xlane.xlu0 %2916
        %v2918 = vcvt.f32.s32 %v2917
        %v2919 = vcvt.f32.s32 %v2913
        %v2920 = vshll.u32 %v2919, 16
        %v2921 = vadd.s32 %v2920, %v2918
        %vm2922 = vcmp.eq.s32.totalorder %v498, %v2906
        %vm2923 = vcmp.eq.s32.totalorder %v498, %v2921
        %v2924 = vsel %vm2922, 1, 0
        %v2925 = vsel %vm2923, 1, 0
        %v2926 = vcvt.s32.f32 %v2924
        %v2927 = vcvt.s32.f32 %v2925
        %v2929 = vsel %vm1008, %v2926, 0
        %v2932 = vsel %vm1008, %v2927, 0
        %2934 = vmatprep.subr.mxu0 0.0
        %v2935 = vand.u32 %v439, 4294901760
        %2936 = vmatpush1.msra.mxu0 %v2935
        %2937 = vmatprep.subr.mxu0 0.0
        %v2938 = vand.u32 %v440, 4294901760
        %2939 = vmatpush1.msra.mxu0 %v2938
        %2940 = vmatprep.subr.mxu0 0.0
        %2941 = vmatpush1.msra.mxu0 0.0
        %2942 = vmatprep.subr.mxu0 0.0
        %2943 = vmatpush1.msra.mxu0 0.0
        %2944 = vmatprep.subr.mxu0 0.0
        %2945 = vmatpush1.msra.mxu0 0.0
        %2946 = vmatprep.subr.mxu0 0.0
        %2947 = vmatpush1.msra.mxu0 0.0
        %2948 = vmatprep.subr.mxu0 0.0
        %2949 = vmatpush1.msra.mxu0 0.0
        %2950 = vmatprep.subr.mxu0 0.0
        %2951 = vmatpush1.msra.mxu0 0.0
        %2952 = vmatprep.subr.mxu0 0.0
        %2953 = vmatpush1.msra.mxu0 0.0
        %2954 = vmatprep.subr.mxu0 0.0
        %2955 = vmatpush1.msra.mxu0 0.0
        %2956 = vmatprep.subr.mxu0 0.0
        %2957 = vmatpush1.msra.mxu0 0.0
        %2958 = vmatprep.subr.mxu0 0.0
        %2959 = vmatpush1.msra.mxu0 0.0
        %2960 = vmatprep.subr.mxu0 0.0
        %2961 = vmatpush1.msra.mxu0 0.0
        %2962 = vmatprep.subr.mxu0 0.0
        %2963 = vmatpush1.msra.mxu0 0.0
        %2964 = vmatprep.subr.mxu0 0.0
        %2965 = vmatpush1.msra.mxu0 0.0
        %2966 = vmatprep.subr.mxu0 0.0
        %2967 = vmatpush1.msra.mxu0 0.0
        %2968 = vmatprep.subr.mxu0 0.0
        %2969 = vmatpush1.msra.mxu0 0.0
        %2970 = vmatprep.subr.mxu0 0.0
        %2971 = vmatpush1.msra.mxu0 0.0
        %2972 = vmatprep.subr.mxu0 0.0
        %2973 = vmatpush1.msra.mxu0 0.0
        %2974 = vmatprep.subr.mxu0 0.0
        %2975 = vmatpush1.msra.mxu0 0.0
        %2976 = vmatprep.subr.mxu0 0.0
        %2977 = vmatpush1.msra.mxu0 0.0
        %2978 = vmatprep.subr.mxu0 0.0
        %2979 = vmatpush1.msra.mxu0 0.0
        %2980 = vmatprep.subr.mxu0 0.0
        %2981 = vmatpush1.msra.mxu0 0.0
        %2982 = vmatprep.subr.mxu0 0.0
        %2983 = vmatpush1.msra.mxu0 0.0
        %2984 = vmatprep.subr.mxu0 0.0
        %2985 = vmatpush1.msra.mxu0 0.0
        %2986 = vmatprep.subr.mxu0 0.0
        %2987 = vmatpush1.msra.mxu0 0.0
        %2988 = vmatprep.subr.mxu0 0.0
        %2989 = vmatpush1.msra.mxu0 0.0
        %2990 = vmatprep.subr.mxu0 0.0
        %2991 = vmatpush1.msra.mxu0 0.0
        %2992 = vmatprep.subr.mxu0 0.0
        %2993 = vmatpush1.msra.mxu0 0.0
        %2994 = vmatprep.subr.mxu0 0.0
        %2995 = vmatpush1.msra.mxu0 0.0
        %2996 = vmatprep.subr.mxu0 0.0
        %2997 = vmatpush1.msra.mxu0 0.0
        %2998 = vmatprep.subr.mxu0 0.0
        %2999 = vmatpush1.msra.mxu0 0.0
        %3000 = vmatprep.mubr.f32.mxu0 0.0
        %v3001 = vand.u32 %v2929, 4294901760
        %v3002 = vsub.f32 %v2929, %v3001
        %v3003 = vand.u32 %v3002, 4294901760
        %v3004 = vsub.f32 %v3002, %v3003
        %v3005 = vand.u32 %v3004, 4294901760
        %3006 = vmatmul.mubr.f32.gmra.mrb[0].mxu0 %v3005
        %v3007 = vpop.f32.mrb[0].mxu0
        %v3008 = vadd.f32 0.0, %v3007
        %v3009 = vpop.f32.mrb[0].mxu0
        %3010 = vmatprep.mubr.f32.mxu0 0.0
        %v3011 = vand.u32 %v2932, 4294901760
        %v3012 = vsub.f32 %v2932, %v3011
        %v3013 = vand.u32 %v3012, 4294901760
        %v3014 = vsub.f32 %v3012, %v3013
        %v3015 = vand.u32 %v3014, 4294901760
        %3016 = vmatmul.mubr.f32.gmra.mrb[0].mxu0 %v3015
        %v3017 = vpop.f32.mrb[0].mxu0
        %v3018 = vadd.f32 0.0, %v3017
        %v3019 = vpop.f32.mrb[0].mxu0
        %3020 = vdwg.mxu0
        %3021 = vmatprep.subr.mxu0 0.0
        %v3022 = vand.u32 %v439, 4294901760
        %v3023 = vsub.f32 %v439, %v3022
        %v3024 = vand.u32 %v3023, 4294901760
        %v3025 = vsub.f32 %v3023, %v3024
        %v3026 = vand.u32 %v3025, 4294901760
        %3027 = vmatpush1.msra.mxu0 %v3026
        %3028 = vmatprep.subr.mxu0 0.0
        %v3029 = vand.u32 %v440, 4294901760
        %v3030 = vsub.f32 %v440, %v3029
        %v3031 = vand.u32 %v3030, 4294901760
        %v3032 = vsub.f32 %v3030, %v3031
        %v3033 = vand.u32 %v3032, 4294901760
        %3034 = vmatpush1.msra.mxu0 %v3033
        %3035 = vmatprep.subr.mxu0 0.0
        %3036 = vmatpush1.msra.mxu0 0.0
        %3037 = vmatprep.subr.mxu0 0.0
        %3038 = vmatpush1.msra.mxu0 0.0
        %3039 = vmatprep.subr.mxu0 0.0
        %3040 = vmatpush1.msra.mxu0 0.0
        %3041 = vmatprep.subr.mxu0 0.0
        %3042 = vmatpush1.msra.mxu0 0.0
        %3043 = vmatprep.subr.mxu0 0.0
        %3044 = vmatpush1.msra.mxu0 0.0
        %3045 = vmatprep.subr.mxu0 0.0
        %3046 = vmatpush1.msra.mxu0 0.0
        %3047 = vmatprep.subr.mxu0 0.0
        %3048 = vmatpush1.msra.mxu0 0.0
        %3049 = vmatprep.subr.mxu0 0.0
        %3050 = vmatpush1.msra.mxu0 0.0
        %3051 = vmatprep.subr.mxu0 0.0
        %3052 = vmatpush1.msra.mxu0 0.0
        %3053 = vmatprep.subr.mxu0 0.0
        %3054 = vmatpush1.msra.mxu0 0.0
        %3055 = vmatprep.subr.mxu0 0.0
        %3056 = vmatpush1.msra.mxu0 0.0
        %3057 = vmatprep.subr.mxu0 0.0
        %3058 = vmatpush1.msra.mxu0 0.0
        %3059 = vmatprep.subr.mxu0 0.0
        %3060 = vmatpush1.msra.mxu0 0.0
        %3061 = vmatprep.subr.mxu0 0.0
        %3062 = vmatpush1.msra.mxu0 0.0
        %3063 = vmatprep.subr.mxu0 0.0
        %3064 = vmatpush1.msra.mxu0 0.0
        %3065 = vmatprep.subr.mxu0 0.0
        %3066 = vmatpush1.msra.mxu0 0.0
        %3067 = vmatprep.subr.mxu0 0.0
        %3068 = vmatpush1.msra.mxu0 0.0
        %3069 = vmatprep.subr.mxu0 0.0
        %3070 = vmatpush1.msra.mxu0 0.0
        %3071 = vmatprep.subr.mxu0 0.0
        %3072 = vmatpush1.msra.mxu0 0.0
        %3073 = vmatprep.subr.mxu0 0.0
        %3074 = vmatpush1.msra.mxu0 0.0
        %3075 = vmatprep.subr.mxu0 0.0
        %3076 = vmatpush1.msra.mxu0 0.0
        %3077 = vmatprep.subr.mxu0 0.0
        %3078 = vmatpush1.msra.mxu0 0.0
        %3079 = vmatprep.subr.mxu0 0.0
        %3080 = vmatpush1.msra.mxu0 0.0
        %3081 = vmatprep.subr.mxu0 0.0
        %3082 = vmatpush1.msra.mxu0 0.0
        %3083 = vmatprep.subr.mxu0 0.0
        %3084 = vmatpush1.msra.mxu0 0.0
        %3085 = vmatprep.subr.mxu0 0.0
        %3086 = vmatpush1.msra.mxu0 0.0
        %3087 = vmatprep.subr.mxu0 0.0
        %3088 = vmatpush1.msra.mxu0 0.0
        %3089 = vmatprep.subr.mxu0 0.0
        %3090 = vmatpush1.msra.mxu0 0.0
        %3091 = vmatprep.subr.mxu0 0.0
        %3092 = vmatpush1.msra.mxu0 0.0
        %3093 = vmatprep.subr.mxu0 0.0
        %3094 = vmatpush1.msra.mxu0 0.0
        %3095 = vmatprep.mubr.f32.mxu0 0.0
        %v3096 = vand.u32 %v2929, 4294901760
        %3097 = vmatmul.mubr.f32.gmra.mrb[0].mxu0 %v3096
        %v3098 = vpop.f32.mrb[0].mxu0
        %v3099 = vadd.f32 %v3008, %v3098
        %v3100 = vpop.f32.mrb[0].mxu0
        %3101 = vmatprep.mubr.f32.mxu0 0.0
        %v3102 = vand.u32 %v2932, 4294901760
        %3103 = vmatmul.mubr.f32.gmra.mrb[0].mxu0 %v3102
        %v3104 = vpop.f32.mrb[0].mxu0
        %v3105 = vadd.f32 %v3018, %v3104
        %v3106 = vpop.f32.mrb[0].mxu0
        %3107 = vdwg.mxu0
        %3108 = vmatprep.subr.mxu0 0.0
        %v3109 = vand.u32 %v439, 4294901760
        %v3110 = vsub.f32 %v439, %v3109
        %3111 = vmatpush1.msra.mxu0 %v3110
        %3112 = vmatprep.subr.mxu0 0.0
        %v3113 = vand.u32 %v440, 4294901760
        %v3114 = vsub.f32 %v440, %v3113
        %3115 = vmatpush1.msra.mxu0 %v3114
        %3116 = vmatprep.subr.mxu0 0.0
        %3117 = vmatpush1.msra.mxu0 0.0
        %3118 = vmatprep.subr.mxu0 0.0
        %3119 = vmatpush1.msra.mxu0 0.0
        %3120 = vmatprep.subr.mxu0 0.0
        %3121 = vmatpush1.msra.mxu0 0.0
        %3122 = vmatprep.subr.mxu0 0.0
        %3123 = vmatpush1.msra.mxu0 0.0
        %3124 = vmatprep.subr.mxu0 0.0
        %3125 = vmatpush1.msra.mxu0 0.0
        %3126 = vmatprep.subr.mxu0 0.0
        %3127 = vmatpush1.msra.mxu0 0.0
        %3128 = vmatprep.subr.mxu0 0.0
        %3129 = vmatpush1.msra.mxu0 0.0
        %3130 = vmatprep.subr.mxu0 0.0
        %3131 = vmatpush1.msra.mxu0 0.0
        %3132 = vmatprep.subr.mxu0 0.0
        %3133 = vmatpush1.msra.mxu0 0.0
        %3134 = vmatprep.subr.mxu0 0.0
        %3135 = vmatpush1.msra.mxu0 0.0
        %3136 = vmatprep.subr.mxu0 0.0
        %3137 = vmatpush1.msra.mxu0 0.0
        %3138 = vmatprep.subr.mxu0 0.0
        %3139 = vmatpush1.msra.mxu0 0.0
        %3140 = vmatprep.subr.mxu0 0.0
        %3141 = vmatpush1.msra.mxu0 0.0
        %3142 = vmatprep.subr.mxu0 0.0
        %3143 = vmatpush1.msra.mxu0 0.0
        %3144 = vmatprep.subr.mxu0 0.0
        %3145 = vmatpush1.msra.mxu0 0.0
        %3146 = vmatprep.subr.mxu0 0.0
        %3147 = vmatpush1.msra.mxu0 0.0
        %3148 = vmatprep.subr.mxu0 0.0
        %3149 = vmatpush1.msra.mxu0 0.0
        %3150 = vmatprep.subr.mxu0 0.0
        %3151 = vmatpush1.msra.mxu0 0.0
        %3152 = vmatprep.subr.mxu0 0.0
        %3153 = vmatpush1.msra.mxu0 0.0
        %3154 = vmatprep.subr.mxu0 0.0
        %3155 = vmatpush1.msra.mxu0 0.0
        %3156 = vmatprep.subr.mxu0 0.0
        %3157 = vmatpush1.msra.mxu0 0.0
        %3158 = vmatprep.subr.mxu0 0.0
        %3159 = vmatpush1.msra.mxu0 0.0
        %3160 = vmatprep.subr.mxu0 0.0
        %3161 = vmatpush1.msra.mxu0 0.0
        %3162 = vmatprep.subr.mxu0 0.0
        %3163 = vmatpush1.msra.mxu0 0.0
        %3164 = vmatprep.subr.mxu0 0.0
        %3165 = vmatpush1.msra.mxu0 0.0
        %3166 = vmatprep.subr.mxu0 0.0
        %3167 = vmatpush1.msra.mxu0 0.0
        %3168 = vmatprep.subr.mxu0 0.0
        %3169 = vmatpush1.msra.mxu0 0.0
        %3170 = vmatprep.subr.mxu0 0.0
        %3171 = vmatpush1.msra.mxu0 0.0
        %3172 = vmatprep.subr.mxu0 0.0
        %3173 = vmatpush1.msra.mxu0 0.0
        %3174 = vmatprep.subr.mxu0 0.0
        %3175 = vmatpush1.msra.mxu0 0.0
        %3176 = vmatprep.mubr.f32.mxu0 0.0
        %v3177 = vand.u32 %v2929, 4294901760
        %v3178 = vsub.f32 %v2929, %v3177
        %3179 = vmatmul.mubr.f32.gmra.mrb[0].mxu0 %v3178
        %v3180 = vpop.f32.mrb[0].mxu0
        %v3181 = vadd.f32 %v3099, %v3180
        %v3182 = vpop.f32.mrb[0].mxu0
        %3183 = vmatprep.mubr.f32.mxu0 0.0
        %v3184 = vand.u32 %v2932, 4294901760
        %v3185 = vsub.f32 %v2932, %v3184
        %3186 = vmatmul.mubr.f32.gmra.mrb[0].mxu0 %v3185
        %v3187 = vpop.f32.mrb[0].mxu0
        %v3188 = vadd.f32 %v3105, %v3187
        %v3189 = vpop.f32.mrb[0].mxu0
        %3190 = vdwg.mxu0
        %3191 = vmatprep.subr.mxu0 0.0
        %v3192 = vand.u32 %v439, 4294901760
        %3193 = vmatpush1.msra.mxu0 %v3192
        %3194 = vmatprep.subr.mxu0 0.0
        %v3195 = vand.u32 %v440, 4294901760
        %3196 = vmatpush1.msra.mxu0 %v3195
        %3197 = vmatprep.subr.mxu0 0.0
        %3198 = vmatpush1.msra.mxu0 0.0
        %3199 = vmatprep.subr.mxu0 0.0
        %3200 = vmatpush1.msra.mxu0 0.0
        %3201 = vmatprep.subr.mxu0 0.0
        %3202 = vmatpush1.msra.mxu0 0.0
        %3203 = vmatprep.subr.mxu0 0.0
        %3204 = vmatpush1.msra.mxu0 0.0
        %3205 = vmatprep.subr.mxu0 0.0
        %3206 = vmatpush1.msra.mxu0 0.0
        %3207 = vmatprep.subr.mxu0 0.0
        %3208 = vmatpush1.msra.mxu0 0.0
        %3209 = vmatprep.subr.mxu0 0.0
        %3210 = vmatpush1.msra.mxu0 0.0
        %3211 = vmatprep.subr.mxu0 0.0
        %3212 = vmatpush1.msra.mxu0 0.0
        %3213 = vmatprep.subr.mxu0 0.0
        %3214 = vmatpush1.msra.mxu0 0.0
        %3215 = vmatprep.subr.mxu0 0.0
        %3216 = vmatpush1.msra.mxu0 0.0
        %3217 = vmatprep.subr.mxu0 0.0
        %3218 = vmatpush1.msra.mxu0 0.0
        %3219 = vmatprep.subr.mxu0 0.0
        %3220 = vmatpush1.msra.mxu0 0.0
        %3221 = vmatprep.subr.mxu0 0.0
        %3222 = vmatpush1.msra.mxu0 0.0
        %3223 = vmatprep.subr.mxu0 0.0
        %3224 = vmatpush1.msra.mxu0 0.0
        %3225 = vmatprep.subr.mxu0 0.0
        %3226 = vmatpush1.msra.mxu0 0.0
        %3227 = vmatprep.subr.mxu0 0.0
        %3228 = vmatpush1.msra.mxu0 0.0
        %3229 = vmatprep.subr.mxu0 0.0
        %3230 = vmatpush1.msra.mxu0 0.0
        %3231 = vmatprep.subr.mxu0 0.0
        %3232 = vmatpush1.msra.mxu0 0.0
        %3233 = vmatprep.subr.mxu0 0.0
        %3234 = vmatpush1.msra.mxu0 0.0
        %3235 = vmatprep.subr.mxu0 0.0
        %3236 = vmatpush1.msra.mxu0 0.0
        %3237 = vmatprep.subr.mxu0 0.0
        %3238 = vmatpush1.msra.mxu0 0.0
        %3239 = vmatprep.subr.mxu0 0.0
        %3240 = vmatpush1.msra.mxu0 0.0
        %3241 = vmatprep.subr.mxu0 0.0
        %3242 = vmatpush1.msra.mxu0 0.0
        %3243 = vmatprep.subr.mxu0 0.0
        %3244 = vmatpush1.msra.mxu0 0.0
        %3245 = vmatprep.subr.mxu0 0.0
        %3246 = vmatpush1.msra.mxu0 0.0
        %3247 = vmatprep.subr.mxu0 0.0
        %3248 = vmatpush1.msra.mxu0 0.0
        %3249 = vmatprep.subr.mxu0 0.0
        %3250 = vmatpush1.msra.mxu0 0.0
        %3251 = vmatprep.subr.mxu0 0.0
        %3252 = vmatpush1.msra.mxu0 0.0
        %3253 = vmatprep.subr.mxu0 0.0
        %3254 = vmatpush1.msra.mxu0 0.0
        %3255 = vmatprep.subr.mxu0 0.0
        %3256 = vmatpush1.msra.mxu0 0.0
        %3257 = vmatprep.mubr.f32.mxu0 0.0
        %v3258 = vand.u32 %v2929, 4294901760
        %v3259 = vsub.f32 %v2929, %v3258
        %v3260 = vand.u32 %v3259, 4294901760
        %3261 = vmatmul.mubr.f32.gmra.mrb[0].mxu0 %v3260
        %v3262 = vpop.f32.mrb[0].mxu0
        %v3263 = vadd.f32 %v3181, %v3262
        %v3264 = vpop.f32.mrb[0].mxu0
        %3265 = vmatprep.mubr.f32.mxu0 0.0
        %v3266 = vand.u32 %v2932, 4294901760
        %v3267 = vsub.f32 %v2932, %v3266
        %v3268 = vand.u32 %v3267, 4294901760
        %3269 = vmatmul.mubr.f32.gmra.mrb[0].mxu0 %v3268
        %v3270 = vpop.f32.mrb[0].mxu0
        %v3271 = vadd.f32 %v3188, %v3270
        %v3272 = vpop.f32.mrb[0].mxu0
        %3273 = vdwg.mxu0
        %3274 = vmatprep.subr.mxu0 0.0
        %v3275 = vand.u32 %v439, 4294901760
        %v3276 = vsub.f32 %v439, %v3275
        %v3277 = vand.u32 %v3276, 4294901760
        %3278 = vmatpush1.msra.mxu0 %v3277
        %3279 = vmatprep.subr.mxu0 0.0
        %v3280 = vand.u32 %v440, 4294901760
        %v3281 = vsub.f32 %v440, %v3280
        %v3282 = vand.u32 %v3281, 4294901760
        %3283 = vmatpush1.msra.mxu0 %v3282
        %3284 = vmatprep.subr.mxu0 0.0
        %3285 = vmatpush1.msra.mxu0 0.0
        %3286 = vmatprep.subr.mxu0 0.0
        %3287 = vmatpush1.msra.mxu0 0.0
        %3288 = vmatprep.subr.mxu0 0.0
        %3289 = vmatpush1.msra.mxu0 0.0
        %3290 = vmatprep.subr.mxu0 0.0
        %3291 = vmatpush1.msra.mxu0 0.0
        %3292 = vmatprep.subr.mxu0 0.0
        %3293 = vmatpush1.msra.mxu0 0.0
        %3294 = vmatprep.subr.mxu0 0.0
        %3295 = vmatpush1.msra.mxu0 0.0
        %3296 = vmatprep.subr.mxu0 0.0
        %3297 = vmatpush1.msra.mxu0 0.0
        %3298 = vmatprep.subr.mxu0 0.0
        %3299 = vmatpush1.msra.mxu0 0.0
        %3300 = vmatprep.subr.mxu0 0.0
        %3301 = vmatpush1.msra.mxu0 0.0
        %3302 = vmatprep.subr.mxu0 0.0
        %3303 = vmatpush1.msra.mxu0 0.0
        %3304 = vmatprep.subr.mxu0 0.0
        %3305 = vmatpush1.msra.mxu0 0.0
        %3306 = vmatprep.subr.mxu0 0.0
        %3307 = vmatpush1.msra.mxu0 0.0
        %3308 = vmatprep.subr.mxu0 0.0
        %3309 = vmatpush1.msra.mxu0 0.0
        %3310 = vmatprep.subr.mxu0 0.0
        %3311 = vmatpush1.msra.mxu0 0.0
        %3312 = vmatprep.subr.mxu0 0.0
        %3313 = vmatpush1.msra.mxu0 0.0
        %3314 = vmatprep.subr.mxu0 0.0
        %3315 = vmatpush1.msra.mxu0 0.0
        %3316 = vmatprep.subr.mxu0 0.0
        %3317 = vmatpush1.msra.mxu0 0.0
        %3318 = vmatprep.subr.mxu0 0.0
        %3319 = vmatpush1.msra.mxu0 0.0
        %3320 = vmatprep.subr.mxu0 0.0
        %3321 = vmatpush1.msra.mxu0 0.0
        %3322 = vmatprep.subr.mxu0 0.0
        %3323 = vmatpush1.msra.mxu0 0.0
        %3324 = vmatprep.subr.mxu0 0.0
        %3325 = vmatpush1.msra.mxu0 0.0
        %3326 = vmatprep.subr.mxu0 0.0
        %3327 = vmatpush1.msra.mxu0 0.0
        %3328 = vmatprep.subr.mxu0 0.0
        %3329 = vmatpush1.msra.mxu0 0.0
        %3330 = vmatprep.subr.mxu0 0.0
        %3331 = vmatpush1.msra.mxu0 0.0
        %3332 = vmatprep.subr.mxu0 0.0
        %3333 = vmatpush1.msra.mxu0 0.0
        %3334 = vmatprep.subr.mxu0 0.0
        %3335 = vmatpush1.msra.mxu0 0.0
        %3336 = vmatprep.subr.mxu0 0.0
        %3337 = vmatpush1.msra.mxu0 0.0
        %3338 = vmatprep.subr.mxu0 0.0
        %3339 = vmatpush1.msra.mxu0 0.0
        %3340 = vmatprep.subr.mxu0 0.0
        %3341 = vmatpush1.msra.mxu0 0.0
        %3342 = vmatprep.subr.mxu0 0.0
        %3343 = vmatpush1.msra.mxu0 0.0
        %3344 = vmatprep.mubr.f32.mxu0 0.0
        %v3345 = vand.u32 %v2929, 4294901760
        %3346 = vmatmul.mubr.f32.gmra.mrb[0].mxu0 %v3345
        %v3347 = vpop.f32.mrb[0].mxu0
        %v3348 = vadd.f32 %v3263, %v3347
        %v3349 = vpop.f32.mrb[0].mxu0
        %3350 = vmatprep.mubr.f32.mxu0 0.0
        %v3351 = vand.u32 %v2932, 4294901760
        %3352 = vmatmul.mubr.f32.gmra.mrb[0].mxu0 %v3351
        %v3353 = vpop.f32.mrb[0].mxu0
        %v3354 = vadd.f32 %v3271, %v3353
        %v3355 = vpop.f32.mrb[0].mxu0
        %3356 = vdwg.mxu0
        %3357 = vmatprep.subr.mxu0 0.0
        %v3358 = vand.u32 %v439, 4294901760
        %3359 = vmatpush1.msra.mxu0 %v3358
        %3360 = vmatprep.subr.mxu0 0.0
        %v3361 = vand.u32 %v440, 4294901760
        %3362 = vmatpush1.msra.mxu0 %v3361
        %3363 = vmatprep.subr.mxu0 0.0
        %3364 = vmatpush1.msra.mxu0 0.0
        %3365 = vmatprep.subr.mxu0 0.0
        %3366 = vmatpush1.msra.mxu0 0.0
        %3367 = vmatprep.subr.mxu0 0.0
        %3368 = vmatpush1.msra.mxu0 0.0
        %3369 = vmatprep.subr.mxu0 0.0
        %3370 = vmatpush1.msra.mxu0 0.0
        %3371 = vmatprep.subr.mxu0 0.0
        %3372 = vmatpush1.msra.mxu0 0.0
        %3373 = vmatprep.subr.mxu0 0.0
        %3374 = vmatpush1.msra.mxu0 0.0
        %3375 = vmatprep.subr.mxu0 0.0
        %3376 = vmatpush1.msra.mxu0 0.0
        %3377 = vmatprep.subr.mxu0 0.0
        %3378 = vmatpush1.msra.mxu0 0.0
        %3379 = vmatprep.subr.mxu0 0.0
        %3380 = vmatpush1.msra.mxu0 0.0
        %3381 = vmatprep.subr.mxu0 0.0
        %3382 = vmatpush1.msra.mxu0 0.0
        %3383 = vmatprep.subr.mxu0 0.0
        %3384 = vmatpush1.msra.mxu0 0.0
        %3385 = vmatprep.subr.mxu0 0.0
        %3386 = vmatpush1.msra.mxu0 0.0
        %3387 = vmatprep.subr.mxu0 0.0
        %3388 = vmatpush1.msra.mxu0 0.0
        %3389 = vmatprep.subr.mxu0 0.0
        %3390 = vmatpush1.msra.mxu0 0.0
        %3391 = vmatprep.subr.mxu0 0.0
        %3392 = vmatpush1.msra.mxu0 0.0
        %3393 = vmatprep.subr.mxu0 0.0
        %3394 = vmatpush1.msra.mxu0 0.0
        %3395 = vmatprep.subr.mxu0 0.0
        %3396 = vmatpush1.msra.mxu0 0.0
        %3397 = vmatprep.subr.mxu0 0.0
        %3398 = vmatpush1.msra.mxu0 0.0
        %3399 = vmatprep.subr.mxu0 0.0
        %3400 = vmatpush1.msra.mxu0 0.0
        %3401 = vmatprep.subr.mxu0 0.0
        %3402 = vmatpush1.msra.mxu0 0.0
        %3403 = vmatprep.subr.mxu0 0.0
        %3404 = vmatpush1.msra.mxu0 0.0
        %3405 = vmatprep.subr.mxu0 0.0
        %3406 = vmatpush1.msra.mxu0 0.0
        %3407 = vmatprep.subr.mxu0 0.0
        %3408 = vmatpush1.msra.mxu0 0.0
        %3409 = vmatprep.subr.mxu0 0.0
        %3410 = vmatpush1.msra.mxu0 0.0
        %3411 = vmatprep.subr.mxu0 0.0
        %3412 = vmatpush1.msra.mxu0 0.0
        %3413 = vmatprep.subr.mxu0 0.0
        %3414 = vmatpush1.msra.mxu0 0.0
        %3415 = vmatprep.subr.mxu0 0.0
        %3416 = vmatpush1.msra.mxu0 0.0
        %3417 = vmatprep.subr.mxu0 0.0
        %3418 = vmatpush1.msra.mxu0 0.0
        %3419 = vmatprep.subr.mxu0 0.0
        %3420 = vmatpush1.msra.mxu0 0.0
        %3421 = vmatprep.subr.mxu0 0.0
        %3422 = vmatpush1.msra.mxu0 0.0
        %3423 = vmatprep.mubr.f32.mxu0 0.0
        %v3424 = vand.u32 %v2929, 4294901760
        %3425 = vmatmul.mubr.f32.gmra.mrb[0].mxu0 %v3424
        %v3426 = vpop.f32.mrb[0].mxu0
        %v3427 = vadd.f32 %v3348, %v3426
        %v3428 = vpop.f32.mrb[0].mxu0
        %3429 = vmatprep.mubr.f32.mxu0 0.0
        %v3430 = vand.u32 %v2932, 4294901760
        %3431 = vmatmul.mubr.f32.gmra.mrb[0].mxu0 %v3430
        %v3432 = vpop.f32.mrb[0].mxu0
        %v3433 = vadd.f32 %v3354, %v3432
        %v3434 = vpop.f32.mrb[0].mxu0
        %3435 = vdwg.mxu0
        %v3436 = vsub.f32 %v3427, %v1564
        %v3437 = vsub.f32 %v3433, %v1566
        %v3438 = vadd.f32 %v998, %v3427
        %v3439 = vadd.f32 %v1004, %v3433
        %3441 = vset.pattern.permute.xlu0 16
        %3442 = vperm.xlu0 %3441, %v3436
        %v3443 = vpop.permute.xlu0 %3442
        %3446 = vset.pattern.permute.xlu0 16
        %3447 = vperm.xlu0 %3446, %v3437
        %v3448 = vpop.permute.xlu0 %3447
        %v3450 = vmul.f32 %v3443, %v1586
        %v3451 = vmul.f32 %v3448, %v1586
        %v3452 = vadd.f32 %v3438, %v3450
        %v3453 = vadd.f32 %v3439, %v3451
        %3454 = vset.pattern.permute.xlu0 17
        %3455 = vperm.xlu0 %3454, %v3436
        %v3456 = vpop.permute.xlu0 %3455
        %3458 = vset.pattern.permute.xlu0 17
        %3459 = vperm.xlu0 %3458, %v3437
        %v3460 = vpop.permute.xlu0 %3459
        %v3462 = vmul.f32 %v3456, %v1602
        %v3463 = vmul.f32 %v3460, %v1602
        %v3464 = vadd.f32 %v3452, %v3462
        %v3465 = vadd.f32 %v3453, %v3463
        %3466 = vset.pattern.permute.xlu0 18
        %3467 = vperm.xlu0 %3466, %v3436
        %v3468 = vpop.permute.xlu0 %3467
        %3470 = vset.pattern.permute.xlu0 18
        %3471 = vperm.xlu0 %3470, %v3437
        %v3472 = vpop.permute.xlu0 %3471
        %v3474 = vmul.f32 %v3468, %v1618
        %v3475 = vmul.f32 %v3472, %v1618
        %v3476 = vadd.f32 %v3464, %v3474
        %v3477 = vadd.f32 %v3465, %v3475
        %v3478 = vmul.f32 %v3436, %v3436
        %v3479 = vmul.f32 %v3437, %v3437
        %3482 = vrot.lane.b32.xlu0 %v3478, 112
        %v3483 = vpop.permute.xlu0 %3482
        %3484 = vrot.lane.b32.xlu0 %v3479, 112
        %v3485 = vpop.permute.xlu0 %3484
        %v3488 = vsel %vm1633, %v3483, 0.0
        %3489 = vadd.xlane.f32.xlu0 %v3488
        %v3490 = vpop.xlane.xlu0 %3489
        %v3491 = vsel %vm1633, %v3485, 0.0
        %3492 = vadd.xlane.f32.xlu0 %v3491
        %v3493 = vpop.xlane.xlu0 %3492
        %v3494 = vmax.f32 %v3490, 1e-20
        %v3495 = vmax.f32 %v3493, 1e-20
        %v3496 = vrsqrt.pop %v3494
        %v3497 = vrsqrt.pop %v3495
        %v3498 = vmul.f32 %v1621, 0.1
        %v3499 = vmul.f32 %v1622, 0.1
        %v3500 = vmul.f32 %v2240, 0.1
        %v3501 = vmul.f32 %v2241, 0.1
        %v3502 = vmul.f32 %v2858, 0.1
        %v3503 = vmul.f32 %v2859, 0.1
        %v3504 = vmul.f32 %v3476, 0.1
        %v3505 = vmul.f32 %v3477, 0.1
        %v3506 = vmax.f32 %v1621, %v3498
        %v3507 = vmax.f32 %v1622, %v3499
        %v3508 = vmax.f32 %v2240, %v3500
        %v3509 = vmax.f32 %v2241, %v3501
        %v3510 = vmax.f32 %v2858, %v3502
        %v3511 = vmax.f32 %v2859, %v3503
        %v3512 = vmax.f32 %v3476, %v3504
        %v3513 = vmax.f32 %v3477, %v3505
        %v3514 = vld [vmem:[%s7] sm:$0xff]
        %v3515 = vld [vmem:[%s7 + $0x8] sm:$0xff]
        %v3516 = vld [vmem:[%s8] sm:$0x1]
        %v3518 = vlaneseq
        %v3519 = vshrl.u32 %v3518, 7
        %v3520 = vsub.s32 0, %v3519
        %v3521 = vrot.slane %v3516, %v3520
        %v3524 = vsel %vm1008, %v3506, 0
        %v3527 = vsel %vm1008, %v3507, 0
        %v3530 = vsel %vm1008, %v3508, 0
        %v3533 = vsel %vm1008, %v3509, 0
        %v3536 = vsel %vm1008, %v3510, 0
        %v3539 = vsel %vm1008, %v3511, 0
        %v3542 = vsel %vm1008, %v3512, 0
        %v3545 = vsel %vm1008, %v3513, 0
        %3547 = vmatprep.subr.mxu0 0.0
        %v3548 = vand.u32 %v3514, 4294901760
        %3549 = vmatpush1.msra.mxu0 %v3548
        %3550 = vmatprep.subr.mxu0 0.0
        %v3551 = vand.u32 %v3515, 4294901760
        %3552 = vmatpush1.msra.mxu0 %v3551
        %3553 = vmatprep.subr.mxu0 0.0
        %3554 = vmatpush1.msra.mxu0 0.0
        %3555 = vmatprep.subr.mxu0 0.0
        %3556 = vmatpush1.msra.mxu0 0.0
        %3557 = vmatprep.subr.mxu0 0.0
        %3558 = vmatpush1.msra.mxu0 0.0
        %3559 = vmatprep.subr.mxu0 0.0
        %3560 = vmatpush1.msra.mxu0 0.0
        %3561 = vmatprep.subr.mxu0 0.0
        %3562 = vmatpush1.msra.mxu0 0.0
        %3563 = vmatprep.subr.mxu0 0.0
        %3564 = vmatpush1.msra.mxu0 0.0
        %3565 = vmatprep.subr.mxu0 0.0
        %3566 = vmatpush1.msra.mxu0 0.0
        %3567 = vmatprep.subr.mxu0 0.0
        %3568 = vmatpush1.msra.mxu0 0.0
        %3569 = vmatprep.subr.mxu0 0.0
        %3570 = vmatpush1.msra.mxu0 0.0
        %3571 = vmatprep.subr.mxu0 0.0
        %3572 = vmatpush1.msra.mxu0 0.0
        %3573 = vmatprep.subr.mxu0 0.0
        %3574 = vmatpush1.msra.mxu0 0.0
        %3575 = vmatprep.subr.mxu0 0.0
        %3576 = vmatpush1.msra.mxu0 0.0
        %3577 = vmatprep.subr.mxu0 0.0
        %3578 = vmatpush1.msra.mxu0 0.0
        %3579 = vmatprep.subr.mxu0 0.0
        %3580 = vmatpush1.msra.mxu0 0.0
        %3581 = vmatprep.subr.mxu0 0.0
        %3582 = vmatpush1.msra.mxu0 0.0
        %3583 = vmatprep.subr.mxu0 0.0
        %3584 = vmatpush1.msra.mxu0 0.0
        %3585 = vmatprep.subr.mxu0 0.0
        %3586 = vmatpush1.msra.mxu0 0.0
        %3587 = vmatprep.subr.mxu0 0.0
        %3588 = vmatpush1.msra.mxu0 0.0
        %3589 = vmatprep.subr.mxu0 0.0
        %3590 = vmatpush1.msra.mxu0 0.0
        %3591 = vmatprep.subr.mxu0 0.0
        %3592 = vmatpush1.msra.mxu0 0.0
        %3593 = vmatprep.subr.mxu0 0.0
        %3594 = vmatpush1.msra.mxu0 0.0
        %3595 = vmatprep.subr.mxu0 0.0
        %3596 = vmatpush1.msra.mxu0 0.0
        %3597 = vmatprep.subr.mxu0 0.0
        %3598 = vmatpush1.msra.mxu0 0.0
        %3599 = vmatprep.subr.mxu0 0.0
        %3600 = vmatpush1.msra.mxu0 0.0
        %3601 = vmatprep.subr.mxu0 0.0
        %3602 = vmatpush1.msra.mxu0 0.0
        %3603 = vmatprep.subr.mxu0 0.0
        %3604 = vmatpush1.msra.mxu0 0.0
        %3605 = vmatprep.subr.mxu0 0.0
        %3606 = vmatpush1.msra.mxu0 0.0
        %3607 = vmatprep.subr.mxu0 0.0
        %3608 = vmatpush1.msra.mxu0 0.0
        %3609 = vmatprep.subr.mxu0 0.0
        %3610 = vmatpush1.msra.mxu0 0.0
        %3611 = vmatprep.subr.mxu0 0.0
        %3612 = vmatpush1.msra.mxu0 0.0
        %3613 = vmatprep.mubr.f32.mxu0 0.0
        %v3614 = vand.u32 %v3524, 4294901760
        %v3615 = vsub.f32 %v3524, %v3614
        %v3616 = vand.u32 %v3615, 4294901760
        %v3617 = vsub.f32 %v3615, %v3616
        %v3618 = vand.u32 %v3617, 4294901760
        %3619 = vmatmul.mubr.f32.gmra.mrb[0].mxu0 %v3618
        %v3620 = vpop.f32.mrb[0].mxu0
        %v3621 = vadd.f32 %v3521, %v3620
        %v3622 = vpop.f32.mrb[0].mxu0
        %3623 = vmatprep.mubr.f32.mxu0 0.0
        %v3624 = vand.u32 %v3527, 4294901760
        %v3625 = vsub.f32 %v3527, %v3624
        %v3626 = vand.u32 %v3625, 4294901760
        %v3627 = vsub.f32 %v3625, %v3626
        %v3628 = vand.u32 %v3627, 4294901760
        %3629 = vmatmul.mubr.f32.gmra.mrb[0].mxu0 %v3628
        %v3630 = vpop.f32.mrb[0].mxu0
        %v3631 = vadd.f32 %v3521, %v3630
        %v3632 = vpop.f32.mrb[0].mxu0
        %3633 = vmatprep.mubr.f32.mxu0 0.0
        %v3634 = vand.u32 %v3530, 4294901760
        %v3635 = vsub.f32 %v3530, %v3634
        %v3636 = vand.u32 %v3635, 4294901760
        %v3637 = vsub.f32 %v3635, %v3636
        %v3638 = vand.u32 %v3637, 4294901760
        %3639 = vmatmul.mubr.f32.gmra.mrb[0].mxu0 %v3638
        %v3640 = vpop.f32.mrb[0].mxu0
        %v3641 = vadd.f32 %v3521, %v3640
        %v3642 = vpop.f32.mrb[0].mxu0
        %3643 = vmatprep.mubr.f32.mxu0 0.0
        %v3644 = vand.u32 %v3533, 4294901760
        %v3645 = vsub.f32 %v3533, %v3644
        %v3646 = vand.u32 %v3645, 4294901760
        %v3647 = vsub.f32 %v3645, %v3646
        %v3648 = vand.u32 %v3647, 4294901760
        %3649 = vmatmul.mubr.f32.gmra.mrb[0].mxu0 %v3648
        %v3650 = vpop.f32.mrb[0].mxu0
        %v3651 = vadd.f32 %v3521, %v3650
        %v3652 = vpop.f32.mrb[0].mxu0
        %3653 = vmatprep.mubr.f32.mxu0 0.0
        %v3654 = vand.u32 %v3536, 4294901760
        %v3655 = vsub.f32 %v3536, %v3654
        %v3656 = vand.u32 %v3655, 4294901760
        %v3657 = vsub.f32 %v3655, %v3656
        %v3658 = vand.u32 %v3657, 4294901760
        %3659 = vmatmul.mubr.f32.gmra.mrb[0].mxu0 %v3658
        %v3660 = vpop.f32.mrb[0].mxu0
        %v3661 = vadd.f32 %v3521, %v3660
        %v3662 = vpop.f32.mrb[0].mxu0
        %3663 = vmatprep.mubr.f32.mxu0 0.0
        %v3664 = vand.u32 %v3539, 4294901760
        %v3665 = vsub.f32 %v3539, %v3664
        %v3666 = vand.u32 %v3665, 4294901760
        %v3667 = vsub.f32 %v3665, %v3666
        %v3668 = vand.u32 %v3667, 4294901760
        %3669 = vmatmul.mubr.f32.gmra.mrb[0].mxu0 %v3668
        %v3670 = vpop.f32.mrb[0].mxu0
        %v3671 = vadd.f32 %v3521, %v3670
        %v3672 = vpop.f32.mrb[0].mxu0
        %3673 = vmatprep.mubr.f32.mxu0 0.0
        %v3674 = vand.u32 %v3542, 4294901760
        %v3675 = vsub.f32 %v3542, %v3674
        %v3676 = vand.u32 %v3675, 4294901760
        %v3677 = vsub.f32 %v3675, %v3676
        %v3678 = vand.u32 %v3677, 4294901760
        %3679 = vmatmul.mubr.f32.gmra.mrb[0].mxu0 %v3678
        %v3680 = vpop.f32.mrb[0].mxu0
        %v3681 = vadd.f32 %v3521, %v3680
        %v3682 = vpop.f32.mrb[0].mxu0
        %3683 = vmatprep.mubr.f32.mxu0 0.0
        %v3684 = vand.u32 %v3545, 4294901760
        %v3685 = vsub.f32 %v3545, %v3684
        %v3686 = vand.u32 %v3685, 4294901760
        %v3687 = vsub.f32 %v3685, %v3686
        %v3688 = vand.u32 %v3687, 4294901760
        %3689 = vmatmul.mubr.f32.gmra.mrb[0].mxu0 %v3688
        %v3690 = vpop.f32.mrb[0].mxu0
        %v3691 = vadd.f32 %v3521, %v3690
        %v3692 = vpop.f32.mrb[0].mxu0
        %3693 = vdwg.mxu0
        %3694 = vmatprep.subr.mxu0 0.0
        %v3695 = vand.u32 %v3514, 4294901760
        %v3696 = vsub.f32 %v3514, %v3695
        %v3697 = vand.u32 %v3696, 4294901760
        %v3698 = vsub.f32 %v3696, %v3697
        %v3699 = vand.u32 %v3698, 4294901760
        %3700 = vmatpush1.msra.mxu0 %v3699
        %3701 = vmatprep.subr.mxu0 0.0
        %v3702 = vand.u32 %v3515, 4294901760
        %v3703 = vsub.f32 %v3515, %v3702
        %v3704 = vand.u32 %v3703, 4294901760
        %v3705 = vsub.f32 %v3703, %v3704
        %v3706 = vand.u32 %v3705, 4294901760
        %3707 = vmatpush1.msra.mxu0 %v3706
        %3708 = vmatprep.subr.mxu0 0.0
        %3709 = vmatpush1.msra.mxu0 0.0
        %3710 = vmatprep.subr.mxu0 0.0
        %3711 = vmatpush1.msra.mxu0 0.0
        %3712 = vmatprep.subr.mxu0 0.0
        %3713 = vmatpush1.msra.mxu0 0.0
        %3714 = vmatprep.subr.mxu0 0.0
        %3715 = vmatpush1.msra.mxu0 0.0
        %3716 = vmatprep.subr.mxu0 0.0
        %3717 = vmatpush1.msra.mxu0 0.0
        %3718 = vmatprep.subr.mxu0 0.0
        %3719 = vmatpush1.msra.mxu0 0.0
        %3720 = vmatprep.subr.mxu0 0.0
        %3721 = vmatpush1.msra.mxu0 0.0
        %3722 = vmatprep.subr.mxu0 0.0
        %3723 = vmatpush1.msra.mxu0 0.0
        %3724 = vmatprep.subr.mxu0 0.0
        %3725 = vmatpush1.msra.mxu0 0.0
        %3726 = vmatprep.subr.mxu0 0.0
        %3727 = vmatpush1.msra.mxu0 0.0
        %3728 = vmatprep.subr.mxu0 0.0
        %3729 = vmatpush1.msra.mxu0 0.0
        %3730 = vmatprep.subr.mxu0 0.0
        %3731 = vmatpush1.msra.mxu0 0.0
        %3732 = vmatprep.subr.mxu0 0.0
        %3733 = vmatpush1.msra.mxu0 0.0
        %3734 = vmatprep.subr.mxu0 0.0
        %3735 = vmatpush1.msra.mxu0 0.0
        %3736 = vmatprep.subr.mxu0 0.0
        %3737 = vmatpush1.msra.mxu0 0.0
        %3738 = vmatprep.subr.mxu0 0.0
        %3739 = vmatpush1.msra.mxu0 0.0
        %3740 = vmatprep.subr.mxu0 0.0
        %3741 = vmatpush1.msra.mxu0 0.0
        %3742 = vmatprep.subr.mxu0 0.0
        %3743 = vmatpush1.msra.mxu0 0.0
        %3744 = vmatprep.subr.mxu0 0.0
        %3745 = vmatpush1.msra.mxu0 0.0
        %3746 = vmatprep.subr.mxu0 0.0
        %3747 = vmatpush1.msra.mxu0 0.0
        %3748 = vmatprep.subr.mxu0 0.0
        %3749 = vmatpush1.msra.mxu0 0.0
        %3750 = vmatprep.subr.mxu0 0.0
        %3751 = vmatpush1.msra.mxu0 0.0
        %3752 = vmatprep.subr.mxu0 0.0
        %3753 = vmatpush1.msra.mxu0 0.0
        %3754 = vmatprep.subr.mxu0 0.0
        %3755 = vmatpush1.msra.mxu0 0.0
        %3756 = vmatprep.subr.mxu0 0.0
        %3757 = vmatpush1.msra.mxu0 0.0
        %3758 = vmatprep.subr.mxu0 0.0
        %3759 = vmatpush1.msra.mxu0 0.0
        %3760 = vmatprep.subr.mxu0 0.0
        %3761 = vmatpush1.msra.mxu0 0.0
        %3762 = vmatprep.subr.mxu0 0.0
        %3763 = vmatpush1.msra.mxu0 0.0
        %3764 = vmatprep.subr.mxu0 0.0
        %3765 = vmatpush1.msra.mxu0 0.0
        %3766 = vmatprep.subr.mxu0 0.0
        %3767 = vmatpush1.msra.mxu0 0.0
        %3768 = vmatprep.mubr.f32.mxu0 0.0
        %v3769 = vand.u32 %v3524, 4294901760
        %3770 = vmatmul.mubr.f32.gmra.mrb[0].mxu0 %v3769
        %v3771 = vpop.f32.mrb[0].mxu0
        %v3772 = vadd.f32 %v3621, %v3771
        %v3773 = vpop.f32.mrb[0].mxu0
        %3774 = vmatprep.mubr.f32.mxu0 0.0
        %v3775 = vand.u32 %v3527, 4294901760
        %3776 = vmatmul.mubr.f32.gmra.mrb[0].mxu0 %v3775
        %v3777 = vpop.f32.mrb[0].mxu0
        %v3778 = vadd.f32 %v3631, %v3777
        %v3779 = vpop.f32.mrb[0].mxu0
        %3780 = vmatprep.mubr.f32.mxu0 0.0
        %v3781 = vand.u32 %v3530, 4294901760
        %3782 = vmatmul.mubr.f32.gmra.mrb[0].mxu0 %v3781
        %v3783 = vpop.f32.mrb[0].mxu0
        %v3784 = vadd.f32 %v3641, %v3783
        %v3785 = vpop.f32.mrb[0].mxu0
        %3786 = vmatprep.mubr.f32.mxu0 0.0
        %v3787 = vand.u32 %v3533, 4294901760
        %3788 = vmatmul.mubr.f32.gmra.mrb[0].mxu0 %v3787
        %v3789 = vpop.f32.mrb[0].mxu0
        %v3790 = vadd.f32 %v3651, %v3789
        %v3791 = vpop.f32.mrb[0].mxu0
        %3792 = vmatprep.mubr.f32.mxu0 0.0
        %v3793 = vand.u32 %v3536, 4294901760
        %3794 = vmatmul.mubr.f32.gmra.mrb[0].mxu0 %v3793
        %v3795 = vpop.f32.mrb[0].mxu0
        %v3796 = vadd.f32 %v3661, %v3795
        %v3797 = vpop.f32.mrb[0].mxu0
        %3798 = vmatprep.mubr.f32.mxu0 0.0
        %v3799 = vand.u32 %v3539, 4294901760
        %3800 = vmatmul.mubr.f32.gmra.mrb[0].mxu0 %v3799
        %v3801 = vpop.f32.mrb[0].mxu0
        %v3802 = vadd.f32 %v3671, %v3801
        %v3803 = vpop.f32.mrb[0].mxu0
        %3804 = vmatprep.mubr.f32.mxu0 0.0
        %v3805 = vand.u32 %v3542, 4294901760
        %3806 = vmatmul.mubr.f32.gmra.mrb[0].mxu0 %v3805
        %v3807 = vpop.f32.mrb[0].mxu0
        %v3808 = vadd.f32 %v3681, %v3807
        %v3809 = vpop.f32.mrb[0].mxu0
        %3810 = vmatprep.mubr.f32.mxu0 0.0
        %v3811 = vand.u32 %v3545, 4294901760
        %3812 = vmatmul.mubr.f32.gmra.mrb[0].mxu0 %v3811
        %v3813 = vpop.f32.mrb[0].mxu0
        %v3814 = vadd.f32 %v3691, %v3813
        %v3815 = vpop.f32.mrb[0].mxu0
        %3816 = vdwg.mxu0
        %3817 = vmatprep.subr.mxu0 0.0
        %v3818 = vand.u32 %v3514, 4294901760
        %v3819 = vsub.f32 %v3514, %v3818
        %3820 = vmatpush1.msra.mxu0 %v3819
        %3821 = vmatprep.subr.mxu0 0.0
        %v3822 = vand.u32 %v3515, 4294901760
        %v3823 = vsub.f32 %v3515, %v3822
        %3824 = vmatpush1.msra.mxu0 %v3823
        %3825 = vmatprep.subr.mxu0 0.0
        %3826 = vmatpush1.msra.mxu0 0.0
        %3827 = vmatprep.subr.mxu0 0.0
        %3828 = vmatpush1.msra.mxu0 0.0
        %3829 = vmatprep.subr.mxu0 0.0
        %3830 = vmatpush1.msra.mxu0 0.0
        %3831 = vmatprep.subr.mxu0 0.0
        %3832 = vmatpush1.msra.mxu0 0.0
        %3833 = vmatprep.subr.mxu0 0.0
        %3834 = vmatpush1.msra.mxu0 0.0
        %3835 = vmatprep.subr.mxu0 0.0
        %3836 = vmatpush1.msra.mxu0 0.0
        %3837 = vmatprep.subr.mxu0 0.0
        %3838 = vmatpush1.msra.mxu0 0.0
        %3839 = vmatprep.subr.mxu0 0.0
        %3840 = vmatpush1.msra.mxu0 0.0
        %3841 = vmatprep.subr.mxu0 0.0
        %3842 = vmatpush1.msra.mxu0 0.0
        %3843 = vmatprep.subr.mxu0 0.0
        %3844 = vmatpush1.msra.mxu0 0.0
        %3845 = vmatprep.subr.mxu0 0.0
        %3846 = vmatpush1.msra.mxu0 0.0
        %3847 = vmatprep.subr.mxu0 0.0
        %3848 = vmatpush1.msra.mxu0 0.0
        %3849 = vmatprep.subr.mxu0 0.0
        %3850 = vmatpush1.msra.mxu0 0.0
        %3851 = vmatprep.subr.mxu0 0.0
        %3852 = vmatpush1.msra.mxu0 0.0
        %3853 = vmatprep.subr.mxu0 0.0
        %3854 = vmatpush1.msra.mxu0 0.0
        %3855 = vmatprep.subr.mxu0 0.0
        %3856 = vmatpush1.msra.mxu0 0.0
        %3857 = vmatprep.subr.mxu0 0.0
        %3858 = vmatpush1.msra.mxu0 0.0
        %3859 = vmatprep.subr.mxu0 0.0
        %3860 = vmatpush1.msra.mxu0 0.0
        %3861 = vmatprep.subr.mxu0 0.0
        %3862 = vmatpush1.msra.mxu0 0.0
        %3863 = vmatprep.subr.mxu0 0.0
        %3864 = vmatpush1.msra.mxu0 0.0
        %3865 = vmatprep.subr.mxu0 0.0
        %3866 = vmatpush1.msra.mxu0 0.0
        %3867 = vmatprep.subr.mxu0 0.0
        %3868 = vmatpush1.msra.mxu0 0.0
        %3869 = vmatprep.subr.mxu0 0.0
        %3870 = vmatpush1.msra.mxu0 0.0
        %3871 = vmatprep.subr.mxu0 0.0
        %3872 = vmatpush1.msra.mxu0 0.0
        %3873 = vmatprep.subr.mxu0 0.0
        %3874 = vmatpush1.msra.mxu0 0.0
        %3875 = vmatprep.subr.mxu0 0.0
        %3876 = vmatpush1.msra.mxu0 0.0
        %3877 = vmatprep.subr.mxu0 0.0
        %3878 = vmatpush1.msra.mxu0 0.0
        %3879 = vmatprep.subr.mxu0 0.0
        %3880 = vmatpush1.msra.mxu0 0.0
        %3881 = vmatprep.subr.mxu0 0.0
        %3882 = vmatpush1.msra.mxu0 0.0
        %3883 = vmatprep.subr.mxu0 0.0
        %3884 = vmatpush1.msra.mxu0 0.0
        %3885 = vmatprep.mubr.f32.mxu0 0.0
        %v3886 = vand.u32 %v3524, 4294901760
        %v3887 = vsub.f32 %v3524, %v3886
        %3888 = vmatmul.mubr.f32.gmra.mrb[0].mxu0 %v3887
        %v3889 = vpop.f32.mrb[0].mxu0
        %v3890 = vadd.f32 %v3772, %v3889
        %v3891 = vpop.f32.mrb[0].mxu0
        %3892 = vmatprep.mubr.f32.mxu0 0.0
        %v3893 = vand.u32 %v3527, 4294901760
        %v3894 = vsub.f32 %v3527, %v3893
        %3895 = vmatmul.mubr.f32.gmra.mrb[0].mxu0 %v3894
        %v3896 = vpop.f32.mrb[0].mxu0
        %v3897 = vadd.f32 %v3778, %v3896
        %v3898 = vpop.f32.mrb[0].mxu0
        %3899 = vmatprep.mubr.f32.mxu0 0.0
        %v3900 = vand.u32 %v3530, 4294901760
        %v3901 = vsub.f32 %v3530, %v3900
        %3902 = vmatmul.mubr.f32.gmra.mrb[0].mxu0 %v3901
        %v3903 = vpop.f32.mrb[0].mxu0
        %v3904 = vadd.f32 %v3784, %v3903
        %v3905 = vpop.f32.mrb[0].mxu0
        %3906 = vmatprep.mubr.f32.mxu0 0.0
        %v3907 = vand.u32 %v3533, 4294901760
        %v3908 = vsub.f32 %v3533, %v3907
        %3909 = vmatmul.mubr.f32.gmra.mrb[0].mxu0 %v3908
        %v3910 = vpop.f32.mrb[0].mxu0
        %v3911 = vadd.f32 %v3790, %v3910
        %v3912 = vpop.f32.mrb[0].mxu0
        %3913 = vmatprep.mubr.f32.mxu0 0.0
        %v3914 = vand.u32 %v3536, 4294901760
        %v3915 = vsub.f32 %v3536, %v3914
        %3916 = vmatmul.mubr.f32.gmra.mrb[0].mxu0 %v3915
        %v3917 = vpop.f32.mrb[0].mxu0
        %v3918 = vadd.f32 %v3796, %v3917
        %v3919 = vpop.f32.mrb[0].mxu0
        %3920 = vmatprep.mubr.f32.mxu0 0.0
        %v3921 = vand.u32 %v3539, 4294901760
        %v3922 = vsub.f32 %v3539, %v3921
        %3923 = vmatmul.mubr.f32.gmra.mrb[0].mxu0 %v3922
        %v3924 = vpop.f32.mrb[0].mxu0
        %v3925 = vadd.f32 %v3802, %v3924
        %v3926 = vpop.f32.mrb[0].mxu0
        %3927 = vmatprep.mubr.f32.mxu0 0.0
        %v3928 = vand.u32 %v3542, 4294901760
        %v3929 = vsub.f32 %v3542, %v3928
        %3930 = vmatmul.mubr.f32.gmra.mrb[0].mxu0 %v3929
        %v3931 = vpop.f32.mrb[0].mxu0
        %v3932 = vadd.f32 %v3808, %v3931
        %v3933 = vpop.f32.mrb[0].mxu0
        %3934 = vmatprep.mubr.f32.mxu0 0.0
        %v3935 = vand.u32 %v3545, 4294901760
        %v3936 = vsub.f32 %v3545, %v3935
        %3937 = vmatmul.mubr.f32.gmra.mrb[0].mxu0 %v3936
        %v3938 = vpop.f32.mrb[0].mxu0
        %v3939 = vadd.f32 %v3814, %v3938
        %v3940 = vpop.f32.mrb[0].mxu0
        %3941 = vdwg.mxu0
        %3942 = vmatprep.subr.mxu0 0.0
        %v3943 = vand.u32 %v3514, 4294901760
        %3944 = vmatpush1.msra.mxu0 %v3943
        %3945 = vmatprep.subr.mxu0 0.0
        %v3946 = vand.u32 %v3515, 4294901760
        %3947 = vmatpush1.msra.mxu0 %v3946
        %3948 = vmatprep.subr.mxu0 0.0
        %3949 = vmatpush1.msra.mxu0 0.0
        %3950 = vmatprep.subr.mxu0 0.0
        %3951 = vmatpush1.msra.mxu0 0.0
        %3952 = vmatprep.subr.mxu0 0.0
        %3953 = vmatpush1.msra.mxu0 0.0
        %3954 = vmatprep.subr.mxu0 0.0
        %3955 = vmatpush1.msra.mxu0 0.0
        %3956 = vmatprep.subr.mxu0 0.0
        %3957 = vmatpush1.msra.mxu0 0.0
        %3958 = vmatprep.subr.mxu0 0.0
        %3959 = vmatpush1.msra.mxu0 0.0
        %3960 = vmatprep.subr.mxu0 0.0
        %3961 = vmatpush1.msra.mxu0 0.0
        %3962 = vmatprep.subr.mxu0 0.0
        %3963 = vmatpush1.msra.mxu0 0.0
        %3964 = vmatprep.subr.mxu0 0.0
        %3965 = vmatpush1.msra.mxu0 0.0
        %3966 = vmatprep.subr.mxu0 0.0
        %3967 = vmatpush1.msra.mxu0 0.0
        %3968 = vmatprep.subr.mxu0 0.0
        %3969 = vmatpush1.msra.mxu0 0.0
        %3970 = vmatprep.subr.mxu0 0.0
        %3971 = vmatpush1.msra.mxu0 0.0
        %3972 = vmatprep.subr.mxu0 0.0
        %3973 = vmatpush1.msra.mxu0 0.0
        %3974 = vmatprep.subr.mxu0 0.0
        %3975 = vmatpush1.msra.mxu0 0.0
        %3976 = vmatprep.subr.mxu0 0.0
        %3977 = vmatpush1.msra.mxu0 0.0
        %3978 = vmatprep.subr.mxu0 0.0
        %3979 = vmatpush1.msra.mxu0 0.0
        %3980 = vmatprep.subr.mxu0 0.0
        %3981 = vmatpush1.msra.mxu0 0.0
        %3982 = vmatprep.subr.mxu0 0.0
        %3983 = vmatpush1.msra.mxu0 0.0
        %3984 = vmatprep.subr.mxu0 0.0
        %3985 = vmatpush1.msra.mxu0 0.0
        %3986 = vmatprep.subr.mxu0 0.0
        %3987 = vmatpush1.msra.mxu0 0.0
        %3988 = vmatprep.subr.mxu0 0.0
        %3989 = vmatpush1.msra.mxu0 0.0
        %3990 = vmatprep.subr.mxu0 0.0
        %3991 = vmatpush1.msra.mxu0 0.0
        %3992 = vmatprep.subr.mxu0 0.0
        %3993 = vmatpush1.msra.mxu0 0.0
        %3994 = vmatprep.subr.mxu0 0.0
        %3995 = vmatpush1.msra.mxu0 0.0
        %3996 = vmatprep.subr.mxu0 0.0
        %3997 = vmatpush1.msra.mxu0 0.0
        %3998 = vmatprep.subr.mxu0 0.0
        %3999 = vmatpush1.msra.mxu0 0.0
        %4000 = vmatprep.subr.mxu0 0.0
        %4001 = vmatpush1.msra.mxu0 0.0
        %4002 = vmatprep.subr.mxu0 0.0
        %4003 = vmatpush1.msra.mxu0 0.0
        %4004 = vmatprep.subr.mxu0 0.0
        %4005 = vmatpush1.msra.mxu0 0.0
        %4006 = vmatprep.subr.mxu0 0.0
        %4007 = vmatpush1.msra.mxu0 0.0
        %4008 = vmatprep.mubr.f32.mxu0 0.0
        %v4009 = vand.u32 %v3524, 4294901760
        %v4010 = vsub.f32 %v3524, %v4009
        %v4011 = vand.u32 %v4010, 4294901760
        %4012 = vmatmul.mubr.f32.gmra.mrb[0].mxu0 %v4011
        %v4013 = vpop.f32.mrb[0].mxu0
        %v4014 = vadd.f32 %v3890, %v4013
        %v4015 = vpop.f32.mrb[0].mxu0
        %4016 = vmatprep.mubr.f32.mxu0 0.0
        %v4017 = vand.u32 %v3527, 4294901760
        %v4018 = vsub.f32 %v3527, %v4017
        %v4019 = vand.u32 %v4018, 4294901760
        %4020 = vmatmul.mubr.f32.gmra.mrb[0].mxu0 %v4019
        %v4021 = vpop.f32.mrb[0].mxu0
        %v4022 = vadd.f32 %v3897, %v4021
        %v4023 = vpop.f32.mrb[0].mxu0
        %4024 = vmatprep.mubr.f32.mxu0 0.0
        %v4025 = vand.u32 %v3530, 4294901760
        %v4026 = vsub.f32 %v3530, %v4025
        %v4027 = vand.u32 %v4026, 4294901760
        %4028 = vmatmul.mubr.f32.gmra.mrb[0].mxu0 %v4027
        %v4029 = vpop.f32.mrb[0].mxu0
        %v4030 = vadd.f32 %v3904, %v4029
        %v4031 = vpop.f32.mrb[0].mxu0
        %4032 = vmatprep.mubr.f32.mxu0 0.0
        %v4033 = vand.u32 %v3533, 4294901760
        %v4034 = vsub.f32 %v3533, %v4033
        %v4035 = vand.u32 %v4034, 4294901760
        %4036 = vmatmul.mubr.f32.gmra.mrb[0].mxu0 %v4035
        %v4037 = vpop.f32.mrb[0].mxu0
        %v4038 = vadd.f32 %v3911, %v4037
        %v4039 = vpop.f32.mrb[0].mxu0
        %4040 = vmatprep.mubr.f32.mxu0 0.0
        %v4041 = vand.u32 %v3536, 4294901760
        %v4042 = vsub.f32 %v3536, %v4041
        %v4043 = vand.u32 %v4042, 4294901760
        %4044 = vmatmul.mubr.f32.gmra.mrb[0].mxu0 %v4043
        %v4045 = vpop.f32.mrb[0].mxu0
        %v4046 = vadd.f32 %v3918, %v4045
        %v4047 = vpop.f32.mrb[0].mxu0
        %4048 = vmatprep.mubr.f32.mxu0 0.0
        %v4049 = vand.u32 %v3539, 4294901760
        %v4050 = vsub.f32 %v3539, %v4049
        %v4051 = vand.u32 %v4050, 4294901760
        %4052 = vmatmul.mubr.f32.gmra.mrb[0].mxu0 %v4051
        %v4053 = vpop.f32.mrb[0].mxu0
        %v4054 = vadd.f32 %v3925, %v4053
        %v4055 = vpop.f32.mrb[0].mxu0
        %4056 = vmatprep.mubr.f32.mxu0 0.0
        %v4057 = vand.u32 %v3542, 4294901760
        %v4058 = vsub.f32 %v3542, %v4057
        %v4059 = vand.u32 %v4058, 4294901760
        %4060 = vmatmul.mubr.f32.gmra.mrb[0].mxu0 %v4059
        %v4061 = vpop.f32.mrb[0].mxu0
        %v4062 = vadd.f32 %v3932, %v4061
        %v4063 = vpop.f32.mrb[0].mxu0
        %4064 = vmatprep.mubr.f32.mxu0 0.0
        %v4065 = vand.u32 %v3545, 4294901760
        %v4066 = vsub.f32 %v3545, %v4065
        %v4067 = vand.u32 %v4066, 4294901760
        %4068 = vmatmul.mubr.f32.gmra.mrb[0].mxu0 %v4067
        %v4069 = vpop.f32.mrb[0].mxu0
        %v4070 = vadd.f32 %v3939, %v4069
        %v4071 = vpop.f32.mrb[0].mxu0
        %4072 = vdwg.mxu0
        %4073 = vmatprep.subr.mxu0 0.0
        %v4074 = vand.u32 %v3514, 4294901760
        %v4075 = vsub.f32 %v3514, %v4074
        %v4076 = vand.u32 %v4075, 4294901760
        %4077 = vmatpush1.msra.mxu0 %v4076
        %4078 = vmatprep.subr.mxu0 0.0
        %v4079 = vand.u32 %v3515, 4294901760
        %v4080 = vsub.f32 %v3515, %v4079
        %v4081 = vand.u32 %v4080, 4294901760
        %4082 = vmatpush1.msra.mxu0 %v4081
        %4083 = vmatprep.subr.mxu0 0.0
        %4084 = vmatpush1.msra.mxu0 0.0
        %4085 = vmatprep.subr.mxu0 0.0
        %4086 = vmatpush1.msra.mxu0 0.0
        %4087 = vmatprep.subr.mxu0 0.0
        %4088 = vmatpush1.msra.mxu0 0.0
        %4089 = vmatprep.subr.mxu0 0.0
        %4090 = vmatpush1.msra.mxu0 0.0
        %4091 = vmatprep.subr.mxu0 0.0
        %4092 = vmatpush1.msra.mxu0 0.0
        %4093 = vmatprep.subr.mxu0 0.0
        %4094 = vmatpush1.msra.mxu0 0.0
        %4095 = vmatprep.subr.mxu0 0.0
        %4096 = vmatpush1.msra.mxu0 0.0
        %4097 = vmatprep.subr.mxu0 0.0
        %4098 = vmatpush1.msra.mxu0 0.0
        %4099 = vmatprep.subr.mxu0 0.0
        %4100 = vmatpush1.msra.mxu0 0.0
        %4101 = vmatprep.subr.mxu0 0.0
        %4102 = vmatpush1.msra.mxu0 0.0
        %4103 = vmatprep.subr.mxu0 0.0
        %4104 = vmatpush1.msra.mxu0 0.0
        %4105 = vmatprep.subr.mxu0 0.0
        %4106 = vmatpush1.msra.mxu0 0.0
        %4107 = vmatprep.subr.mxu0 0.0
        %4108 = vmatpush1.msra.mxu0 0.0
        %4109 = vmatprep.subr.mxu0 0.0
        %4110 = vmatpush1.msra.mxu0 0.0
        %4111 = vmatprep.subr.mxu0 0.0
        %4112 = vmatpush1.msra.mxu0 0.0
        %4113 = vmatprep.subr.mxu0 0.0
        %4114 = vmatpush1.msra.mxu0 0.0
        %4115 = vmatprep.subr.mxu0 0.0
        %4116 = vmatpush1.msra.mxu0 0.0
        %4117 = vmatprep.subr.mxu0 0.0
        %4118 = vmatpush1.msra.mxu0 0.0
        %4119 = vmatprep.subr.mxu0 0.0
        %4120 = vmatpush1.msra.mxu0 0.0
        %4121 = vmatprep.subr.mxu0 0.0
        %4122 = vmatpush1.msra.mxu0 0.0
        %4123 = vmatprep.subr.mxu0 0.0
        %4124 = vmatpush1.msra.mxu0 0.0
        %4125 = vmatprep.subr.mxu0 0.0
        %4126 = vmatpush1.msra.mxu0 0.0
        %4127 = vmatprep.subr.mxu0 0.0
        %4128 = vmatpush1.msra.mxu0 0.0
        %4129 = vmatprep.subr.mxu0 0.0
        %4130 = vmatpush1.msra.mxu0 0.0
        %4131 = vmatprep.subr.mxu0 0.0
        %4132 = vmatpush1.msra.mxu0 0.0
        %4133 = vmatprep.subr.mxu0 0.0
        %4134 = vmatpush1.msra.mxu0 0.0
        %4135 = vmatprep.subr.mxu0 0.0
        %4136 = vmatpush1.msra.mxu0 0.0
        %4137 = vmatprep.subr.mxu0 0.0
        %4138 = vmatpush1.msra.mxu0 0.0
        %4139 = vmatprep.subr.mxu0 0.0
        %4140 = vmatpush1.msra.mxu0 0.0
        %4141 = vmatprep.subr.mxu0 0.0
        %4142 = vmatpush1.msra.mxu0 0.0
        %4143 = vmatprep.mubr.f32.mxu0 0.0
        %v4144 = vand.u32 %v3524, 4294901760
        %4145 = vmatmul.mubr.f32.gmra.mrb[0].mxu0 %v4144
        %v4146 = vpop.f32.mrb[0].mxu0
        %v4147 = vadd.f32 %v4014, %v4146
        %v4148 = vpop.f32.mrb[0].mxu0
        %4149 = vmatprep.mubr.f32.mxu0 0.0
        %v4150 = vand.u32 %v3527, 4294901760
        %4151 = vmatmul.mubr.f32.gmra.mrb[0].mxu0 %v4150
        %v4152 = vpop.f32.mrb[0].mxu0
        %v4153 = vadd.f32 %v4022, %v4152
        %v4154 = vpop.f32.mrb[0].mxu0
        %4155 = vmatprep.mubr.f32.mxu0 0.0
        %v4156 = vand.u32 %v3530, 4294901760
        %4157 = vmatmul.mubr.f32.gmra.mrb[0].mxu0 %v4156
        %v4158 = vpop.f32.mrb[0].mxu0
        %v4159 = vadd.f32 %v4030, %v4158
        %v4160 = vpop.f32.mrb[0].mxu0
        %4161 = vmatprep.mubr.f32.mxu0 0.0
        %v4162 = vand.u32 %v3533, 4294901760
        %4163 = vmatmul.mubr.f32.gmra.mrb[0].mxu0 %v4162
        %v4164 = vpop.f32.mrb[0].mxu0
        %v4165 = vadd.f32 %v4038, %v4164
        %v4166 = vpop.f32.mrb[0].mxu0
        %4167 = vmatprep.mubr.f32.mxu0 0.0
        %v4168 = vand.u32 %v3536, 4294901760
        %4169 = vmatmul.mubr.f32.gmra.mrb[0].mxu0 %v4168
        %v4170 = vpop.f32.mrb[0].mxu0
        %v4171 = vadd.f32 %v4046, %v4170
        %v4172 = vpop.f32.mrb[0].mxu0
        %4173 = vmatprep.mubr.f32.mxu0 0.0
        %v4174 = vand.u32 %v3539, 4294901760
        %4175 = vmatmul.mubr.f32.gmra.mrb[0].mxu0 %v4174
        %v4176 = vpop.f32.mrb[0].mxu0
        %v4177 = vadd.f32 %v4054, %v4176
        %v4178 = vpop.f32.mrb[0].mxu0
        %4179 = vmatprep.mubr.f32.mxu0 0.0
        %v4180 = vand.u32 %v3542, 4294901760
        %4181 = vmatmul.mubr.f32.gmra.mrb[0].mxu0 %v4180
        %v4182 = vpop.f32.mrb[0].mxu0
        %v4183 = vadd.f32 %v4062, %v4182
        %v4184 = vpop.f32.mrb[0].mxu0
        %4185 = vmatprep.mubr.f32.mxu0 0.0
        %v4186 = vand.u32 %v3545, 4294901760
        %4187 = vmatmul.mubr.f32.gmra.mrb[0].mxu0 %v4186
        %v4188 = vpop.f32.mrb[0].mxu0
        %v4189 = vadd.f32 %v4070, %v4188
        %v4190 = vpop.f32.mrb[0].mxu0
        %4191 = vdwg.mxu0
        %4192 = vmatprep.subr.mxu0 0.0
        %v4193 = vand.u32 %v3514, 4294901760
        %4194 = vmatpush1.msra.mxu0 %v4193
        %4195 = vmatprep.subr.mxu0 0.0
        %v4196 = vand.u32 %v3515, 4294901760
        %4197 = vmatpush1.msra.mxu0 %v4196
        %4198 = vmatprep.subr.mxu0 0.0
        %4199 = vmatpush1.msra.mxu0 0.0
        %4200 = vmatprep.subr.mxu0 0.0
        %4201 = vmatpush1.msra.mxu0 0.0
        %4202 = vmatprep.subr.mxu0 0.0
        %4203 = vmatpush1.msra.mxu0 0.0
        %4204 = vmatprep.subr.mxu0 0.0
        %4205 = vmatpush1.msra.mxu0 0.0
        %4206 = vmatprep.subr.mxu0 0.0
        %4207 = vmatpush1.msra.mxu0 0.0
        %4208 = vmatprep.subr.mxu0 0.0
        %4209 = vmatpush1.msra.mxu0 0.0
        %4210 = vmatprep.subr.mxu0 0.0
        %4211 = vmatpush1.msra.mxu0 0.0
        %4212 = vmatprep.subr.mxu0 0.0
        %4213 = vmatpush1.msra.mxu0 0.0
        %4214 = vmatprep.subr.mxu0 0.0
        %4215 = vmatpush1.msra.mxu0 0.0
        %4216 = vmatprep.subr.mxu0 0.0
        %4217 = vmatpush1.msra.mxu0 0.0
        %4218 = vmatprep.subr.mxu0 0.0
        %4219 = vmatpush1.msra.mxu0 0.0
        %4220 = vmatprep.subr.mxu0 0.0
        %4221 = vmatpush1.msra.mxu0 0.0
        %4222 = vmatprep.subr.mxu0 0.0
        %4223 = vmatpush1.msra.mxu0 0.0
        %4224 = vmatprep.subr.mxu0 0.0
        %4225 = vmatpush1.msra.mxu0 0.0
        %4226 = vmatprep.subr.mxu0 0.0
        %4227 = vmatpush1.msra.mxu0 0.0
        %4228 = vmatprep.subr.mxu0 0.0
        %4229 = vmatpush1.msra.mxu0 0.0
        %4230 = vmatprep.subr.mxu0 0.0
        %4231 = vmatpush1.msra.mxu0 0.0
        %4232 = vmatprep.subr.mxu0 0.0
        %4233 = vmatpush1.msra.mxu0 0.0
        %4234 = vmatprep.subr.mxu0 0.0
        %4235 = vmatpush1.msra.mxu0 0.0
        %4236 = vmatprep.subr.mxu0 0.0
        %4237 = vmatpush1.msra.mxu0 0.0
        %4238 = vmatprep.subr.mxu0 0.0
        %4239 = vmatpush1.msra.mxu0 0.0
        %4240 = vmatprep.subr.mxu0 0.0
        %4241 = vmatpush1.msra.mxu0 0.0
        %4242 = vmatprep.subr.mxu0 0.0
        %4243 = vmatpush1.msra.mxu0 0.0
        %4244 = vmatprep.subr.mxu0 0.0
        %4245 = vmatpush1.msra.mxu0 0.0
        %4246 = vmatprep.subr.mxu0 0.0
        %4247 = vmatpush1.msra.mxu0 0.0
        %4248 = vmatprep.subr.mxu0 0.0
        %4249 = vmatpush1.msra.mxu0 0.0
        %4250 = vmatprep.subr.mxu0 0.0
        %4251 = vmatpush1.msra.mxu0 0.0
        %4252 = vmatprep.subr.mxu0 0.0
        %4253 = vmatpush1.msra.mxu0 0.0
        %4254 = vmatprep.subr.mxu0 0.0
        %4255 = vmatpush1.msra.mxu0 0.0
        %4256 = vmatprep.subr.mxu0 0.0
        %4257 = vmatpush1.msra.mxu0 0.0
        %4258 = vmatprep.mubr.f32.mxu0 0.0
        %v4259 = vand.u32 %v3524, 4294901760
        %4260 = vmatmul.mubr.f32.gmra.mrb[0].mxu0 %v4259
        %v4261 = vpop.f32.mrb[0].mxu0
        %v4262 = vadd.f32 %v4147, %v4261
        %v4263 = vpop.f32.mrb[0].mxu0
        %4264 = vmatprep.mubr.f32.mxu0 0.0
        %v4265 = vand.u32 %v3527, 4294901760
        %4266 = vmatmul.mubr.f32.gmra.mrb[0].mxu0 %v4265
        %v4267 = vpop.f32.mrb[0].mxu0
        %v4268 = vadd.f32 %v4153, %v4267
        %v4269 = vpop.f32.mrb[0].mxu0
        %4270 = vmatprep.mubr.f32.mxu0 0.0
        %v4271 = vand.u32 %v3530, 4294901760
        %4272 = vmatmul.mubr.f32.gmra.mrb[0].mxu0 %v4271
        %v4273 = vpop.f32.mrb[0].mxu0
        %v4274 = vadd.f32 %v4159, %v4273
        %v4275 = vpop.f32.mrb[0].mxu0
        %4276 = vmatprep.mubr.f32.mxu0 0.0
        %v4277 = vand.u32 %v3533, 4294901760
        %4278 = vmatmul.mubr.f32.gmra.mrb[0].mxu0 %v4277
        %v4279 = vpop.f32.mrb[0].mxu0
        %v4280 = vadd.f32 %v4165, %v4279
        %v4281 = vpop.f32.mrb[0].mxu0
        %4282 = vmatprep.mubr.f32.mxu0 0.0
        %v4283 = vand.u32 %v3536, 4294901760
        %4284 = vmatmul.mubr.f32.gmra.mrb[0].mxu0 %v4283
        %v4285 = vpop.f32.mrb[0].mxu0
        %v4286 = vadd.f32 %v4171, %v4285
        %v4287 = vpop.f32.mrb[0].mxu0
        %4288 = vmatprep.mubr.f32.mxu0 0.0
        %v4289 = vand.u32 %v3539, 4294901760
        %4290 = vmatmul.mubr.f32.gmra.mrb[0].mxu0 %v4289
        %v4291 = vpop.f32.mrb[0].mxu0
        %v4292 = vadd.f32 %v4177, %v4291
        %v4293 = vpop.f32.mrb[0].mxu0
        %4294 = vmatprep.mubr.f32.mxu0 0.0
        %v4295 = vand.u32 %v3542, 4294901760
        %4296 = vmatmul.mubr.f32.gmra.mrb[0].mxu0 %v4295
        %v4297 = vpop.f32.mrb[0].mxu0
        %v4298 = vadd.f32 %v4183, %v4297
        %v4299 = vpop.f32.mrb[0].mxu0
        %4300 = vmatprep.mubr.f32.mxu0 0.0
        %v4301 = vand.u32 %v3545, 4294901760
        %4302 = vmatmul.mubr.f32.gmra.mrb[0].mxu0 %v4301
        %v4303 = vpop.f32.mrb[0].mxu0
        %v4304 = vadd.f32 %v4189, %v4303
        %v4305 = vpop.f32.mrb[0].mxu0
        %4306 = vdwg.mxu0
        %v4307 = vmul.f32 %v4262, 0.1
        %v4308 = vmul.f32 %v4268, 0.1
        %v4309 = vmul.f32 %v4274, 0.1
        %v4310 = vmul.f32 %v4280, 0.1
        %v4311 = vmul.f32 %v4286, 0.1
        %v4312 = vmul.f32 %v4292, 0.1
        %v4313 = vmul.f32 %v4298, 0.1
        %v4314 = vmul.f32 %v4304, 0.1
        %v4315 = vmax.f32 %v4262, %v4307
        %v4316 = vmax.f32 %v4268, %v4308
        %v4317 = vmax.f32 %v4274, %v4309
        %v4318 = vmax.f32 %v4280, %v4310
        %v4319 = vmax.f32 %v4286, %v4311
        %v4320 = vmax.f32 %v4292, %v4312
        %v4321 = vmax.f32 %v4298, %v4313
        %v4322 = vmax.f32 %v4304, %v4314
        %v4323 = vadd.f32 %v1642, %v2260
        %v4324 = vadd.f32 %v1643, %v2261
        %v4325 = vadd.f32 %v4323, %v2878
        %v4326 = vadd.f32 %v4324, %v2879
        %v4327 = vadd.f32 %v4325, %v3496
        %v4328 = vadd.f32 %v4326, %v3497
        %v4329 = vrcp.pop %v4327
        %v4330 = vmul.f32 1.0, %v4329
        %v4331 = vrcp.pop %v4328
        %v4332 = vmul.f32 1.0, %v4331
        %v4333 = vmul.f32 %v1642, %v4330
        %v4334 = vmul.f32 %v1643, %v4332
        %v4335 = vmul.f32 %v4333, %v4315
        %v4336 = vmul.f32 %v4334, %v4316
        %v4337 = vadd.f32 %v4335, 0.0
        %v4338 = vadd.f32 %v4336, 0.0
        %v4339 = vmul.f32 %v2260, %v4330
        %v4340 = vmul.f32 %v2261, %v4332
        %v4341 = vmul.f32 %v4339, %v4317
        %v4342 = vmul.f32 %v4340, %v4318
        %v4343 = vadd.f32 %v4337, %v4341
        %v4344 = vadd.f32 %v4338, %v4342
        %v4345 = vmul.f32 %v2878, %v4330
        %v4346 = vmul.f32 %v2879, %v4332
        %v4347 = vmul.f32 %v4345, %v4319
        %v4348 = vmul.f32 %v4346, %v4320
        %v4349 = vadd.f32 %v4343, %v4347
        %v4350 = vadd.f32 %v4344, %v4348
        %v4351 = vmul.f32 %v3496, %v4330
        %v4352 = vmul.f32 %v3497, %v4332
        %v4353 = vmul.f32 %v4351, %v4321
        %v4354 = vmul.f32 %v4352, %v4322
        %v4355 = vadd.f32 %v4349, %v4353
        %v4356 = vadd.f32 %v4350, %v4354
        %4357 = vxpose.xlu0.b32.start [1/16] %v4355, 128
        %4358 = vxpose.xlu0.b32.cont [2/16] %v4356, 128
        %4359 = vxpose.xlu0.b32.cont [3/16] 0.0, 128
        %4360 = vxpose.xlu0.b32.cont [4/16] 0.0, 128
        %4361 = vxpose.xlu0.b32.cont [5/16] 0.0, 128
        %4362 = vxpose.xlu0.b32.cont [6/16] 0.0, 128
        %4363 = vxpose.xlu0.b32.cont [7/16] 0.0, 128
        %4364 = vxpose.xlu0.b32.cont [8/16] 0.0, 128
        %4365 = vxpose.xlu0.b32.cont [9/16] 0.0, 128
        %4366 = vxpose.xlu0.b32.cont [10/16] 0.0, 128
        %4367 = vxpose.xlu0.b32.cont [11/16] 0.0, 128
        %4368 = vxpose.xlu0.b32.cont [12/16] 0.0, 128
        %4369 = vxpose.xlu0.b32.cont [13/16] 0.0, 128
        %4370 = vxpose.xlu0.b32.cont [14/16] 0.0, 128
        %4371 = vxpose.xlu0.b32.cont [15/16] 0.0, 128
        %4372 = vxpose.xlu0.b32.end [16/16] 0.0, 128
        %v4373 = vpop.trf.xlu0
        %v4374 = vpop.trf.xlu0
        %v4375 = vpop.trf.xlu0
        %v4376 = vpop.trf.xlu0
        %v4377 = vpop.trf.xlu0
        %v4378 = vpop.trf.xlu0
        %v4379 = vpop.trf.xlu0
        %v4380 = vpop.trf.xlu0
        %v4381 = vpop.trf.xlu0
        %v4382 = vpop.trf.xlu0
        %v4383 = vpop.trf.xlu0
        %v4384 = vpop.trf.xlu0
        %v4385 = vpop.trf.xlu0
        %v4386 = vpop.trf.xlu0
        %v4387 = vpop.trf.xlu0
        %v4388 = vpop.trf.xlu0
        %4389 = vst.msk [vmem:[%s404] sm:$0xff] %vm1008, %v4373
        %4390 = vst.msk [vmem:[%s404 + $0x8] sm:$0xff] %vm1008, %v4374
        %s4391 = sand.u32 %s258, 1
        %s4392 = scalar_lea.sflag [#allocation3], %s4391
        %s4393 = sand.u32 %s258, 1
        %s4394 = smul.addr %s4393, 16
        %s4395 = scalar_lea.vmem [#allocation2], %s4394
        // Predicated region
        $region57: #{cost_volume_layer.1} parent=55 // pred_check
          %p4396 = pneg %p268
        $region58: #{cost_volume_layer.1} parent=55 // pred_check_branch
          %4398 = sbr.rel (%p4396) target = $region60
        $region59: #{cost_volume_layer.1} parent=55 // pred_region
          %s4400 = ssub.s32 256, 256
          %4401 = vsyncadd %s4392, %s4400
          %s4402 = smul.addr %s27, 2
          %s4403 = sadd.s32 %s28, %s4402
          %s4404 = smul.addr %s4403, 128
          %s4405 = scalar_lea.hbm %s9, %s4404
          %s4406 = sshll.u32 %s4395, 4
          %s4407 = int_to_ptr.vmem [resolvable:$true] %s4406
          %4412 = dma.vmem_to_hbm [thread:$0]  %s4407, 256, %s4405, %s4392, 128, 128, 8
        $region60: #{cost_volume_layer.1} parent=55 // pred_fallthru
          _
      $region56: #{cost_volume_layer.1} parent=5 // pred_fallthru
        _
      %p4413 = scmp.le.s32.totalorder 2, %s18
      // Predicated region
      $region61: #{cost_volume_layer.1} parent=5 // pred_check
        %p4414 = pneg %p4413
      $region62: #{cost_volume_layer.1} parent=5 // pred_check_branch
        %4416 = sbr.rel (%p4414) target = $region64
      $region63: #{cost_volume_layer.1} parent=5 // pred_region
        %s4417 = ssub.s32 %s18, 2
        // Predicated region
        $region65: #{cost_volume_layer.1} parent=63 // pred_check
          %p4418 = pneg %p274
        $region66: #{cost_volume_layer.1} parent=63 // pred_check_branch
          %4420 = sbr.rel (%p4418) target = $region68
        $region67: #{cost_volume_layer.1} parent=63 // pred_region
          %s4421 = sand.u32 %s259, 1
          %s4422 = scalar_lea.sflag [#allocation3], %s4421
          %s4423 = sand.u32 %s259, 1
          %s4424 = smul.addr %s4423, 16
          %s4425 = scalar_lea.vmem [#allocation2], %s4424
          %4426 = dma.done %s4422, 256
        $region68: #{cost_volume_layer.1} parent=63 // pred_fallthru
          _
      $region64: #{cost_volume_layer.1} parent=5 // pred_fallthru
        _
    $region6: #{cost_volume_layer.1} parent=1 // loop_footer
      %s22 = sadd.s32 1, %s18
    $region7: #{cost_volume_layer.1} parent=1 // loop_footer_branch
      %17 = sbr.rel target = $region3
    $region8: #{cost_volume_layer.1} parent=1 // loop_exit
      _
    %4427 = vsyncpa [#allocation3], 1
    %s4428 = scalar_lea.sflag [#allocation3], 1
    %4429 = vsyncpa %s4428, 1

</llo_original>
